<compile_context>
chip_gen: v6e
topology: v6e:2x2x1
jax: 0.10.0
libtpu: 0.0.40
codegen_flags: <defaults>
</compile_context>

<pallas_src>
import functools
from typing import NamedTuple

import jax
import jax.numpy as jnp
from jax.experimental import pallas as pl
from jax.experimental.pallas import tpu as pltpu


NEG_INF = -1e9
VMEM_LIMIT = 64 * 1024 * 1024


class Config(NamedTuple):
    """Static (Python-int) hyper-parameters, kept out of the traced pytree."""
    vocab_size: int
    embedding_size: int
    max_len: int
    num_heads: int
    n_layers: int = 3


def _pick_batch_block(n, s, max_rows=512):
    """Largest divisor of n whose block has at most `max_rows` matmul rows,
    preferring a grid of length >= 2 so both v7x TensorCores get work."""
    best = 1
    for d in range(1, n + 1):
        if n % d == 0 and d * s <= max_rows:
            best = d
    while n // best < 2 and best > 1:
        nxt = best - 1
        while nxt > 1 and n % nxt:
            nxt -= 1
        best = nxt
    return best


# -----------------------------------------------------------------------------
# In-kernel helpers (all statistics in f32)
# -----------------------------------------------------------------------------
def _softmax_last(s):
    m = jnp.max(s, axis=-1, keepdims=True)
    e = jnp.exp(s - m)
    return e / jnp.sum(e, axis=-1, keepdims=True)


def _layer_norm(x, g, b, eps=1e-5):
    mu = jnp.mean(x, axis=-1, keepdims=True)
    var = jnp.mean(jnp.square(x - mu), axis=-1, keepdims=True)
    return (x - mu) * jax.lax.rsqrt(var + eps) * g + b


# -----------------------------------------------------------------------------
# Fused n-layer transformer encoder stack
#   grid = (batch_blocks, n_layers), layer axis innermost / "arbitrary".
#   The activation is carried in the output VMEM block across the layer axis.
# -----------------------------------------------------------------------------
def _encoder_stack_kernel(
    num_heads,
    x_ref, bias_ref,
    w_in_ref, b_in_ref, w_out_ref, b_out_ref,
    ln1_g_ref, ln1_b_ref,
    w1_ref, b1_ref, w2_ref, b2_ref,
    ln2_g_ref, ln2_b_ref,
    o_ref,
):
    layer = pl.program_id(1)

    @pl.when(layer == 0)
    def _():
        o_ref[...] = x_ref[...]          # seed the carried activation (bf16)

    x = o_ref[...]                        # (B, S, E) bf16, resident in VMEM
    B, S, E = x.shape
    H = num_heads
    dh = E // H
    scale = 1.0 / float(dh) ** 0.5

    x2 = x.reshape(B * S, E)              # (B*S, E) bf16 — fills the MXU M dim

    # ---- multi-head self-attention ------------------------------------------
    qkv = jnp.dot(x2, w_in_ref[0], preferred_element_type=jnp.float32)
    qkv = qkv + b_in_ref[0]                                  # (B*S, 3E) f32
    qkv3 = qkv.astype(jnp.bfloat16).reshape(B, S, 3 * E)

    # additive key-padding bias, broadcast hoisted out of the head loop
    bias_full = jnp.broadcast_to(bias_ref[...], (B, S, S)).astype(jnp.float32)

    w_out = w_out_ref[0]                                     # (E, E) bf16
    attn = jnp.zeros((B * S, E), jnp.float32)
    for h in range(H):                    # static unroll over heads
        q = qkv3[:, :, h * dh:(h + 1) * dh]
        k = qkv3[:, :, E + h * dh:E + (h + 1) * dh]
        v = qkv3[:, :, 2 * E + h * dh:2 * E + (h + 1) * dh]
        s = jnp.einsum('bqd,bkd->bqk', q, k,
                       preferred_element_type=jnp.float32) * scale
        p = _softmax_last(s + bias_full)                     # f32
        o_h = jnp.einsum('bqk,bkd->bqd', p.astype(jnp.bfloat16), v,
                         preferred_element_type=jnp.float32)  # (B, S, dh)
        # Fold this head's output projection in directly: no lane concatenate.
        attn = attn + jnp.dot(o_h.reshape(B * S, dh).astype(jnp.bfloat16),
                              w_out[h * dh:(h + 1) * dh, :],
                              preferred_element_type=jnp.float32)
    attn = attn + b_out_ref[0]

    h1 = _layer_norm(x2.astype(jnp.float32) + attn,
                     ln1_g_ref[0], ln1_b_ref[0])              # (B*S, E) f32

    # ---- feed-forward: linear -> gelu -> linear ------------------------------
    f = jnp.dot(h1.astype(jnp.bfloat16), w1_ref[0],
                preferred_element_type=jnp.float32) + b1_ref[0]
    f = jax.nn.gelu(f, approximate=True)  # TODO(synk): tanh approx of erf-gelu
    f = jnp.dot(f.astype(jnp.bfloat16), w2_ref[0],
                preferred_element_type=jnp.float32) + b2_ref[0]

    out = _layer_norm(h1 + f, ln2_g_ref[0], ln2_b_ref[0])
    o_ref[...] = out.reshape(B, S, E).astype(jnp.bfloat16)


def transformer_encoder_stack(x, bias, stacked, num_heads, batch_block):
    """x: (N, S, E) bf16, bias: (N, 1, S) f32 additive key-padding bias."""
    N, S, E = x.shape
    L = stacked["w_in"].shape[0]
    B = batch_block

    act_spec = pl.BlockSpec((B, S, E), lambda b, l: (b, 0, 0))

    def w_spec(d0, d1):
        return pl.BlockSpec((1, d0, d1), lambda b, l: (l, 0, 0))

    kernel = functools.partial(_encoder_stack_kernel, num_heads)
    return pl.pallas_call(
        kernel,
        out_shape=jax.ShapeDtypeStruct((N, S, E), jnp.bfloat16),
        grid=(N // B, L),
        in_specs=[
            act_spec,
            pl.BlockSpec((B, 1, S), lambda b, l: (b, 0, 0)),
            w_spec(E, 3 * E), w_spec(1, 3 * E),
            w_spec(E, E), w_spec(1, E),
            w_spec(1, E), w_spec(1, E),
            w_spec(E, 4 * E), w_spec(1, 4 * E),
            w_spec(4 * E, E), w_spec(1, E),
            w_spec(1, E), w_spec(1, E),
        ],
        out_specs=act_spec,
        compiler_params=pltpu.CompilerParams(
            dimension_semantics=("parallel", "arbitrary"),
            vmem_limit_bytes=VMEM_LIMIT,
        ),
    )(
        x, bias,
        stacked["w_in"], stacked["b_in"], stacked["w_out"], stacked["b_out"],
        stacked["ln1_g"], stacked["ln1_b"],
        stacked["w1"], stacked["b1"], stacked["w2"], stacked["b2"],
        stacked["ln2_g"], stacked["ln2_b"],
    )


# -----------------------------------------------------------------------------
# ESIM masked soft cross-attention: attended-vectors kernel (first call)
# -----------------------------------------------------------------------------
def _soft_attn_full_kernel(a_ref, b_ref, abias_ref, bbias_ref, oa_ref, ob_ref):
    a = a_ref[...]                        # (B, S, E) bf16
    b = b_ref[...]                        # (B, T, E) bf16
    bias_a = abias_ref[...]               # (B, 1, S) f32
    bias_b = bbias_ref[...]               # (B, 1, T) f32

    sim_ab = jnp.einsum('bse,bte->bst', a, b, preferred_element_type=jnp.float32)
    p_a = _softmax_last(sim_ab + bias_b)
    oa_ref[...] = jnp.einsum('bst,bte->bse', p_a.astype(jnp.bfloat16), b,
                             preferred_element_type=jnp.float32
                             ).astype(jnp.bfloat16)

    # Second MXU dot instead of an XLU transpose (prefer transpose on v5e,
    # where the MXU is the weaker unit).
    sim_ba = jnp.einsum('bte,bse->bts', b, a, preferred_element_type=jnp.float32)
    p_b = _softmax_last(sim_ba + bias_a)
    ob_ref[...] = jnp.einsum('bts,bse->bte', p_b.astype(jnp.bfloat16), a,
                             preferred_element_type=jnp.float32
                             ).astype(jnp.bfloat16)


def masked_attention_attended(a, a_bias, b, b_bias, batch_block):
    N, S, E = a.shape
    T = b.shape[1]
    B = batch_block
    return pl.pallas_call(
        _soft_attn_full_kernel,
        out_shape=(
            jax.ShapeDtypeStruct((N, S, E), jnp.bfloat16),
            jax.ShapeDtypeStruct((N, T, E), jnp.bfloat16),
        ),
        grid=(N // B,),
        in_specs=[
            pl.BlockSpec((B, S, E), lambda i: (i, 0, 0)),
            pl.BlockSpec((B, T, E), lambda i: (i, 0, 0)),
            pl.BlockSpec((B, 1, S), lambda i: (i, 0, 0)),
            pl.BlockSpec((B, 1, T), lambda i: (i, 0, 0)),
        ],
        out_specs=(
            pl.BlockSpec((B, S, E), lambda i: (i, 0, 0)),
            pl.BlockSpec((B, T, E), lambda i: (i, 0, 0)),
        ),
        compiler_params=pltpu.CompilerParams(
            dimension_semantics=("parallel",),
            vmem_limit_bytes=VMEM_LIMIT,
        ),
    )(a, b, a_bias, b_bias)


# -----------------------------------------------------------------------------
# Score kernel with fused mean/max pooling over the query axis (2nd/3rd calls):
# only (B,1,T) avg and (B,1,T) max slabs are written back, never the full
# (B,S,T) softmax matrix.
# -----------------------------------------------------------------------------
def _soft_attn_pool_kernel(a_ref, b_ref, bbias_ref, avg_ref, max_ref):
    a = a_ref[...]                        # (B, S, E) bf16
    b = b_ref[...]                        # (B, T, E) bf16
    bias_b = bbias_ref[...]               # (B, 1, T) f32

    sim = jnp.einsum('bse,bte->bst', a, b, preferred_element_type=jnp.float32)
    p = _softmax_last(sim + bias_b)                     # (B, S, T) f32
    avg_ref[...] = jnp.mean(p, axis=1, keepdims=True)   # (B, 1, T)
    max_ref[...] = jnp.max(p, axis=1, keepdims=True)    # (B, 1, T)


def masked_attention_scores_pooled(a, b, b_bias, batch_block):
    N, S, E = a.shape
    T = b.shape[1]
    B = batch_block
    return pl.pallas_call(
        _soft_attn_pool_kernel,
        out_shape=(
            jax.ShapeDtypeStruct((N, 1, T), jnp.float32),
            jax.ShapeDtypeStruct((N, 1, T), jnp.float32),
        ),
        grid=(N // B,),
        in_specs=[
            pl.BlockSpec((B, S, E), lambda i: (i, 0, 0)),
            pl.BlockSpec((B, T, E), lambda i: (i, 0, 0)),
            pl.BlockSpec((B, 1, T), lambda i: (i, 0, 0)),
        ],
        out_specs=(
            pl.BlockSpec((B, 1, T), lambda i: (i, 0, 0)),
            pl.BlockSpec((B, 1, T), lambda i: (i, 0, 0)),
        ),
        compiler_params=pltpu.CompilerParams(
            dimension_semantics=("parallel",),
            vmem_limit_bytes=VMEM_LIMIT,
        ),
    )(a, b, b_bias)


# -----------------------------------------------------------------------------
# Forward pass
# -----------------------------------------------------------------------------
def esim_forward(cfg, params, premises, premises_mask, hypotheses, hypotheses_mask):
    """premises/hypotheses: (S, N) int32 ids; masks: (N, 1, S) float (1 = valid)."""
    emb = params["embedding"]
    emb_p = jnp.transpose(jnp.take(emb, premises, axis=0), (1, 0, 2))   # (N, S, E)
    emb_h = jnp.transpose(jnp.take(emb, hypotheses, axis=0), (1, 0, 2))
    # dropout -> identity (eval mode)

    N, S, _ = emb_p.shape
    H = cfg.num_heads

    # additive key-padding bias computed once (0 = valid, -1e9 = pad)
    p_bias = jnp.where(premises_mask == 0.0, NEG_INF, 0.0).astype(jnp.float32)
    h_bias = jnp.where(hypotheses_mask == 0.0, NEG_INF, 0.0).astype(jnp.float32)
    bias_both = jnp.concatenate([p_bias, h_bias], axis=0)               # (2N,1,S)

    # premises + hypotheses merged along the batch axis -> single launches
    x_both = jnp.concatenate([emb_p, emb_h], axis=0).astype(jnp.bfloat16)

    B2 = _pick_batch_block(2 * N, S)
    B1 = _pick_batch_block(N, S)

    enc_both = transformer_encoder_stack(x_both, bias_both,
                                         params["encoder"], H, B2)
    enc_p, enc_h = enc_both[:N], enc_both[N:]

    inter_p, inter_h = masked_attention_attended(enc_p, p_bias, enc_h, h_bias, B1)
    # dropout -> identity (eval mode)

    comp_both = transformer_encoder_stack(
        jnp.concatenate([inter_p, inter_h], axis=0), bias_both,
        params["compositor"], H, B2)

    # score stage: a = [enc_p; enc_h], b = [comp_p; comp_h], key bias of b.
    avg_both, max_both = masked_attention_scores_pooled(
        enc_both, comp_both, bias_both, B2)
    avg_h, avg_p = avg_both[:N, 0, :], avg_both[N:, 0, :]   # (N, max_len) each
    max_h, max_p = max_both[:N, 0, :], max_both[N:, 0, :]

    # final = cat((score_p, score_h), -1); mean/max over queries; cat(avg, max)
    avg = jnp.concatenate([avg_p, avg_h], axis=-1)
    maxi = jnp.concatenate([max_p, max_h], axis=-1)
    final = jnp.concatenate([avg, maxi], axis=-1).astype(jnp.float32)   # (N, 4*max_len)

    # 2-wide classifier: too small for a Pallas launch -> plain JAX matmul
    logits = final @ params["cls_w"] + params["cls_b"]
    probs = jax.nn.softmax(logits, axis=-1)
    return {"probs": probs, "label": jnp.argmax(probs, axis=-1)}


# -----------------------------------------------------------------------------
# Deterministic parameter initialization (synthetic, not a checkpoint load).
# Weights used as MXU operands are stored bf16 and stacked per layer so the
# layer grid axis of the fused encoder kernel can index them directly.
# -----------------------------------------------------------------------------
def _xavier(key, shape):
    fan_in, fan_out = shape[0], shape[1]
    limit = (6.0 / (fan_in + fan_out)) ** 0.5
    return jax.random.uniform(key, shape, jnp.float32, -limit, limit)


def init_encoder_stack(key, E, L):
    ks = jax.random.split(key, 4 * L)
    w_in = jnp.stack([_xavier(ks[4 * i + 0], (E, 3 * E)) for i in range(L)])
    w_out = jnp.stack([_xavier(ks[4 * i + 1], (E, E)) for i in range(L)])
    w1 = jnp.stack([_xavier(ks[4 * i + 2], (E, 4 * E)) for i in range(L)])
    w2 = jnp.stack([_xavier(ks[4 * i + 3], (4 * E, E)) for i in range(L)])
    zeros = lambda d: jnp.zeros((L, 1, d), jnp.float32)
    ones = lambda d: jnp.ones((L, 1, d), jnp.float32)
    return dict(
        w_in=w_in.astype(jnp.bfloat16), b_in=zeros(3 * E),
        w_out=w_out.astype(jnp.bfloat16), b_out=zeros(E),
        ln1_g=ones(E), ln1_b=zeros(E),
        w1=w1.astype(jnp.bfloat16), b1=zeros(4 * E),
        w2=w2.astype(jnp.bfloat16), b2=zeros(E),
        ln2_g=ones(E), ln2_b=zeros(E),
    )


def init_params(key, cfg):
    E, L = cfg.embedding_size, cfg.n_layers
    k_enc, k_comp, k_emb, k_cls = jax.random.split(key, 4)
    return dict(
        embedding=jax.random.normal(k_emb, (cfg.vocab_size, E), jnp.float32) * 0.1,
        encoder=init_encoder_stack(k_enc, E, L),
        compositor=init_encoder_stack(k_comp, E, L),
        cls_w=_xavier(k_cls, (cfg.max_len * 4, 2)),
        cls_b=jnp.zeros((2,), jnp.float32),
    )


# -----------------------------------------------------------------------------
if __name__ == "__main__":
    key = jax.random.PRNGKey(0)
    cfg = Config(vocab_size=64, embedding_size=32, max_len=8, num_heads=4, n_layers=3)
    N = 2

    k_params, k_p, k_h = jax.random.split(key, 3)
    params = init_params(k_params, cfg)

    premises = jax.random.randint(k_p, (cfg.max_len, N), 0, cfg.vocab_size, jnp.int32)
    hypotheses = jax.random.randint(k_h, (cfg.max_len, N), 0, cfg.vocab_size, jnp.int32)

    # masks: (N, 1, max_len), 1 = valid token, 0 = pad
    p_lens = jnp.array([cfg.max_len, cfg.max_len - 2])
    h_lens = jnp.array([cfg.max_len - 1, cfg.max_len])
    pos = jnp.arange(cfg.max_len)[None, :]
    premises_mask = (pos < p_lens[:, None]).astype(jnp.float32)[:, None, :]
    hypotheses_mask = (pos < h_lens[:, None]).astype(jnp.float32)[:, None, :]

    fwd = jax.jit(functools.partial(esim_forward, cfg))  # cfg is static Python ints
    out = fwd(params, premises, premises_mask, hypotheses, hypotheses_mask)
    jax.block_until_ready(out["probs"])

    assert out["probs"].shape == (N, 2)
    assert out["label"].shape == (N,)
    assert bool(jnp.all(jnp.isfinite(out["probs"])))
    print("KERNEL_OK")
</pallas_src>

<mosaic_0001>
module attributes {stable_mosaic.version = 11 : i64} {
  func.func @_soft_attn_full_kernel(%arg0: i32, %arg1: memref<1x8x32xbf16, #tpu.memory_space<vmem>>, %arg2: memref<1x8x32xbf16, #tpu.memory_space<vmem>>, %arg3: memref<1x1x8xf32, #tpu.memory_space<vmem>>, %arg4: memref<1x1x8xf32, #tpu.memory_space<vmem>>, %arg5: memref<1x8x32xbf16, #tpu.memory_space<vmem>>, %arg6: memref<1x8x32xbf16, #tpu.memory_space<vmem>>) attributes {dimension_semantics = [#tpu.dimension_semantics<parallel>], iteration_bounds = array<i64: 2>, scalar_prefetch = 0 : i64, scratch_operands = 0 : i64, tpu.core_type = #tpu.core_type<tc>, window_params = [{transform_indices = @transform_0, window_bounds = array<i64: 1, 8, 32>}, {transform_indices = @transform_1, window_bounds = array<i64: 1, 8, 32>}, {transform_indices = @transform_2, window_bounds = array<i64: 1, 1, 8>}, {transform_indices = @transform_3, window_bounds = array<i64: 1, 1, 8>}, {transform_indices = @transform_4, window_bounds = array<i64: 1, 8, 32>}, {transform_indices = @transform_5, window_bounds = array<i64: 1, 8, 32>}]} {
    %c0 = arith.constant 0 : index
    %c0_0 = arith.constant 0 : index
    %c0_1 = arith.constant 0 : index
    %0 = vector.load %arg1[%c0, %c0_0, %c0_1] : memref<1x8x32xbf16, #tpu.memory_space<vmem>>, vector<1x8x32xbf16>
    %c0_2 = arith.constant 0 : index
    %c0_3 = arith.constant 0 : index
    %c0_4 = arith.constant 0 : index
    %1 = vector.load %arg2[%c0_2, %c0_3, %c0_4] : memref<1x8x32xbf16, #tpu.memory_space<vmem>>, vector<1x8x32xbf16>
    %c0_5 = arith.constant 0 : index
    %c0_6 = arith.constant 0 : index
    %c0_7 = arith.constant 0 : index
    %2 = vector.load %arg3[%c0_5, %c0_6, %c0_7] : memref<1x1x8xf32, #tpu.memory_space<vmem>>, vector<1x1x8xf32>
    %c0_8 = arith.constant 0 : index
    %c0_9 = arith.constant 0 : index
    %c0_10 = arith.constant 0 : index
    %3 = vector.load %arg4[%c0_8, %c0_9, %c0_10] : memref<1x1x8xf32, #tpu.memory_space<vmem>>, vector<1x1x8xf32>
    "tpu.trace_start"() <{level = 10 : i32, message = "bse,bte->bst"}> : () -> ()
    %cst = arith.constant dense<0.000000e+00> : vector<1x8x8xf32>
    %4 = tpu.matmul %0, %1, %cst {dimension_numbers = #tpu.dot_dimension_numbers<[2], [2], [1], [1], [0, 0, 0, 1, 1, 1], [0], [0]>} : vector<1x8x32xbf16>, vector<1x8x32xbf16>, vector<1x8x8xf32> -> vector<1x8x8xf32>
    "tpu.trace_stop"() : () -> ()
    %5 = vector.broadcast %3 : vector<1x1x8xf32> to vector<1x8x8xf32>
    %6 = arith.addf %4, %5 : vector<1x8x8xf32>
    %cst_11 = arith.constant dense<0xFF800000> : vector<1x8xf32>
    %7 = vector.multi_reduction <maximumf>, %6, %cst_11 [2] : vector<1x8x8xf32> to vector<1x8xf32>
    %8 = vector.shape_cast %7 : vector<1x8xf32> to vector<1x8x1xf32>
    %9 = vector.broadcast %8 : vector<1x8x1xf32> to vector<1x8x8xf32>
    %10 = arith.subf %6, %9 : vector<1x8x8xf32>
    %11 = math.exp %10 : vector<1x8x8xf32>
    %cst_12 = arith.constant dense<0.000000e+00> : vector<1x8xf32>
    %12 = vector.multi_reduction <add>, %11, %cst_12 [2] : vector<1x8x8xf32> to vector<1x8xf32>
    %13 = vector.shape_cast %12 : vector<1x8xf32> to vector<1x8x1xf32>
    %14 = vector.broadcast %13 : vector<1x8x1xf32> to vector<1x8x8xf32>
    %15 = arith.divf %11, %14 : vector<1x8x8xf32>
    %16 = arith.truncf %15 : vector<1x8x8xf32> to vector<1x8x8xbf16>
    "tpu.trace_start"() <{level = 10 : i32, message = "bst,bte->bse"}> : () -> ()
    %cst_13 = arith.constant dense<0.000000e+00> : vector<1x8x32xf32>
    %17 = tpu.matmul %16, %1, %cst_13 {dimension_numbers = #tpu.dot_dimension_numbers<[2], [1], [1], [2], [0, 0, 0, 1, 1, 2], [0], [0]>} : vector<1x8x8xbf16>, vector<1x8x32xbf16>, vector<1x8x32xf32> -> vector<1x8x32xf32>
    "tpu.trace_stop"() : () -> ()
    %18 = arith.truncf %17 : vector<1x8x32xf32> to vector<1x8x32xbf16>
    %c0_14 = arith.constant 0 : index
    %c0_15 = arith.constant 0 : index
    %c0_16 = arith.constant 0 : index
    %19 = vector.load %arg5[%c0_14, %c0_15, %c0_16] : memref<1x8x32xbf16, #tpu.memory_space<vmem>>, vector<1x8x32xbf16>
    tpu.vector_store %arg5[%c0_14, %c0_15, %c0_16], %18 {strides = array<i32>} : memref<1x8x32xbf16, #tpu.memory_space<vmem>>, vector<1x8x32xbf16>,
    "tpu.trace_start"() <{level = 10 : i32, message = "bte,bse->bts"}> : () -> ()
    %cst_17 = arith.constant dense<0.000000e+00> : vector<1x8x8xf32>
    %20 = tpu.matmul %1, %0, %cst_17 {dimension_numbers = #tpu.dot_dimension_numbers<[2], [2], [1], [1], [0, 0, 0, 1, 1, 1], [0], [0]>} : vector<1x8x32xbf16>, vector<1x8x32xbf16>, vector<1x8x8xf32> -> vector<1x8x8xf32>
    "tpu.trace_stop"() : () -> ()
    %21 = vector.broadcast %2 : vector<1x1x8xf32> to vector<1x8x8xf32>
    %22 = arith.addf %20, %21 : vector<1x8x8xf32>
    %cst_18 = arith.constant dense<0xFF800000> : vector<1x8xf32>
    %23 = vector.multi_reduction <maximumf>, %22, %cst_18 [2] : vector<1x8x8xf32> to vector<1x8xf32>
    %24 = vector.shape_cast %23 : vector<1x8xf32> to vector<1x8x1xf32>
    %25 = vector.broadcast %24 : vector<1x8x1xf32> to vector<1x8x8xf32>
    %26 = arith.subf %22, %25 : vector<1x8x8xf32>
    %27 = math.exp %26 : vector<1x8x8xf32>
    %cst_19 = arith.constant dense<0.000000e+00> : vector<1x8xf32>
    %28 = vector.multi_reduction <add>, %27, %cst_19 [2] : vector<1x8x8xf32> to vector<1x8xf32>
    %29 = vector.shape_cast %28 : vector<1x8xf32> to vector<1x8x1xf32>
    %30 = vector.broadcast %29 : vector<1x8x1xf32> to vector<1x8x8xf32>
    %31 = arith.divf %27, %30 : vector<1x8x8xf32>
    %32 = arith.truncf %31 : vector<1x8x8xf32> to vector<1x8x8xbf16>
    "tpu.trace_start"() <{level = 10 : i32, message = "bts,bse->bte"}> : () -> ()
    %cst_20 = arith.constant dense<0.000000e+00> : vector<1x8x32xf32>
    %33 = tpu.matmul %32, %0, %cst_20 {dimension_numbers = #tpu.dot_dimension_numbers<[2], [1], [1], [2], [0, 0, 0, 1, 1, 2], [0], [0]>} : vector<1x8x8xbf16>, vector<1x8x32xbf16>, vector<1x8x32xf32> -> vector<1x8x32xf32>
    "tpu.trace_stop"() : () -> ()
    %34 = arith.truncf %33 : vector<1x8x32xf32> to vector<1x8x32xbf16>
    %c0_21 = arith.constant 0 : index
    %c0_22 = arith.constant 0 : index
    %c0_23 = arith.constant 0 : index
    %35 = vector.load %arg6[%c0_21, %c0_22, %c0_23] : memref<1x8x32xbf16, #tpu.memory_space<vmem>>, vector<1x8x32xbf16>
    tpu.vector_store %arg6[%c0_21, %c0_22, %c0_23], %34 {strides = array<i32>} : memref<1x8x32xbf16, #tpu.memory_space<vmem>>, vector<1x8x32xbf16>,
    return
  }
  func.func @transform_0(%arg0: i32) -> (i32, i32, i32) {
    %c0_i32 = arith.constant 0 : i32
    %c0_i32_0 = arith.constant 0 : i32
    %c0_i32_1 = arith.constant 0 : i32
    return %arg0, %c0_i32, %c0_i32_0 : i32, i32, i32
  }
  func.func @transform_1(%arg0: i32) -> (i32, i32, i32) {
    %c0_i32 = arith.constant 0 : i32
    %c0_i32_0 = arith.constant 0 : i32
    %c0_i32_1 = arith.constant 0 : i32
    return %arg0, %c0_i32, %c0_i32_0 : i32, i32, i32
  }
  func.func @transform_2(%arg0: i32) -> (i32, i32, i32) {
    %c0_i32 = arith.constant 0 : i32
    %c0_i32_0 = arith.constant 0 : i32
    %c0_i32_1 = arith.constant 0 : i32
    return %arg0, %c0_i32, %c0_i32_0 : i32, i32, i32
  }
  func.func @transform_3(%arg0: i32) -> (i32, i32, i32) {
    %c0_i32 = arith.constant 0 : i32
    %c0_i32_0 = arith.constant 0 : i32
    %c0_i32_1 = arith.constant 0 : i32
    return %arg0, %c0_i32, %c0_i32_0 : i32, i32, i32
  }
  func.func @transform_4(%arg0: i32) -> (i32, i32, i32) {
    %c0_i32 = arith.constant 0 : i32
    %c0_i32_0 = arith.constant 0 : i32
    %c0_i32_1 = arith.constant 0 : i32
    return %arg0, %c0_i32, %c0_i32_0 : i32, i32, i32
  }
  func.func @transform_5(%arg0: i32) -> (i32, i32, i32) {
    %c0_i32 = arith.constant 0 : i32
    %c0_i32_0 = arith.constant 0 : i32
    %c0_i32_1 = arith.constant 0 : i32
    return %arg0, %c0_i32, %c0_i32_0 : i32, i32, i32
  }
}

module attributes {stable_mosaic.version = 11 : i64} {
  func.func @_soft_attn_pool_kernel(%arg0: i32, %arg1: memref<2x8x32xbf16, #tpu.memory_space<vmem>>, %arg2: memref<2x8x32xbf16, #tpu.memory_space<vmem>>, %arg3: memref<2x1x8xf32, #tpu.memory_space<vmem>>, %arg4: memref<2x1x8xf32, #tpu.memory_space<vmem>>, %arg5: memref<2x1x8xf32, #tpu.memory_space<vmem>>) attributes {dimension_semantics = [#tpu.dimension_semantics<parallel>], iteration_bounds = array<i64: 2>, scalar_prefetch = 0 : i64, scratch_operands = 0 : i64, tpu.core_type = #tpu.core_type<tc>, window_params = [{transform_indices = @transform_0, window_bounds = array<i64: 2, 8, 32>}, {transform_indices = @transform_1, window_bounds = array<i64: 2, 8, 32>}, {transform_indices = @transform_2, window_bounds = array<i64: 2, 1, 8>}, {transform_indices = @transform_3, window_bounds = array<i64: 2, 1, 8>}, {transform_indices = @transform_4, window_bounds = array<i64: 2, 1, 8>}]} {
    %c0 = arith.constant 0 : index
    %c0_0 = arith.constant 0 : index
    %c0_1 = arith.constant 0 : index
    %0 = vector.load %arg1[%c0, %c0_0, %c0_1] : memref<2x8x32xbf16, #tpu.memory_space<vmem>>, vector<2x8x32xbf16>
    %c0_2 = arith.constant 0 : index
    %c0_3 = arith.constant 0 : index
    %c0_4 = arith.constant 0 : index
    %1 = vector.load %arg2[%c0_2, %c0_3, %c0_4] : memref<2x8x32xbf16, #tpu.memory_space<vmem>>, vector<2x8x32xbf16>
    %c0_5 = arith.constant 0 : index
    %c0_6 = arith.constant 0 : index
    %c0_7 = arith.constant 0 : index
    %2 = vector.load %arg3[%c0_5, %c0_6, %c0_7] : memref<2x1x8xf32, #tpu.memory_space<vmem>>, vector<2x1x8xf32>
    "tpu.trace_start"() <{level = 10 : i32, message = "bse,bte->bst"}> : () -> ()
    %cst = arith.constant dense<0.000000e+00> : vector<2x8x8xf32>
    %3 = tpu.matmul %0, %1, %cst {dimension_numbers = #tpu.dot_dimension_numbers<[2], [2], [1], [1], [0, 0, 0, 1, 1, 1], [0], [0]>} : vector<2x8x32xbf16>, vector<2x8x32xbf16>, vector<2x8x8xf32> -> vector<2x8x8xf32>
    "tpu.trace_stop"() : () -> ()
    %4 = vector.broadcast %2 : vector<2x1x8xf32> to vector<2x8x8xf32>
    %5 = arith.addf %3, %4 : vector<2x8x8xf32>
    %cst_8 = arith.constant dense<0xFF800000> : vector<2x8xf32>
    %6 = vector.multi_reduction <maximumf>, %5, %cst_8 [2] : vector<2x8x8xf32> to vector<2x8xf32>
    %7 = vector.shape_cast %6 : vector<2x8xf32> to vector<2x8x1xf32>
    %8 = vector.broadcast %7 : vector<2x8x1xf32> to vector<2x8x8xf32>
    %9 = arith.subf %5, %8 : vector<2x8x8xf32>
    %10 = math.exp %9 : vector<2x8x8xf32>
    %cst_9 = arith.constant dense<0.000000e+00> : vector<2x8xf32>
    %11 = vector.multi_reduction <add>, %10, %cst_9 [2] : vector<2x8x8xf32> to vector<2x8xf32>
    %12 = vector.shape_cast %11 : vector<2x8xf32> to vector<2x8x1xf32>
    %13 = vector.broadcast %12 : vector<2x8x1xf32> to vector<2x8x8xf32>
    %14 = arith.divf %10, %13 : vector<2x8x8xf32>
    %cst_10 = arith.constant dense<0.000000e+00> : vector<2x8xf32>
    %15 = vector.multi_reduction <add>, %14, %cst_10 [1] : vector<2x8x8xf32> to vector<2x8xf32>
    %16 = vector.shape_cast %15 : vector<2x8xf32> to vector<2x1x8xf32>
    %cst_11 = arith.constant 8.000000e+00 : f32
    %17 = vector.broadcast %cst_11 : f32 to vector<2x1x8xf32>
    %18 = arith.divf %16, %17 : vector<2x1x8xf32>
    %c0_12 = arith.constant 0 : index
    %c0_13 = arith.constant 0 : index
    %c0_14 = arith.constant 0 : index
    %19 = vector.load %arg4[%c0_12, %c0_13, %c0_14] : memref<2x1x8xf32, #tpu.memory_space<vmem>>, vector<2x1x8xf32>
    tpu.vector_store %arg4[%c0_12, %c0_13, %c0_14], %18 {strides = array<i32>} : memref<2x1x8xf32, #tpu.memory_space<vmem>>, vector<2x1x8xf32>,
    %cst_15 = arith.constant dense<0xFF800000> : vector<2x8xf32>
    %20 = vector.multi_reduction <maximumf>, %14, %cst_15 [1] : vector<2x8x8xf32> to vector<2x8xf32>
    %21 = vector.shape_cast %20 : vector<2x8xf32> to vector<2x1x8xf32>
    %c0_16 = arith.constant 0 : index
    %c0_17 = arith.constant 0 : index
    %c0_18 = arith.constant 0 : index
    %22 = vector.load %arg5[%c0_16, %c0_17, %c0_18] : memref<2x1x8xf32, #tpu.memory_space<vmem>>, vector<2x1x8xf32>
    tpu.vector_store %arg5[%c0_16, %c0_17, %c0_18], %21 {strides = array<i32>} : memref<2x1x8xf32, #tpu.memory_space<vmem>>, vector<2x1x8xf32>,
    return
  }
  func.func @transform_0(%arg0: i32) -> (i32, i32, i32) {
    %c0_i32 = arith.constant 0 : i32
    %c0_i32_0 = arith.constant 0 : i32
    %c0_i32_1 = arith.constant 0 : i32
    return %arg0, %c0_i32, %c0_i32_0 : i32, i32, i32
  }
  func.func @transform_1(%arg0: i32) -> (i32, i32, i32) {
    %c0_i32 = arith.constant 0 : i32
    %c0_i32_0 = arith.constant 0 : i32
    %c0_i32_1 = arith.constant 0 : i32
    return %arg0, %c0_i32, %c0_i32_0 : i32, i32, i32
  }
  func.func @transform_2(%arg0: i32) -> (i32, i32, i32) {
    %c0_i32 = arith.constant 0 : i32
    %c0_i32_0 = arith.constant 0 : i32
    %c0_i32_1 = arith.constant 0 : i32
    return %arg0, %c0_i32, %c0_i32_0 : i32, i32, i32
  }
  func.func @transform_3(%arg0: i32) -> (i32, i32, i32) {
    %c0_i32 = arith.constant 0 : i32
    %c0_i32_0 = arith.constant 0 : i32
    %c0_i32_1 = arith.constant 0 : i32
    return %arg0, %c0_i32, %c0_i32_0 : i32, i32, i32
  }
  func.func @transform_4(%arg0: i32) -> (i32, i32, i32) {
    %c0_i32 = arith.constant 0 : i32
    %c0_i32_0 = arith.constant 0 : i32
    %c0_i32_1 = arith.constant 0 : i32
    return %arg0, %c0_i32, %c0_i32_0 : i32, i32, i32
  }
}

module attributes {stable_mosaic.version = 11 : i64} {
  func.func @_encoder_stack_kernel(%arg0: i32, %arg1: i32, %arg2: memref<2x8x32xbf16, #tpu.memory_space<vmem>>, %arg3: memref<2x1x8xf32, #tpu.memory_space<vmem>>, %arg4: memref<1x32x96xbf16, #tpu.memory_space<vmem>>, %arg5: memref<1x1x96xf32, #tpu.memory_space<vmem>>, %arg6: memref<1x32x32xbf16, #tpu.memory_space<vmem>>, %arg7: memref<1x1x32xf32, #tpu.memory_space<vmem>>, %arg8: memref<1x1x32xf32, #tpu.memory_space<vmem>>, %arg9: memref<1x1x32xf32, #tpu.memory_space<vmem>>, %arg10: memref<1x32x128xbf16, #tpu.memory_space<vmem>>, %arg11: memref<1x1x128xf32, #tpu.memory_space<vmem>>, %arg12: memref<1x128x32xbf16, #tpu.memory_space<vmem>>, %arg13: memref<1x1x32xf32, #tpu.memory_space<vmem>>, %arg14: memref<1x1x32xf32, #tpu.memory_space<vmem>>, %arg15: memref<1x1x32xf32, #tpu.memory_space<vmem>>, %arg16: memref<2x8x32xbf16, #tpu.memory_space<vmem>>) attributes {dimension_semantics = [#tpu.dimension_semantics<parallel>, #tpu.dimension_semantics<arbitrary>], iteration_bounds = array<i64: 2, 3>, scalar_prefetch = 0 : i64, scratch_operands = 0 : i64, tpu.core_type = #tpu.core_type<tc>, window_params = [{transform_indices = @transform_0, window_bounds = array<i64: 2, 8, 32>}, {transform_indices = @transform_1, window_bounds = array<i64: 2, 1, 8>}, {transform_indices = @transform_2, window_bounds = array<i64: 1, 32, 96>}, {transform_indices = @transform_3, window_bounds = array<i64: 1, 1, 96>}, {transform_indices = @transform_4, window_bounds = array<i64: 1, 32, 32>}, {transform_indices = @transform_5, window_bounds = array<i64: 1, 1, 32>}, {transform_indices = @transform_6, window_bounds = array<i64: 1, 1, 32>}, {transform_indices = @transform_7, window_bounds = array<i64: 1, 1, 32>}, {transform_indices = @transform_8, window_bounds = array<i64: 1, 32, 128>}, {transform_indices = @transform_9, window_bounds = array<i64: 1, 1, 128>}, {transform_indices = @transform_10, window_bounds = array<i64: 1, 128, 32>}, {transform_indices = @transform_11, window_bounds = array<i64: 1, 1, 32>}, {transform_indices = @transform_12, window_bounds = array<i64: 1, 1, 32>}, {transform_indices = @transform_13, window_bounds = array<i64: 1, 1, 32>}, {transform_indices = @transform_14, window_bounds = array<i64: 2, 8, 32>}]} {
    %c0_i32 = arith.constant 0 : i32
    %0 = arith.cmpi eq, %arg1, %c0_i32 : i32
    %1 = arith.extui %0 : i1 to i32
    %c0_i32_0 = arith.constant 0 : i32
    %2 = arith.cmpi ne, %1, %c0_i32_0 : i32
    scf.if %2 {
      %c0_86 = arith.constant 0 : index
      %c0_87 = arith.constant 0 : index
      %c0_88 = arith.constant 0 : index
      %203 = vector.load %arg2[%c0_86, %c0_87, %c0_88] : memref<2x8x32xbf16, #tpu.memory_space<vmem>>, vector<2x8x32xbf16>
      %c0_89 = arith.constant 0 : index
      %c0_90 = arith.constant 0 : index
      %c0_91 = arith.constant 0 : index
      %204 = vector.load %arg16[%c0_89, %c0_90, %c0_91] : memref<2x8x32xbf16, #tpu.memory_space<vmem>>, vector<2x8x32xbf16>
      tpu.vector_store %arg16[%c0_89, %c0_90, %c0_91], %203 {strides = array<i32>} : memref<2x8x32xbf16, #tpu.memory_space<vmem>>, vector<2x8x32xbf16>,
    } else {
    }
    %c0 = arith.constant 0 : index
    %c0_1 = arith.constant 0 : index
    %c0_2 = arith.constant 0 : index
    %3 = vector.load %arg16[%c0, %c0_1, %c0_2] : memref<2x8x32xbf16, #tpu.memory_space<vmem>>, vector<2x8x32xbf16>
    %4 = vector.shape_cast %3 : vector<2x8x32xbf16> to vector<16x32xbf16>
    %c0_3 = arith.constant 0 : index
    %c0_4 = arith.constant 0 : index
    %c0_5 = arith.constant 0 : index
    %5 = vector.load %arg4[%c0_3, %c0_4, %c0_5] : memref<1x32x96xbf16, #tpu.memory_space<vmem>>, vector<1x32x96xbf16>
    %6 = vector.shape_cast %5 : vector<1x32x96xbf16> to vector<32x96xbf16>
    %cst = arith.constant dense<0.000000e+00> : vector<16x96xf32>
    %7 = tpu.matmul %4, %6, %cst {dimension_numbers = #tpu.dot_dimension_numbers<[1], [0], [0], [1], [0, 0, 1, 1], [], []>} : vector<16x32xbf16>, vector<32x96xbf16>, vector<16x96xf32> -> vector<16x96xf32>
    %c0_6 = arith.constant 0 : index
    %c0_7 = arith.constant 0 : index
    %c0_8 = arith.constant 0 : index
    %8 = vector.load %arg5[%c0_6, %c0_7, %c0_8] : memref<1x1x96xf32, #tpu.memory_space<vmem>>, vector<1x1x96xf32>
    %9 = vector.shape_cast %8 : vector<1x1x96xf32> to vector<1x96xf32>
    %10 = vector.broadcast %9 : vector<1x96xf32> to vector<16x96xf32>
    %11 = arith.addf %7, %10 : vector<16x96xf32>
    %12 = arith.truncf %11 : vector<16x96xf32> to vector<16x96xbf16>
    %13 = vector.shape_cast %12 : vector<16x96xbf16> to vector<2x8x96xbf16>
    %c0_9 = arith.constant 0 : index
    %c0_10 = arith.constant 0 : index
    %c0_11 = arith.constant 0 : index
    %14 = vector.load %arg3[%c0_9, %c0_10, %c0_11] : memref<2x1x8xf32, #tpu.memory_space<vmem>>, vector<2x1x8xf32>
    %15 = vector.shape_cast %14 : vector<2x1x8xf32> to vector<2x1x8xf32>
    %16 = vector.broadcast %15 : vector<2x1x8xf32> to vector<2x8x8xf32>
    %c0_12 = arith.constant 0 : index
    %c0_13 = arith.constant 0 : index
    %c0_14 = arith.constant 0 : index
    %17 = vector.load %arg6[%c0_12, %c0_13, %c0_14] : memref<1x32x32xbf16, #tpu.memory_space<vmem>>, vector<1x32x32xbf16>
    %18 = vector.shape_cast %17 : vector<1x32x32xbf16> to vector<32x32xbf16>
    %cst_15 = arith.constant 0.000000e+00 : f32
    %19 = vector.broadcast %cst_15 : f32 to vector<16x32xf32>
    %20 = vector.extract_strided_slice %13 {offsets = [0, 0, 0], sizes = [2, 8, 8], strides = [1, 1, 1]} : vector<2x8x96xbf16> to vector<2x8x8xbf16>
    %21 = vector.extract_strided_slice %13 {offsets = [0, 0, 32], sizes = [2, 8, 8], strides = [1, 1, 1]} : vector<2x8x96xbf16> to vector<2x8x8xbf16>
    %22 = vector.extract_strided_slice %13 {offsets = [0, 0, 64], sizes = [2, 8, 8], strides = [1, 1, 1]} : vector<2x8x96xbf16> to vector<2x8x8xbf16>
    "tpu.trace_start"() <{level = 10 : i32, message = "bqd,bkd->bqk"}> : () -> ()
    %cst_16 = arith.constant dense<0.000000e+00> : vector<2x8x8xf32>
    %23 = tpu.matmul %20, %21, %cst_16 {dimension_numbers = #tpu.dot_dimension_numbers<[2], [2], [1], [1], [0, 0, 0, 1, 1, 1], [0], [0]>} : vector<2x8x8xbf16>, vector<2x8x8xbf16>, vector<2x8x8xf32> -> vector<2x8x8xf32>
    "tpu.trace_stop"() : () -> ()
    %cst_17 = arith.constant 0.353553385 : f32
    %24 = vector.broadcast %cst_17 : f32 to vector<2x8x8xf32>
    %25 = arith.mulf %23, %24 : vector<2x8x8xf32>
    %26 = arith.addf %25, %16 : vector<2x8x8xf32>
    %cst_18 = arith.constant dense<0xFF800000> : vector<2x8xf32>
    %27 = vector.multi_reduction <maximumf>, %26, %cst_18 [2] : vector<2x8x8xf32> to vector<2x8xf32>
    %28 = vector.shape_cast %27 : vector<2x8xf32> to vector<2x8x1xf32>
    %29 = vector.broadcast %28 : vector<2x8x1xf32> to vector<2x8x8xf32>
    %30 = arith.subf %26, %29 : vector<2x8x8xf32>
    %31 = math.exp %30 : vector<2x8x8xf32>
    %cst_19 = arith.constant dense<0.000000e+00> : vector<2x8xf32>
    %32 = vector.multi_reduction <add>, %31, %cst_19 [2] : vector<2x8x8xf32> to vector<2x8xf32>
    %33 = vector.shape_cast %32 : vector<2x8xf32> to vector<2x8x1xf32>
    %34 = vector.broadcast %33 : vector<2x8x1xf32> to vector<2x8x8xf32>
    %35 = arith.divf %31, %34 : vector<2x8x8xf32>
    %36 = arith.truncf %35 : vector<2x8x8xf32> to vector<2x8x8xbf16>
    "tpu.trace_start"() <{level = 10 : i32, message = "bqk,bkd->bqd"}> : () -> ()
    %cst_20 = arith.constant dense<0.000000e+00> : vector<2x8x8xf32>
    %37 = tpu.matmul %36, %22, %cst_20 {dimension_numbers = #tpu.dot_dimension_numbers<[2], [1], [1], [2], [0, 0, 0, 1, 1, 2], [0], [0]>} : vector<2x8x8xbf16>, vector<2x8x8xbf16>, vector<2x8x8xf32> -> vector<2x8x8xf32>
    "tpu.trace_stop"() : () -> ()
    %38 = vector.shape_cast %37 : vector<2x8x8xf32> to vector<16x8xf32>
    %39 = arith.truncf %38 : vector<16x8xf32> to vector<16x8xbf16>
    %40 = vector.extract_strided_slice %18 {offsets = [0, 0], sizes = [8, 32], strides = [1, 1]} : vector<32x32xbf16> to vector<8x32xbf16>
    %cst_21 = arith.constant dense<0.000000e+00> : vector<16x32xf32>
    %41 = tpu.matmul %39, %40, %cst_21 {dimension_numbers = #tpu.dot_dimension_numbers<[1], [0], [0], [1], [0, 0, 1, 1], [], []>} : vector<16x8xbf16>, vector<8x32xbf16>, vector<16x32xf32> -> vector<16x32xf32>
    %42 = arith.addf %19, %41 : vector<16x32xf32>
    %43 = vector.extract_strided_slice %13 {offsets = [0, 0, 8], sizes = [2, 8, 8], strides = [1, 1, 1]} : vector<2x8x96xbf16> to vector<2x8x8xbf16>
    %44 = vector.extract_strided_slice %13 {offsets = [0, 0, 40], sizes = [2, 8, 8], strides = [1, 1, 1]} : vector<2x8x96xbf16> to vector<2x8x8xbf16>
    %45 = vector.extract_strided_slice %13 {offsets = [0, 0, 72], sizes = [2, 8, 8], strides = [1, 1, 1]} : vector<2x8x96xbf16> to vector<2x8x8xbf16>
    "tpu.trace_start"() <{level = 10 : i32, message = "bqd,bkd->bqk"}> : () -> ()
    %cst_22 = arith.constant dense<0.000000e+00> : vector<2x8x8xf32>
    %46 = tpu.matmul %43, %44, %cst_22 {dimension_numbers = #tpu.dot_dimension_numbers<[2], [2], [1], [1], [0, 0, 0, 1, 1, 1], [0], [0]>} : vector<2x8x8xbf16>, vector<2x8x8xbf16>, vector<2x8x8xf32> -> vector<2x8x8xf32>
    "tpu.trace_stop"() : () -> ()
    %cst_23 = arith.constant 0.353553385 : f32
    %47 = vector.broadcast %cst_23 : f32 to vector<2x8x8xf32>
    %48 = arith.mulf %46, %47 : vector<2x8x8xf32>
    %49 = arith.addf %48, %16 : vector<2x8x8xf32>
    %cst_24 = arith.constant dense<0xFF800000> : vector<2x8xf32>
    %50 = vector.multi_reduction <maximumf>, %49, %cst_24 [2] : vector<2x8x8xf32> to vector<2x8xf32>
    %51 = vector.shape_cast %50 : vector<2x8xf32> to vector<2x8x1xf32>
    %52 = vector.broadcast %51 : vector<2x8x1xf32> to vector<2x8x8xf32>
    %53 = arith.subf %49, %52 : vector<2x8x8xf32>
    %54 = math.exp %53 : vector<2x8x8xf32>
    %cst_25 = arith.constant dense<0.000000e+00> : vector<2x8xf32>
    %55 = vector.multi_reduction <add>, %54, %cst_25 [2] : vector<2x8x8xf32> to vector<2x8xf32>
    %56 = vector.shape_cast %55 : vector<2x8xf32> to vector<2x8x1xf32>
    %57 = vector.broadcast %56 : vector<2x8x1xf32> to vector<2x8x8xf32>
    %58 = arith.divf %54, %57 : vector<2x8x8xf32>
    %59 = arith.truncf %58 : vector<2x8x8xf32> to vector<2x8x8xbf16>
    "tpu.trace_start"() <{level = 10 : i32, message = "bqk,bkd->bqd"}> : () -> ()
    %cst_26 = arith.constant dense<0.000000e+00> : vector<2x8x8xf32>
    %60 = tpu.matmul %59, %45, %cst_26 {dimension_numbers = #tpu.dot_dimension_numbers<[2], [1], [1], [2], [0, 0, 0, 1, 1, 2], [0], [0]>} : vector<2x8x8xbf16>, vector<2x8x8xbf16>, vector<2x8x8xf32> -> vector<2x8x8xf32>
    "tpu.trace_stop"() : () -> ()
    %61 = vector.shape_cast %60 : vector<2x8x8xf32> to vector<16x8xf32>
    %62 = arith.truncf %61 : vector<16x8xf32> to vector<16x8xbf16>
    %63 = vector.extract_strided_slice %18 {offsets = [8, 0], sizes = [8, 32], strides = [1, 1]} : vector<32x32xbf16> to vector<8x32xbf16>
    %cst_27 = arith.constant dense<0.000000e+00> : vector<16x32xf32>
    %64 = tpu.matmul %62, %63, %cst_27 {dimension_numbers = #tpu.dot_dimension_numbers<[1], [0], [0], [1], [0, 0, 1, 1], [], []>} : vector<16x8xbf16>, vector<8x32xbf16>, vector<16x32xf32> -> vector<16x32xf32>
    %65 = arith.addf %42, %64 : vector<16x32xf32>
    %66 = vector.extract_strided_slice %13 {offsets = [0, 0, 16], sizes = [2, 8, 8], strides = [1, 1, 1]} : vector<2x8x96xbf16> to vector<2x8x8xbf16>
    %67 = vector.extract_strided_slice %13 {offsets = [0, 0, 48], sizes = [2, 8, 8], strides = [1, 1, 1]} : vector<2x8x96xbf16> to vector<2x8x8xbf16>
    %68 = vector.extract_strided_slice %13 {offsets = [0, 0, 80], sizes = [2, 8, 8], strides = [1, 1, 1]} : vector<2x8x96xbf16> to vector<2x8x8xbf16>
    "tpu.trace_start"() <{level = 10 : i32, message = "bqd,bkd->bqk"}> : () -> ()
    %cst_28 = arith.constant dense<0.000000e+00> : vector<2x8x8xf32>
    %69 = tpu.matmul %66, %67, %cst_28 {dimension_numbers = #tpu.dot_dimension_numbers<[2], [2], [1], [1], [0, 0, 0, 1, 1, 1], [0], [0]>} : vector<2x8x8xbf16>, vector<2x8x8xbf16>, vector<2x8x8xf32> -> vector<2x8x8xf32>
    "tpu.trace_stop"() : () -> ()
    %cst_29 = arith.constant 0.353553385 : f32
    %70 = vector.broadcast %cst_29 : f32 to vector<2x8x8xf32>
    %71 = arith.mulf %69, %70 : vector<2x8x8xf32>
    %72 = arith.addf %71, %16 : vector<2x8x8xf32>
    %cst_30 = arith.constant dense<0xFF800000> : vector<2x8xf32>
    %73 = vector.multi_reduction <maximumf>, %72, %cst_30 [2] : vector<2x8x8xf32> to vector<2x8xf32>
    %74 = vector.shape_cast %73 : vector<2x8xf32> to vector<2x8x1xf32>
    %75 = vector.broadcast %74 : vector<2x8x1xf32> to vector<2x8x8xf32>
    %76 = arith.subf %72, %75 : vector<2x8x8xf32>
    %77 = math.exp %76 : vector<2x8x8xf32>
    %cst_31 = arith.constant dense<0.000000e+00> : vector<2x8xf32>
    %78 = vector.multi_reduction <add>, %77, %cst_31 [2] : vector<2x8x8xf32> to vector<2x8xf32>
    %79 = vector.shape_cast %78 : vector<2x8xf32> to vector<2x8x1xf32>
    %80 = vector.broadcast %79 : vector<2x8x1xf32> to vector<2x8x8xf32>
    %81 = arith.divf %77, %80 : vector<2x8x8xf32>
    %82 = arith.truncf %81 : vector<2x8x8xf32> to vector<2x8x8xbf16>
    "tpu.trace_start"() <{level = 10 : i32, message = "bqk,bkd->bqd"}> : () -> ()
    %cst_32 = arith.constant dense<0.000000e+00> : vector<2x8x8xf32>
    %83 = tpu.matmul %82, %68, %cst_32 {dimension_numbers = #tpu.dot_dimension_numbers<[2], [1], [1], [2], [0, 0, 0, 1, 1, 2], [0], [0]>} : vector<2x8x8xbf16>, vector<2x8x8xbf16>, vector<2x8x8xf32> -> vector<2x8x8xf32>
    "tpu.trace_stop"() : () -> ()
    %84 = vector.shape_cast %83 : vector<2x8x8xf32> to vector<16x8xf32>
    %85 = arith.truncf %84 : vector<16x8xf32> to vector<16x8xbf16>
    %86 = vector.extract_strided_slice %18 {offsets = [16, 0], sizes = [8, 32], strides = [1, 1]} : vector<32x32xbf16> to vector<8x32xbf16>
    %cst_33 = arith.constant dense<0.000000e+00> : vector<16x32xf32>
    %87 = tpu.matmul %85, %86, %cst_33 {dimension_numbers = #tpu.dot_dimension_numbers<[1], [0], [0], [1], [0, 0, 1, 1], [], []>} : vector<16x8xbf16>, vector<8x32xbf16>, vector<16x32xf32> -> vector<16x32xf32>
    %88 = arith.addf %65, %87 : vector<16x32xf32>
    %89 = vector.extract_strided_slice %13 {offsets = [0, 0, 24], sizes = [2, 8, 8], strides = [1, 1, 1]} : vector<2x8x96xbf16> to vector<2x8x8xbf16>
    %90 = vector.extract_strided_slice %13 {offsets = [0, 0, 56], sizes = [2, 8, 8], strides = [1, 1, 1]} : vector<2x8x96xbf16> to vector<2x8x8xbf16>
    %91 = vector.extract_strided_slice %13 {offsets = [0, 0, 88], sizes = [2, 8, 8], strides = [1, 1, 1]} : vector<2x8x96xbf16> to vector<2x8x8xbf16>
    "tpu.trace_start"() <{level = 10 : i32, message = "bqd,bkd->bqk"}> : () -> ()
    %cst_34 = arith.constant dense<0.000000e+00> : vector<2x8x8xf32>
    %92 = tpu.matmul %89, %90, %cst_34 {dimension_numbers = #tpu.dot_dimension_numbers<[2], [2], [1], [1], [0, 0, 0, 1, 1, 1], [0], [0]>} : vector<2x8x8xbf16>, vector<2x8x8xbf16>, vector<2x8x8xf32> -> vector<2x8x8xf32>
    "tpu.trace_stop"() : () -> ()
    %cst_35 = arith.constant 0.353553385 : f32
    %93 = vector.broadcast %cst_35 : f32 to vector<2x8x8xf32>
    %94 = arith.mulf %92, %93 : vector<2x8x8xf32>
    %95 = arith.addf %94, %16 : vector<2x8x8xf32>
    %cst_36 = arith.constant dense<0xFF800000> : vector<2x8xf32>
    %96 = vector.multi_reduction <maximumf>, %95, %cst_36 [2] : vector<2x8x8xf32> to vector<2x8xf32>
    %97 = vector.shape_cast %96 : vector<2x8xf32> to vector<2x8x1xf32>
    %98 = vector.broadcast %97 : vector<2x8x1xf32> to vector<2x8x8xf32>
    %99 = arith.subf %95, %98 : vector<2x8x8xf32>
    %100 = math.exp %99 : vector<2x8x8xf32>
    %cst_37 = arith.constant dense<0.000000e+00> : vector<2x8xf32>
    %101 = vector.multi_reduction <add>, %100, %cst_37 [2] : vector<2x8x8xf32> to vector<2x8xf32>
    %102 = vector.shape_cast %101 : vector<2x8xf32> to vector<2x8x1xf32>
    %103 = vector.broadcast %102 : vector<2x8x1xf32> to vector<2x8x8xf32>
    %104 = arith.divf %100, %103 : vector<2x8x8xf32>
    %105 = arith.truncf %104 : vector<2x8x8xf32> to vector<2x8x8xbf16>
    "tpu.trace_start"() <{level = 10 : i32, message = "bqk,bkd->bqd"}> : () -> ()
    %cst_38 = arith.constant dense<0.000000e+00> : vector<2x8x8xf32>
    %106 = tpu.matmul %105, %91, %cst_38 {dimension_numbers = #tpu.dot_dimension_numbers<[2], [1], [1], [2], [0, 0, 0, 1, 1, 2], [0], [0]>} : vector<2x8x8xbf16>, vector<2x8x8xbf16>, vector<2x8x8xf32> -> vector<2x8x8xf32>
    "tpu.trace_stop"() : () -> ()
    %107 = vector.shape_cast %106 : vector<2x8x8xf32> to vector<16x8xf32>
    %108 = arith.truncf %107 : vector<16x8xf32> to vector<16x8xbf16>
    %109 = vector.extract_strided_slice %18 {offsets = [24, 0], sizes = [8, 32], strides = [1, 1]} : vector<32x32xbf16> to vector<8x32xbf16>
    %cst_39 = arith.constant dense<0.000000e+00> : vector<16x32xf32>
    %110 = tpu.matmul %108, %109, %cst_39 {dimension_numbers = #tpu.dot_dimension_numbers<[1], [0], [0], [1], [0, 0, 1, 1], [], []>} : vector<16x8xbf16>, vector<8x32xbf16>, vector<16x32xf32> -> vector<16x32xf32>
    %111 = arith.addf %88, %110 : vector<16x32xf32>
    %c0_40 = arith.constant 0 : index
    %c0_41 = arith.constant 0 : index
    %c0_42 = arith.constant 0 : index
    %112 = vector.load %arg7[%c0_40, %c0_41, %c0_42] : memref<1x1x32xf32, #tpu.memory_space<vmem>>, vector<1x1x32xf32>
    %113 = vector.shape_cast %112 : vector<1x1x32xf32> to vector<1x32xf32>
    %114 = vector.broadcast %113 : vector<1x32xf32> to vector<16x32xf32>
    %115 = arith.addf %111, %114 : vector<16x32xf32>
    %116 = arith.extf %4 : vector<16x32xbf16> to vector<16x32xf32>
    %117 = arith.addf %116, %115 : vector<16x32xf32>
    %c0_43 = arith.constant 0 : index
    %c0_44 = arith.constant 0 : index
    %c0_45 = arith.constant 0 : index
    %118 = vector.load %arg8[%c0_43, %c0_44, %c0_45] : memref<1x1x32xf32, #tpu.memory_space<vmem>>, vector<1x1x32xf32>
    %119 = vector.shape_cast %118 : vector<1x1x32xf32> to vector<1x32xf32>
    %c0_46 = arith.constant 0 : index
    %c0_47 = arith.constant 0 : index
    %c0_48 = arith.constant 0 : index
    %120 = vector.load %arg9[%c0_46, %c0_47, %c0_48] : memref<1x1x32xf32, #tpu.memory_space<vmem>>, vector<1x1x32xf32>
    %121 = vector.shape_cast %120 : vector<1x1x32xf32> to vector<1x32xf32>
    %cst_49 = arith.constant dense<0.000000e+00> : vector<16xf32>
    %122 = vector.multi_reduction <add>, %117, %cst_49 [1] : vector<16x32xf32> to vector<16xf32>
    %123 = vector.shape_cast %122 : vector<16xf32> to vector<16x1xf32>
    %cst_50 = arith.constant 3.200000e+01 : f32
    %124 = vector.broadcast %cst_50 : f32 to vector<16x1xf32>
    %125 = arith.divf %123, %124 : vector<16x1xf32>
    %126 = vector.broadcast %125 : vector<16x1xf32> to vector<16x32xf32>
    %127 = arith.subf %117, %126 : vector<16x32xf32>
    %128 = arith.mulf %127, %127 : vector<16x32xf32>
    %cst_51 = arith.constant dense<0.000000e+00> : vector<16xf32>
    %129 = vector.multi_reduction <add>, %128, %cst_51 [1] : vector<16x32xf32> to vector<16xf32>
    %130 = vector.shape_cast %129 : vector<16xf32> to vector<16x1xf32>
    %cst_52 = arith.constant 3.200000e+01 : f32
    %131 = vector.broadcast %cst_52 : f32 to vector<16x1xf32>
    %132 = arith.divf %130, %131 : vector<16x1xf32>
    %133 = vector.broadcast %125 : vector<16x1xf32> to vector<16x32xf32>
    %134 = arith.subf %117, %133 : vector<16x32xf32>
    %cst_53 = arith.constant 9.99999974E-6 : f32
    %135 = vector.broadcast %cst_53 : f32 to vector<16x1xf32>
    %136 = arith.addf %132, %135 : vector<16x1xf32>
    %137 = math.rsqrt %136 : vector<16x1xf32>
    %138 = vector.broadcast %137 : vector<16x1xf32> to vector<16x32xf32>
    %139 = arith.mulf %134, %138 : vector<16x32xf32>
    %140 = vector.broadcast %119 : vector<1x32xf32> to vector<16x32xf32>
    %141 = arith.mulf %139, %140 : vector<16x32xf32>
    %142 = vector.broadcast %121 : vector<1x32xf32> to vector<16x32xf32>
    %143 = arith.addf %141, %142 : vector<16x32xf32>
    %144 = arith.truncf %143 : vector<16x32xf32> to vector<16x32xbf16>
    %c0_54 = arith.constant 0 : index
    %c0_55 = arith.constant 0 : index
    %c0_56 = arith.constant 0 : index
    %145 = vector.load %arg10[%c0_54, %c0_55, %c0_56] : memref<1x32x128xbf16, #tpu.memory_space<vmem>>, vector<1x32x128xbf16>
    %146 = vector.shape_cast %145 : vector<1x32x128xbf16> to vector<32x128xbf16>
    %cst_57 = arith.constant dense<0.000000e+00> : vector<16x128xf32>
    %147 = tpu.matmul %144, %146, %cst_57 {dimension_numbers = #tpu.dot_dimension_numbers<[1], [0], [0], [1], [0, 0, 1, 1], [], []>} : vector<16x32xbf16>, vector<32x128xbf16>, vector<16x128xf32> -> vector<16x128xf32>
    %c0_58 = arith.constant 0 : index
    %c0_59 = arith.constant 0 : index
    %c0_60 = arith.constant 0 : index
    %148 = vector.load %arg11[%c0_58, %c0_59, %c0_60] : memref<1x1x128xf32, #tpu.memory_space<vmem>>, vector<1x1x128xf32>
    %149 = vector.shape_cast %148 : vector<1x1x128xf32> to vector<1x128xf32>
    %150 = vector.broadcast %149 : vector<1x128xf32> to vector<16x128xf32>
    %151 = arith.addf %147, %150 : vector<16x128xf32>
    %152 = arith.mulf %151, %151 : vector<16x128xf32>
    %153 = arith.mulf %151, %152 : vector<16x128xf32>
    %cst_61 = arith.constant 4.471500e-02 : f32
    %154 = vector.broadcast %cst_61 : f32 to vector<16x128xf32>
    %155 = arith.mulf %154, %153 : vector<16x128xf32>
    %156 = arith.addf %151, %155 : vector<16x128xf32>
    %cst_62 = arith.constant 0.797884583 : f32
    %157 = vector.broadcast %cst_62 : f32 to vector<16x128xf32>
    %158 = arith.mulf %157, %156 : vector<16x128xf32>
    %159 = math.tanh %158 : vector<16x128xf32>
    %cst_63 = arith.constant 1.000000e+00 : f32
    %160 = vector.broadcast %cst_63 : f32 to vector<16x128xf32>
    %161 = arith.addf %160, %159 : vector<16x128xf32>
    %cst_64 = arith.constant 5.000000e-01 : f32
    %162 = vector.broadcast %cst_64 : f32 to vector<16x128xf32>
    %163 = arith.mulf %162, %161 : vector<16x128xf32>
    %164 = arith.mulf %151, %163 : vector<16x128xf32>
    %165 = arith.truncf %164 : vector<16x128xf32> to vector<16x128xbf16>
    %c0_65 = arith.constant 0 : index
    %c0_66 = arith.constant 0 : index
    %c0_67 = arith.constant 0 : index
    %166 = vector.load %arg12[%c0_65, %c0_66, %c0_67] : memref<1x128x32xbf16, #tpu.memory_space<vmem>>, vector<1x128x32xbf16>
    %167 = vector.shape_cast %166 : vector<1x128x32xbf16> to vector<128x32xbf16>
    %cst_68 = arith.constant dense<0.000000e+00> : vector<16x32xf32>
    %168 = tpu.matmul %165, %167, %cst_68 {dimension_numbers = #tpu.dot_dimension_numbers<[1], [0], [0], [1], [0, 0, 1, 1], [], []>} : vector<16x128xbf16>, vector<128x32xbf16>, vector<16x32xf32> -> vector<16x32xf32>
    %c0_69 = arith.constant 0 : index
    %c0_70 = arith.constant 0 : index
    %c0_71 = arith.constant 0 : index
    %169 = vector.load %arg13[%c0_69, %c0_70, %c0_71] : memref<1x1x32xf32, #tpu.memory_space<vmem>>, vector<1x1x32xf32>
    %170 = vector.shape_cast %169 : vector<1x1x32xf32> to vector<1x32xf32>
    %171 = vector.broadcast %170 : vector<1x32xf32> to vector<16x32xf32>
    %172 = arith.addf %168, %171 : vector<16x32xf32>
    %173 = arith.addf %143, %172 : vector<16x32xf32>
    %c0_72 = arith.constant 0 : index
    %c0_73 = arith.constant 0 : index
    %c0_74 = arith.constant 0 : index
    %174 = vector.load %arg14[%c0_72, %c0_73, %c0_74] : memref<1x1x32xf32, #tpu.memory_space<vmem>>, vector<1x1x32xf32>
    %175 = vector.shape_cast %174 : vector<1x1x32xf32> to vector<1x32xf32>
    %c0_75 = arith.constant 0 : index
    %c0_76 = arith.constant 0 : index
    %c0_77 = arith.constant 0 : index
    %176 = vector.load %arg15[%c0_75, %c0_76, %c0_77] : memref<1x1x32xf32, #tpu.memory_space<vmem>>, vector<1x1x32xf32>
    %177 = vector.shape_cast %176 : vector<1x1x32xf32> to vector<1x32xf32>
    %cst_78 = arith.constant dense<0.000000e+00> : vector<16xf32>
    %178 = vector.multi_reduction <add>, %173, %cst_78 [1] : vector<16x32xf32> to vector<16xf32>
    %179 = vector.shape_cast %178 : vector<16xf32> to vector<16x1xf32>
    %cst_79 = arith.constant 3.200000e+01 : f32
    %180 = vector.broadcast %cst_79 : f32 to vector<16x1xf32>
    %181 = arith.divf %179, %180 : vector<16x1xf32>
    %182 = vector.broadcast %181 : vector<16x1xf32> to vector<16x32xf32>
    %183 = arith.subf %173, %182 : vector<16x32xf32>
    %184 = arith.mulf %183, %183 : vector<16x32xf32>
    %cst_80 = arith.constant dense<0.000000e+00> : vector<16xf32>
    %185 = vector.multi_reduction <add>, %184, %cst_80 [1] : vector<16x32xf32> to vector<16xf32>
    %186 = vector.shape_cast %185 : vector<16xf32> to vector<16x1xf32>
    %cst_81 = arith.constant 3.200000e+01 : f32
    %187 = vector.broadcast %cst_81 : f32 to vector<16x1xf32>
    %188 = arith.divf %186, %187 : vector<16x1xf32>
    %189 = vector.broadcast %181 : vector<16x1xf32> to vector<16x32xf32>
    %190 = arith.subf %173, %189 : vector<16x32xf32>
    %cst_82 = arith.constant 9.99999974E-6 : f32
    %191 = vector.broadcast %cst_82 : f32 to vector<16x1xf32>
    %192 = arith.addf %188, %191 : vector<16x1xf32>
    %193 = math.rsqrt %192 : vector<16x1xf32>
    %194 = vector.broadcast %193 : vector<16x1xf32> to vector<16x32xf32>
    %195 = arith.mulf %190, %194 : vector<16x32xf32>
    %196 = vector.broadcast %175 : vector<1x32xf32> to vector<16x32xf32>
    %197 = arith.mulf %195, %196 : vector<16x32xf32>
    %198 = vector.broadcast %177 : vector<1x32xf32> to vector<16x32xf32>
    %199 = arith.addf %197, %198 : vector<16x32xf32>
    %200 = vector.shape_cast %199 : vector<16x32xf32> to vector<2x8x32xf32>
    %201 = arith.truncf %200 : vector<2x8x32xf32> to vector<2x8x32xbf16>
    %c0_83 = arith.constant 0 : index
    %c0_84 = arith.constant 0 : index
    %c0_85 = arith.constant 0 : index
    %202 = vector.load %arg16[%c0_83, %c0_84, %c0_85] : memref<2x8x32xbf16, #tpu.memory_space<vmem>>, vector<2x8x32xbf16>
    tpu.vector_store %arg16[%c0_83, %c0_84, %c0_85], %201 {strides = array<i32>} : memref<2x8x32xbf16, #tpu.memory_space<vmem>>, vector<2x8x32xbf16>,
    return
  }
  func.func @transform_0(%arg0: i32, %arg1: i32) -> (i32, i32, i32) {
    %c0_i32 = arith.constant 0 : i32
    %c0_i32_0 = arith.constant 0 : i32
    %c0_i32_1 = arith.constant 0 : i32
    return %arg0, %c0_i32, %c0_i32_0 : i32, i32, i32
  }
  func.func @transform_1(%arg0: i32, %arg1: i32) -> (i32, i32, i32) {
    %c0_i32 = arith.constant 0 : i32
    %c0_i32_0 = arith.constant 0 : i32
    %c0_i32_1 = arith.constant 0 : i32
    return %arg0, %c0_i32, %c0_i32_0 : i32, i32, i32
  }
  func.func @transform_2(%arg0: i32, %arg1: i32) -> (i32, i32, i32) {
    %c0_i32 = arith.constant 0 : i32
    %c0_i32_0 = arith.constant 0 : i32
    %c0_i32_1 = arith.constant 0 : i32
    return %arg1, %c0_i32, %c0_i32_0 : i32, i32, i32
  }
  func.func @transform_3(%arg0: i32, %arg1: i32) -> (i32, i32, i32) {
    %c0_i32 = arith.constant 0 : i32
    %c0_i32_0 = arith.constant 0 : i32
    %c0_i32_1 = arith.constant 0 : i32
    return %arg1, %c0_i32, %c0_i32_0 : i32, i32, i32
  }
  func.func @transform_4(%arg0: i32, %arg1: i32) -> (i32, i32, i32) {
    %c0_i32 = arith.constant 0 : i32
    %c0_i32_0 = arith.constant 0 : i32
    %c0_i32_1 = arith.constant 0 : i32
    return %arg1, %c0_i32, %c0_i32_0 : i32, i32, i32
  }
  func.func @transform_5(%arg0: i32, %arg1: i32) -> (i32, i32, i32) {
    %c0_i32 = arith.constant 0 : i32
    %c0_i32_0 = arith.constant 0 : i32
    %c0_i32_1 = arith.constant 0 : i32
    return %arg1, %c0_i32, %c0_i32_0 : i32, i32, i32
  }
  func.func @transform_6(%arg0: i32, %arg1: i32) -> (i32, i32, i32) {
    %c0_i32 = arith.constant 0 : i32
    %c0_i32_0 = arith.constant 0 : i32
    %c0_i32_1 = arith.constant 0 : i32
    return %arg1, %c0_i32, %c0_i32_0 : i32, i32, i32
  }
  func.func @transform_7(%arg0: i32, %arg1: i32) -> (i32, i32, i32) {
    %c0_i32 = arith.constant 0 : i32
    %c0_i32_0 = arith.constant 0 : i32
    %c0_i32_1 = arith.constant 0 : i32
    return %arg1, %c0_i32, %c0_i32_0 : i32, i32, i32
  }
  func.func @transform_8(%arg0: i32, %arg1: i32) -> (i32, i32, i32) {
    %c0_i32 = arith.constant 0 : i32
    %c0_i32_0 = arith.constant 0 : i32
    %c0_i32_1 = arith.constant 0 : i32
    return %arg1, %c0_i32, %c0_i32_0 : i32, i32, i32
  }
  func.func @transform_9(%arg0: i32, %arg1: i32) -> (i32, i32, i32) {
    %c0_i32 = arith.constant 0 : i32
    %c0_i32_0 = arith.constant 0 : i32
    %c0_i32_1 = arith.constant 0 : i32
    return %arg1, %c0_i32, %c0_i32_0 : i32, i32, i32
  }
  func.func @transform_10(%arg0: i32, %arg1: i32) -> (i32, i32, i32) {
    %c0_i32 = arith.constant 0 : i32
    %c0_i32_0 = arith.constant 0 : i32
    %c0_i32_1 = arith.constant 0 : i32
    return %arg1, %c0_i32, %c0_i32_0 : i32, i32, i32
  }
  func.func @transform_11(%arg0: i32, %arg1: i32) -> (i32, i32, i32) {
    %c0_i32 = arith.constant 0 : i32
    %c0_i32_0 = arith.constant 0 : i32
    %c0_i32_1 = arith.constant 0 : i32
    return %arg1, %c0_i32, %c0_i32_0 : i32, i32, i32
  }
  func.func @transform_12(%arg0: i32, %arg1: i32) -> (i32, i32, i32) {
    %c0_i32 = arith.constant 0 : i32
    %c0_i32_0 = arith.constant 0 : i32
    %c0_i32_1 = arith.constant 0 : i32
    return %arg1, %c0_i32, %c0_i32_0 : i32, i32, i32
  }
  func.func @transform_13(%arg0: i32, %arg1: i32) -> (i32, i32, i32) {
    %c0_i32 = arith.constant 0 : i32
    %c0_i32_0 = arith.constant 0 : i32
    %c0_i32_1 = arith.constant 0 : i32
    return %arg1, %c0_i32, %c0_i32_0 : i32, i32, i32
  }
  func.func @transform_14(%arg0: i32, %arg1: i32) -> (i32, i32, i32) {
    %c0_i32 = arith.constant 0 : i32
    %c0_i32_0 = arith.constant 0 : i32
    %c0_i32_1 = arith.constant 0 : i32
    return %arg0, %c0_i32, %c0_i32_0 : i32, i32, i32
  }
}

</mosaic_0001>

<llo_original>
// kernel: esim_forward.7
$region0: #{esim_forward.7}
  #allocation0 [shape = 'u32[]', space=smem, size = 0x4, offset = 0x4, fixed_abs, tag = 'smem constant byte address 0x4 - core index']
  #allocation1 [shape = 'u32[144,128]{1,0:T(1,128)}', space=vmem, size = 0x12000, scoped, tag = 'internal scratch']
  %s0 = inlined_call_operand.vmem [shape: bf16[4,8,32], index: 0, kind: input, shape index: {}]
  %s1 = inlined_call_operand.vmem [shape: bf16[4,8,32], index: 1, kind: input, shape index: {}]
  %s2 = inlined_call_operand.vmem [shape: f32[4,1,8], index: 2, kind: input, shape index: {}]
  %s3 = inlined_call_operand.vmem [shape: f32[4,1,8], index: 3, kind: output, shape index: {0}]
  %s4 = inlined_call_operand.vmem [shape: f32[4,1,8], index: 4, kind: output, shape index: {1}]
  %5 = xla_tuple %s3, %s4
  %s6 = sld [smem:[#allocation0]]
  $region53: #{esim_forward.7} parent=0
    _
  %s8 = ssub.s32 1, %s6
  %s9 = scalar_select 0, %s8, %s6
  loop: start=0, step=1, limit=4
  $region2: #{esim_forward.7} parent=0 // loop_pre_header
    _
  $region3: #{esim_forward.7} parent=0 // loop_header
    %s11 = sphi 0, %s15
    %p12 = scmp.ge.s32.totalorder %s11, 4
    %s21 = sphi 0, %s23
    %s24 = sphi 0, %s21
    %s25 = sphi 0, %s24
    %s41 = sphi 0, %s25
    %s47 = sphi 0, %s49
    %s50 = sphi 0, %s47
    %s51 = sphi 0, %s50
    %s67 = sphi 0, %s51
    %s73 = sphi 0, %s75
    %s76 = sphi 0, %s73
    %s77 = sphi 0, %s76
    %s93 = sphi 0, %s77
    %s99 = sphi 0, %s101
    %s102 = sphi 0, %s99
    %s103 = sphi 0, %s102
    %s119 = sphi 0, %s103
    %s125 = sphi 0, %s127
    %s128 = sphi 0, %s125
    %s129 = sphi 0, %s128
    %s145 = sphi 0, %s129
  $region4: #{esim_forward.7} parent=0 // loop_header_branch
    %14 = sbr.rel (%p12) target = $region8
  $region5: #{esim_forward.7} parent=0 // loop_body
    %s16 = ssub.s32 %s11, 1
    %s17 = ssub.s32 %s11, 2
    %s18 = sadd.s32 %s11, 1
    %s19 = ssub.s32 %s11, %s18
    %p20 = scmp.eq.s32.totalorder %s19, 0
    %s22 = sadd.s32 %s21, 1
    %s23 = scalar_select %p20, %s21, %s22
    %p26 = pneg %p20
    %p27 = scmp.eq.s32.totalorder %s11, 1
    %p28 = por %p26, %p27
    %p29 = scmp.ne.s32.totalorder %s21, %s24
    %p30 = scmp.eq.s32.totalorder %s11, 0
    %p31 = por %p29, %p30
    %p32 = scmp.ne.s32.totalorder %s21, %s24
    %p33 = scmp.eq.s32.totalorder %s16, 1
    %p34 = por %p32, %p33
    %p35 = scmp.ne.s32.totalorder %s24, %s25
    %p36 = scmp.eq.s32.totalorder %s16, 0
    %p37 = por %p35, %p36
    %p38 = scmp.ne.s32.totalorder %s24, %s25
    %p39 = scmp.eq.s32.totalorder %s17, 1
    %p40 = por %p38, %p39
    %p42 = scmp.ne.s32.totalorder %s25, %s41
    %p43 = scmp.eq.s32.totalorder %s17, 0
    %p44 = por %p42, %p43
    %s45 = ssub.s32 %s11, %s18
    %p46 = scmp.eq.s32.totalorder %s45, 0
    %s48 = sadd.s32 %s47, 1
    %s49 = scalar_select %p46, %s47, %s48
    %p52 = pneg %p46
    %p53 = scmp.eq.s32.totalorder %s11, 1
    %p54 = por %p52, %p53
    %p55 = scmp.ne.s32.totalorder %s47, %s50
    %p56 = scmp.eq.s32.totalorder %s11, 0
    %p57 = por %p55, %p56
    %p58 = scmp.ne.s32.totalorder %s47, %s50
    %p59 = scmp.eq.s32.totalorder %s16, 1
    %p60 = por %p58, %p59
    %p61 = scmp.ne.s32.totalorder %s50, %s51
    %p62 = scmp.eq.s32.totalorder %s16, 0
    %p63 = por %p61, %p62
    %p64 = scmp.ne.s32.totalorder %s50, %s51
    %p65 = scmp.eq.s32.totalorder %s17, 1
    %p66 = por %p64, %p65
    %p68 = scmp.ne.s32.totalorder %s51, %s67
    %p69 = scmp.eq.s32.totalorder %s17, 0
    %p70 = por %p68, %p69
    %s71 = ssub.s32 %s11, %s18
    %p72 = scmp.eq.s32.totalorder %s71, 0
    %s74 = sadd.s32 %s73, 1
    %s75 = scalar_select %p72, %s73, %s74
    %p78 = pneg %p72
    %p79 = scmp.eq.s32.totalorder %s11, 1
    %p80 = por %p78, %p79
    %p81 = scmp.ne.s32.totalorder %s73, %s76
    %p82 = scmp.eq.s32.totalorder %s11, 0
    %p83 = por %p81, %p82
    %p84 = scmp.ne.s32.totalorder %s73, %s76
    %p85 = scmp.eq.s32.totalorder %s16, 1
    %p86 = por %p84, %p85
    %p87 = scmp.ne.s32.totalorder %s76, %s77
    %p88 = scmp.eq.s32.totalorder %s16, 0
    %p89 = por %p87, %p88
    %p90 = scmp.ne.s32.totalorder %s76, %s77
    %p91 = scmp.eq.s32.totalorder %s17, 1
    %p92 = por %p90, %p91
    %p94 = scmp.ne.s32.totalorder %s77, %s93
    %p95 = scmp.eq.s32.totalorder %s17, 0
    %p96 = por %p94, %p95
    %s97 = ssub.s32 %s11, %s18
    %p98 = scmp.eq.s32.totalorder %s97, 0
    %s100 = sadd.s32 %s99, 1
    %s101 = scalar_select %p98, %s99, %s100
    %p104 = pneg %p98
    %p105 = scmp.eq.s32.totalorder %s11, 1
    %p106 = por %p104, %p105
    %p107 = scmp.ne.s32.totalorder %s99, %s102
    %p108 = scmp.eq.s32.totalorder %s11, 0
    %p109 = por %p107, %p108
    %p110 = scmp.ne.s32.totalorder %s99, %s102
    %p111 = scmp.eq.s32.totalorder %s16, 1
    %p112 = por %p110, %p111
    %p113 = scmp.ne.s32.totalorder %s102, %s103
    %p114 = scmp.eq.s32.totalorder %s16, 0
    %p115 = por %p113, %p114
    %p116 = scmp.ne.s32.totalorder %s102, %s103
    %p117 = scmp.eq.s32.totalorder %s17, 1
    %p118 = por %p116, %p117
    %p120 = scmp.ne.s32.totalorder %s103, %s119
    %p121 = scmp.eq.s32.totalorder %s17, 0
    %p122 = por %p120, %p121
    %s123 = ssub.s32 %s11, %s18
    %p124 = scmp.eq.s32.totalorder %s123, 0
    %s126 = sadd.s32 %s125, 1
    %s127 = scalar_select %p124, %s125, %s126
    %p130 = pneg %p124
    %p131 = scmp.eq.s32.totalorder %s11, 1
    %p132 = por %p130, %p131
    %p133 = scmp.ne.s32.totalorder %s125, %s128
    %p134 = scmp.eq.s32.totalorder %s11, 0
    %p135 = por %p133, %p134
    %p136 = scmp.ne.s32.totalorder %s125, %s128
    %p137 = scmp.eq.s32.totalorder %s16, 1
    %p138 = por %p136, %p137
    %p139 = scmp.ne.s32.totalorder %s128, %s129
    %p140 = scmp.eq.s32.totalorder %s16, 0
    %p141 = por %p139, %p140
    %p142 = scmp.ne.s32.totalorder %s128, %s129
    %p143 = scmp.eq.s32.totalorder %s17, 1
    %p144 = por %p142, %p143
    %p146 = scmp.ne.s32.totalorder %s129, %s145
    %p147 = scmp.eq.s32.totalorder %s17, 0
    %p148 = por %p146, %p147
    %p149 = scmp.le.s32.totalorder 1, %s11
    %p150 = scmp.lt.s32.totalorder %s11, 3
    %p151 = pnand %p149, %p150
    %p152 = pneg %p151
    // Predicated region
    $region9: #{esim_forward.7} parent=5 // pred_check
      _
    $region10: #{esim_forward.7} parent=5 // pred_check_branch
      %154 = sbr.rel (%p151) target = $region12
    $region11: #{esim_forward.7} parent=5 // pred_region
      %s155 = ssub.s32 %s11, 1
    $region12: #{esim_forward.7} parent=5 // pred_fallthru
      _
    %p156 = scmp.lt.s32.totalorder %s11, 2
    // Predicated region
    $region13: #{esim_forward.7} parent=5 // pred_check
      %p157 = pneg %p156
    $region14: #{esim_forward.7} parent=5 // pred_check_branch
      %159 = sbr.rel (%p157) target = $region16
    $region15: #{esim_forward.7} parent=5 // pred_region
      // Predicated region
      $region17: #{esim_forward.7} parent=15 // pred_check
        %p160 = pneg %p31
      $region18: #{esim_forward.7} parent=15 // pred_check_branch
        %162 = sbr.rel (%p160) target = $region20
      $region19: #{esim_forward.7} parent=15 // pred_region
        %s163 = smul.u32 2, %s11
        %p164 = scmp.lt.s32.totalorder %s163, 3
        %s165 = scalar_select %p164, %s163, 3
        %s166 = smul.addr %s165, 4
        %s167 = scalar_lea.vmem %s0, %s166
        %s168 = smul.u32 2, %s11
      $region20: #{esim_forward.7} parent=15 // pred_fallthru
        _
      // Predicated region
      $region21: #{esim_forward.7} parent=15 // pred_check
        %p169 = pneg %p57
      $region22: #{esim_forward.7} parent=15 // pred_check_branch
        %171 = sbr.rel (%p169) target = $region24
      $region23: #{esim_forward.7} parent=15 // pred_region
        %s172 = smul.u32 2, %s11
        %p173 = scmp.lt.s32.totalorder %s172, 3
        %s174 = scalar_select %p173, %s172, 3
        %s175 = smul.addr %s174, 4
        %s176 = scalar_lea.vmem %s1, %s175
        %s177 = smul.u32 2, %s11
      $region24: #{esim_forward.7} parent=15 // pred_fallthru
        _
      // Predicated region
      $region25: #{esim_forward.7} parent=15 // pred_check
        %p178 = pneg %p83
      $region26: #{esim_forward.7} parent=15 // pred_check_branch
        %180 = sbr.rel (%p178) target = $region28
      $region27: #{esim_forward.7} parent=15 // pred_region
        %s181 = smul.u32 2, %s11
        %p182 = scmp.lt.s32.totalorder %s181, 3
        %s183 = scalar_select %p182, %s181, 3
        %s184 = scalar_lea.vmem %s2, %s183
        %s185 = smul.u32 2, %s11
      $region28: #{esim_forward.7} parent=15 // pred_fallthru
        _
    $region16: #{esim_forward.7} parent=5 // pred_fallthru
      _
    %p186 = scmp.le.s32.totalorder 1, %s11
    %p187 = scmp.lt.s32.totalorder %s11, 3
    %p188 = pnand %p186, %p187
    %p189 = pneg %p188
    // Predicated region
    $region29: #{esim_forward.7} parent=5 // pred_check
      _
    $region30: #{esim_forward.7} parent=5 // pred_check_branch
      %191 = sbr.rel (%p188) target = $region32
    $region31: #{esim_forward.7} parent=5 // pred_region
      %s192 = ssub.s32 %s11, 1
      %s193 = smul.u32 2, %s16
      %p194 = scmp.lt.s32.totalorder %s193, 3
      %s195 = scalar_select %p194, %s193, 3
      %s196 = smul.addr %s195, 4
      %s197 = scalar_lea.vmem %s0, %s196
      %p198 = pneg %p37
      %p199 = pneg %p34
      %s200 = smul.u32 2, %s16
      %p201 = scmp.lt.s32.totalorder %s200, 3
      %s202 = scalar_select %p201, %s200, 3
      %s203 = smul.addr %s202, 4
      %s204 = scalar_lea.vmem %s1, %s203
      %p205 = pneg %p63
      %p206 = pneg %p60
      %s207 = smul.u32 2, %s16
      %p208 = scmp.lt.s32.totalorder %s207, 3
      %s209 = scalar_select %p208, %s207, 3
      %s210 = scalar_lea.vmem %s2, %s209
      %p211 = pneg %p89
      %p212 = pneg %p86
      %p213 = pneg %p115
      %p214 = pneg %p112
      %s215 = smul.u32 2, %s16
      %p216 = scmp.lt.s32.totalorder %s215, 3
      %s217 = scalar_select %p216, %s215, 3
      %s218 = scalar_lea.vmem %s3, %s217
      %p219 = pneg %p141
      %p220 = pneg %p138
      %s221 = smul.u32 2, %s16
      %p222 = scmp.lt.s32.totalorder %s221, 3
      %s223 = scalar_select %p222, %s221, 3
      %s224 = scalar_lea.vmem %s4, %s223
      %s225 = smul.u32 2, %s16
      %p226 = scmp.lt.s32.totalorder %s225, 3
      %s227 = scalar_select %p226, %s225, 3
      %s228 = smul.addr %s227, 4
      %s229 = scalar_lea.vmem %s0, %s228
      %s230 = smul.u32 2, %s16
      %s231 = smul.u32 2, %s16
      %p232 = scmp.lt.s32.totalorder %s231, 3
      %s233 = scalar_select %p232, %s231, 3
      %s234 = smul.addr %s233, 4
      %s235 = scalar_lea.vmem %s1, %s234
      %s236 = smul.u32 2, %s16
      %s237 = smul.u32 2, %s16
      %p238 = scmp.lt.s32.totalorder %s237, 3
      %s239 = scalar_select %p238, %s237, 3
      %s240 = scalar_lea.vmem %s2, %s239
      %s241 = smul.u32 2, %s16
      %s242 = smul.u32 2, %s16
      %p243 = scmp.lt.s32.totalorder %s242, 3
      %s244 = scalar_select %p243, %s242, 3
      %s245 = scalar_lea.vmem %s3, %s244
      %s246 = smul.u32 2, %s16
      %s247 = smul.u32 2, %s16
      %p248 = scmp.lt.s32.totalorder %s247, 3
      %s249 = scalar_select %p248, %s247, 3
      %s250 = scalar_lea.vmem %s4, %s249
      %s251 = smul.u32 2, %s16
      %v253 = vld [vmem:[%s229] sm:$0xf]
      %v254 = vld [vmem:[%s229 + $0x4] sm:$0xf]
      %v255 = vld [vmem:[%s235] sm:$0xf]
      %v256 = vld [vmem:[%s235 + $0x4] sm:$0xf]
      %v257 = vld [vmem:[%s240] sm:$0x1]
      %v258 = vld [vmem:[%s240 + $0x1] sm:$0x1]
      %v261 = vlaneseq
      %v262 = vshrl.u32 %v261, 7
      %v263 = vsub.s32 0, %v262
      %v264 = vrot.slane %v257, %v263
      %v265 = vlaneseq
      %v266 = vshrl.u32 %v265, 7
      %v267 = vsub.s32 0, %v266
      %v268 = vrot.slane %v258, %v267
      %vm271 = vcmask 261120
      %v273 = vsel %vm271, %v253, 0
      %v276 = vsel %vm271, %v255, 0
      %278 = vmatprep.subr.bf16.mxu0 0
      %279 = vmatpush1.bf16.xpose.msra.mxu0 0
      %280 = vmatprep.subr.bf16.mxu0 0
      %281 = vmatpush1.bf16.xpose.msra.mxu0 0
      %282 = vmatprep.subr.bf16.mxu0 0
      %283 = vmatpush1.bf16.xpose.msra.mxu0 0
      %284 = vmatprep.subr.bf16.mxu0 0
      %285 = vmatpush1.bf16.xpose.msra.mxu0 0
      %286 = vmatprep.subr.bf16.mxu0 0
      %287 = vmatpush1.bf16.xpose.msra.mxu0 0
      %288 = vmatprep.subr.bf16.mxu0 0
      %289 = vmatpush1.bf16.xpose.msra.mxu0 0
      %290 = vmatprep.subr.bf16.mxu0 0
      %291 = vmatpush1.bf16.xpose.msra.mxu0 0
      %292 = vmatprep.subr.bf16.mxu0 0
      %293 = vmatpush1.bf16.xpose.msra.mxu0 %v276
      %294 = vmatprep.subr.bf16.mxu0 0
      %295 = vmatpush2.bf16.xpose.msra.mxu0 0
      %296 = vmatprep.subr.bf16.mxu0 0
      %297 = vmatpush2.bf16.xpose.msra.mxu0 0
      %298 = vmatprep.subr.bf16.mxu0 0
      %299 = vmatpush2.bf16.xpose.msra.mxu0 0
      %300 = vmatprep.subr.bf16.mxu0 0
      %301 = vmatpush2.bf16.xpose.msra.mxu0 0
      %302 = vmatprep.subr.bf16.mxu0 0
      %303 = vmatpush2.bf16.xpose.msra.mxu0 0
      %304 = vmatprep.subr.bf16.mxu0 0
      %305 = vmatpush2.bf16.xpose.msra.mxu0 0
      %306 = vmatprep.subr.bf16.mxu0 0
      %307 = vmatpush2.bf16.xpose.msra.mxu0 0
      %308 = vmatprep.subr.bf16.mxu0 0
      %309 = vmatpush2.bf16.xpose.msra.mxu0 0
      %310 = vmatprep.mubr.bf16.mxu0 0
      %311 = vmatmul.mubr.bf16.gmra.mxu0 %v273
      %v312 = vpop.f32.mrf.mxu0
      %v313 = vadd.f32 %v264, %v312
      %v314 = vpop.f32.mrf.mxu0
      %v315 = vpop.f32.mrf.mxu0
      %v316 = vpop.f32.mrf.mxu0
      %317 = vdwg.mxu0
      %v319 = vsel %vm271, %v254, 0
      %v322 = vsel %vm271, %v256, 0
      %324 = vmatprep.subr.bf16.mxu0 0
      %325 = vmatpush1.bf16.xpose.msra.mxu0 0
      %326 = vmatprep.subr.bf16.mxu0 0
      %327 = vmatpush1.bf16.xpose.msra.mxu0 0
      %328 = vmatprep.subr.bf16.mxu0 0
      %329 = vmatpush1.bf16.xpose.msra.mxu0 0
      %330 = vmatprep.subr.bf16.mxu0 0
      %331 = vmatpush1.bf16.xpose.msra.mxu0 0
      %332 = vmatprep.subr.bf16.mxu0 0
      %333 = vmatpush1.bf16.xpose.msra.mxu0 0
      %334 = vmatprep.subr.bf16.mxu0 0
      %335 = vmatpush1.bf16.xpose.msra.mxu0 0
      %336 = vmatprep.subr.bf16.mxu0 0
      %337 = vmatpush1.bf16.xpose.msra.mxu0 0
      %338 = vmatprep.subr.bf16.mxu0 0
      %339 = vmatpush1.bf16.xpose.msra.mxu0 %v322
      %340 = vmatprep.subr.bf16.mxu0 0
      %341 = vmatpush2.bf16.xpose.msra.mxu0 0
      %342 = vmatprep.subr.bf16.mxu0 0
      %343 = vmatpush2.bf16.xpose.msra.mxu0 0
      %344 = vmatprep.subr.bf16.mxu0 0
      %345 = vmatpush2.bf16.xpose.msra.mxu0 0
      %346 = vmatprep.subr.bf16.mxu0 0
      %347 = vmatpush2.bf16.xpose.msra.mxu0 0
      %348 = vmatprep.subr.bf16.mxu0 0
      %349 = vmatpush2.bf16.xpose.msra.mxu0 0
      %350 = vmatprep.subr.bf16.mxu0 0
      %351 = vmatpush2.bf16.xpose.msra.mxu0 0
      %352 = vmatprep.subr.bf16.mxu0 0
      %353 = vmatpush2.bf16.xpose.msra.mxu0 0
      %354 = vmatprep.subr.bf16.mxu0 0
      %355 = vmatpush2.bf16.xpose.msra.mxu0 0
      %356 = vmatprep.mubr.bf16.mxu0 0
      %357 = vmatmul.mubr.bf16.gmra.mxu0 %v319
      %v358 = vpop.f32.mrf.mxu0
      %v359 = vadd.f32 %v268, %v358
      %v360 = vpop.f32.mrf.mxu0
      %v361 = vpop.f32.mrf.mxu0
      %v362 = vpop.f32.mrf.mxu0
      %363 = vdwg.mxu0
      %vm364 = vcmask 64512
      %v365 = vsel %vm364, %v313, -inf
      %366 = vmax.xlane.f32.xlu0 %v365
      %v367 = vpop.xlane.xlu0 %366
      %v368 = vsel %vm364, %v359, -inf
      %369 = vmax.xlane.f32.xlu0 %v368
      %v370 = vpop.xlane.xlu0 %369
      %v371 = vsub.f32 %v313, %v367
      %v372 = vsub.f32 %v359, %v370
      %v373 = vmul.f32 %v371, 1.442695
      %v374 = vpow.pop %v373
      %v375 = vmul.f32 %v372, 1.442695
      %v376 = vpow.pop %v375
      %v377 = vsel %vm364, %v374, 0.0
      %378 = vadd.xlane.f32.xlu0 %v377
      %v379 = vpop.xlane.xlu0 %378
      %v380 = vsel %vm364, %v376, 0.0
      %381 = vadd.xlane.f32.xlu0 %v380
      %v382 = vpop.xlane.xlu0 %381
      %v383 = vrcp.pop %v379
      %v384 = vmul.f32 %v374, %v383
      %v385 = vrcp.pop %v382
      %v386 = vmul.f32 %v376, %v385
      %v387 = vsel %vm364, %v384, 0.0
      %v388 = vrot.slane %v387, 4
      %v389 = vadd.f32 %v387, %v388
      %v390 = vrot.slane %v389, 2
      %v391 = vadd.f32 %v389, %v390
      %v392 = vrot.slane %v391, 1
      %v393 = vadd.f32 %v391, %v392
      %v394 = vsel %vm364, %v386, 0.0
      %v395 = vrot.slane %v394, 4
      %v396 = vadd.f32 %v394, %v395
      %v397 = vrot.slane %v396, 2
      %v398 = vadd.f32 %v396, %v397
      %v399 = vrot.slane %v398, 1
      %v400 = vadd.f32 %v398, %v399
      %v401 = vrcp.pop 8.0
      %v402 = vmul.f32 %v393, %v401
      %v403 = vmul.f32 %v400, %v401
      %vm404 = vcmask 57344
      %405 = vst.msk [vmem:[%s245] sm:$0x1] %vm404, %v402
      %406 = vst.msk [vmem:[%s245 + $0x1] sm:$0x1] %vm404, %v403
      %v407 = vsel %vm364, %v384, -inf
      %v408 = vrot.slane %v407, 4
      %v409 = vmax.f32 %v407, %v408
      %v410 = vrot.slane %v409, 2
      %v411 = vmax.f32 %v409, %v410
      %v412 = vrot.slane %v411, 1
      %v413 = vmax.f32 %v411, %v412
      %v414 = vsel %vm364, %v386, -inf
      %v415 = vrot.slane %v414, 4
      %v416 = vmax.f32 %v414, %v415
      %v417 = vrot.slane %v416, 2
      %v418 = vmax.f32 %v416, %v417
      %v419 = vrot.slane %v418, 1
      %v420 = vmax.f32 %v418, %v419
      %421 = vst.msk [vmem:[%s250] sm:$0x1] %vm404, %v413
      %422 = vst.msk [vmem:[%s250 + $0x1] sm:$0x1] %vm404, %v420
      %s423 = smul.u32 2, %s16
      %p424 = scmp.lt.s32.totalorder %s423, 3
      %s425 = scalar_select %p424, %s423, 3
      %s426 = scalar_lea.vmem %s3, %s425
      %s427 = smul.u32 2, %s16
      %p428 = scmp.lt.s32.totalorder %s427, 3
      %s429 = scalar_select %p428, %s427, 3
      %s430 = scalar_lea.vmem %s4, %s429
      // Predicated region
      $region33: #{esim_forward.7} parent=31 // pred_check
        %p431 = pneg %p112
      $region34: #{esim_forward.7} parent=31 // pred_check_branch
        %433 = sbr.rel (%p431) target = $region36
      $region35: #{esim_forward.7} parent=31 // pred_region
        %s434 = smul.u32 2, %s16
      $region36: #{esim_forward.7} parent=31 // pred_fallthru
        _
      // Predicated region
      $region37: #{esim_forward.7} parent=31 // pred_check
        %p435 = pneg %p138
      $region38: #{esim_forward.7} parent=31 // pred_check_branch
        %437 = sbr.rel (%p435) target = $region40
      $region39: #{esim_forward.7} parent=31 // pred_region
        %s438 = smul.u32 2, %s16
      $region40: #{esim_forward.7} parent=31 // pred_fallthru
        _
    $region32: #{esim_forward.7} parent=5 // pred_fallthru
      _
    %p439 = scmp.le.s32.totalorder 2, %s11
    // Predicated region
    $region41: #{esim_forward.7} parent=5 // pred_check
      %p440 = pneg %p439
    $region42: #{esim_forward.7} parent=5 // pred_check_branch
      %442 = sbr.rel (%p440) target = $region44
    $region43: #{esim_forward.7} parent=5 // pred_region
      %s443 = ssub.s32 %s11, 2
      // Predicated region
      $region45: #{esim_forward.7} parent=43 // pred_check
        %p444 = pneg %p118
      $region46: #{esim_forward.7} parent=43 // pred_check_branch
        %446 = sbr.rel (%p444) target = $region48
      $region47: #{esim_forward.7} parent=43 // pred_region
        %s447 = smul.u32 2, %s17
        %p448 = scmp.lt.s32.totalorder %s447, 3
        %s449 = scalar_select %p448, %s447, 3
        %s450 = scalar_lea.vmem %s3, %s449
      $region48: #{esim_forward.7} parent=43 // pred_fallthru
        _
      // Predicated region
      $region49: #{esim_forward.7} parent=43 // pred_check
        %p451 = pneg %p144
      $region50: #{esim_forward.7} parent=43 // pred_check_branch
        %453 = sbr.rel (%p451) target = $region52
      $region51: #{esim_forward.7} parent=43 // pred_region
        %s454 = smul.u32 2, %s17
        %p455 = scmp.lt.s32.totalorder %s454, 3
        %s456 = scalar_select %p455, %s454, 3
        %s457 = scalar_lea.vmem %s4, %s456
      $region52: #{esim_forward.7} parent=43 // pred_fallthru
        _
    $region44: #{esim_forward.7} parent=5 // pred_fallthru
      _
  $region6: #{esim_forward.7} parent=0 // loop_footer
    %s15 = sadd.s32 1, %s11
  $region7: #{esim_forward.7} parent=0 // loop_footer_branch
    %10 = sbr.rel target = $region3
  $region8: #{esim_forward.7} parent=0 // loop_exit
    _

// kernel: esim_forward.5
$region0: #{esim_forward.5}
  #allocation0 [shape = 'u32[]', space=smem, size = 0x4, offset = 0x4, fixed_abs, tag = 'smem constant byte address 0x4 - core index']
  #allocation1 [shape = 'u32[144,128]{1,0:T(1,128)}', space=vmem, size = 0x12000, scoped, tag = 'internal scratch']
  %s0 = inlined_call_operand.vmem [shape: bf16[2,8,32], index: 0, kind: input, shape index: {}]
  %s1 = inlined_call_operand.vmem [shape: bf16[2,8,32], index: 1, kind: input, shape index: {}]
  %s2 = inlined_call_operand.vmem [shape: f32[2,1,8], index: 2, kind: input, shape index: {}]
  %s3 = inlined_call_operand.vmem [shape: f32[2,1,8], index: 3, kind: input, shape index: {}]
  %s4 = inlined_call_operand.vmem [shape: bf16[2,8,32], index: 4, kind: output, shape index: {0}]
  %s5 = inlined_call_operand.vmem [shape: bf16[2,8,32], index: 5, kind: output, shape index: {1}]
  %6 = xla_tuple %s4, %s5
  %s7 = sld [smem:[#allocation0]]
  $region57: #{esim_forward.5} parent=0
    _
  %s9 = ssub.s32 1, %s7
  %s10 = scalar_select 0, %s9, %s7
  loop: start=0, step=1, limit=4
  $region2: #{esim_forward.5} parent=0 // loop_pre_header
    _
  $region3: #{esim_forward.5} parent=0 // loop_header
    %s12 = sphi 0, %s16
    %p13 = scmp.ge.s32.totalorder %s12, 4
    %s22 = sphi 0, %s24
    %s25 = sphi 0, %s22
    %s26 = sphi 0, %s25
    %s42 = sphi 0, %s26
    %s48 = sphi 0, %s50
    %s51 = sphi 0, %s48
    %s52 = sphi 0, %s51
    %s68 = sphi 0, %s52
    %s74 = sphi 0, %s76
    %s77 = sphi 0, %s74
    %s78 = sphi 0, %s77
    %s94 = sphi 0, %s78
    %s100 = sphi 0, %s102
    %s103 = sphi 0, %s100
    %s104 = sphi 0, %s103
    %s120 = sphi 0, %s104
    %s126 = sphi 0, %s128
    %s129 = sphi 0, %s126
    %s130 = sphi 0, %s129
    %s146 = sphi 0, %s130
    %s152 = sphi 0, %s154
    %s155 = sphi 0, %s152
    %s156 = sphi 0, %s155
    %s172 = sphi 0, %s156
  $region4: #{esim_forward.5} parent=0 // loop_header_branch
    %15 = sbr.rel (%p13) target = $region8
  $region5: #{esim_forward.5} parent=0 // loop_body
    %s17 = ssub.s32 %s12, 1
    %s18 = ssub.s32 %s12, 2
    %s19 = sadd.s32 %s12, 1
    %s20 = ssub.s32 %s12, %s19
    %p21 = scmp.eq.s32.totalorder %s20, 0
    %s23 = sadd.s32 %s22, 1
    %s24 = scalar_select %p21, %s22, %s23
    %p27 = pneg %p21
    %p28 = scmp.eq.s32.totalorder %s12, 1
    %p29 = por %p27, %p28
    %p30 = scmp.ne.s32.totalorder %s22, %s25
    %p31 = scmp.eq.s32.totalorder %s12, 0
    %p32 = por %p30, %p31
    %p33 = scmp.ne.s32.totalorder %s22, %s25
    %p34 = scmp.eq.s32.totalorder %s17, 1
    %p35 = por %p33, %p34
    %p36 = scmp.ne.s32.totalorder %s25, %s26
    %p37 = scmp.eq.s32.totalorder %s17, 0
    %p38 = por %p36, %p37
    %p39 = scmp.ne.s32.totalorder %s25, %s26
    %p40 = scmp.eq.s32.totalorder %s18, 1
    %p41 = por %p39, %p40
    %p43 = scmp.ne.s32.totalorder %s26, %s42
    %p44 = scmp.eq.s32.totalorder %s18, 0
    %p45 = por %p43, %p44
    %s46 = ssub.s32 %s12, %s19
    %p47 = scmp.eq.s32.totalorder %s46, 0
    %s49 = sadd.s32 %s48, 1
    %s50 = scalar_select %p47, %s48, %s49
    %p53 = pneg %p47
    %p54 = scmp.eq.s32.totalorder %s12, 1
    %p55 = por %p53, %p54
    %p56 = scmp.ne.s32.totalorder %s48, %s51
    %p57 = scmp.eq.s32.totalorder %s12, 0
    %p58 = por %p56, %p57
    %p59 = scmp.ne.s32.totalorder %s48, %s51
    %p60 = scmp.eq.s32.totalorder %s17, 1
    %p61 = por %p59, %p60
    %p62 = scmp.ne.s32.totalorder %s51, %s52
    %p63 = scmp.eq.s32.totalorder %s17, 0
    %p64 = por %p62, %p63
    %p65 = scmp.ne.s32.totalorder %s51, %s52
    %p66 = scmp.eq.s32.totalorder %s18, 1
    %p67 = por %p65, %p66
    %p69 = scmp.ne.s32.totalorder %s52, %s68
    %p70 = scmp.eq.s32.totalorder %s18, 0
    %p71 = por %p69, %p70
    %s72 = ssub.s32 %s12, %s19
    %p73 = scmp.eq.s32.totalorder %s72, 0
    %s75 = sadd.s32 %s74, 1
    %s76 = scalar_select %p73, %s74, %s75
    %p79 = pneg %p73
    %p80 = scmp.eq.s32.totalorder %s12, 1
    %p81 = por %p79, %p80
    %p82 = scmp.ne.s32.totalorder %s74, %s77
    %p83 = scmp.eq.s32.totalorder %s12, 0
    %p84 = por %p82, %p83
    %p85 = scmp.ne.s32.totalorder %s74, %s77
    %p86 = scmp.eq.s32.totalorder %s17, 1
    %p87 = por %p85, %p86
    %p88 = scmp.ne.s32.totalorder %s77, %s78
    %p89 = scmp.eq.s32.totalorder %s17, 0
    %p90 = por %p88, %p89
    %p91 = scmp.ne.s32.totalorder %s77, %s78
    %p92 = scmp.eq.s32.totalorder %s18, 1
    %p93 = por %p91, %p92
    %p95 = scmp.ne.s32.totalorder %s78, %s94
    %p96 = scmp.eq.s32.totalorder %s18, 0
    %p97 = por %p95, %p96
    %s98 = ssub.s32 %s12, %s19
    %p99 = scmp.eq.s32.totalorder %s98, 0
    %s101 = sadd.s32 %s100, 1
    %s102 = scalar_select %p99, %s100, %s101
    %p105 = pneg %p99
    %p106 = scmp.eq.s32.totalorder %s12, 1
    %p107 = por %p105, %p106
    %p108 = scmp.ne.s32.totalorder %s100, %s103
    %p109 = scmp.eq.s32.totalorder %s12, 0
    %p110 = por %p108, %p109
    %p111 = scmp.ne.s32.totalorder %s100, %s103
    %p112 = scmp.eq.s32.totalorder %s17, 1
    %p113 = por %p111, %p112
    %p114 = scmp.ne.s32.totalorder %s103, %s104
    %p115 = scmp.eq.s32.totalorder %s17, 0
    %p116 = por %p114, %p115
    %p117 = scmp.ne.s32.totalorder %s103, %s104
    %p118 = scmp.eq.s32.totalorder %s18, 1
    %p119 = por %p117, %p118
    %p121 = scmp.ne.s32.totalorder %s104, %s120
    %p122 = scmp.eq.s32.totalorder %s18, 0
    %p123 = por %p121, %p122
    %s124 = ssub.s32 %s12, %s19
    %p125 = scmp.eq.s32.totalorder %s124, 0
    %s127 = sadd.s32 %s126, 1
    %s128 = scalar_select %p125, %s126, %s127
    %p131 = pneg %p125
    %p132 = scmp.eq.s32.totalorder %s12, 1
    %p133 = por %p131, %p132
    %p134 = scmp.ne.s32.totalorder %s126, %s129
    %p135 = scmp.eq.s32.totalorder %s12, 0
    %p136 = por %p134, %p135
    %p137 = scmp.ne.s32.totalorder %s126, %s129
    %p138 = scmp.eq.s32.totalorder %s17, 1
    %p139 = por %p137, %p138
    %p140 = scmp.ne.s32.totalorder %s129, %s130
    %p141 = scmp.eq.s32.totalorder %s17, 0
    %p142 = por %p140, %p141
    %p143 = scmp.ne.s32.totalorder %s129, %s130
    %p144 = scmp.eq.s32.totalorder %s18, 1
    %p145 = por %p143, %p144
    %p147 = scmp.ne.s32.totalorder %s130, %s146
    %p148 = scmp.eq.s32.totalorder %s18, 0
    %p149 = por %p147, %p148
    %s150 = ssub.s32 %s12, %s19
    %p151 = scmp.eq.s32.totalorder %s150, 0
    %s153 = sadd.s32 %s152, 1
    %s154 = scalar_select %p151, %s152, %s153
    %p157 = pneg %p151
    %p158 = scmp.eq.s32.totalorder %s12, 1
    %p159 = por %p157, %p158
    %p160 = scmp.ne.s32.totalorder %s152, %s155
    %p161 = scmp.eq.s32.totalorder %s12, 0
    %p162 = por %p160, %p161
    %p163 = scmp.ne.s32.totalorder %s152, %s155
    %p164 = scmp.eq.s32.totalorder %s17, 1
    %p165 = por %p163, %p164
    %p166 = scmp.ne.s32.totalorder %s155, %s156
    %p167 = scmp.eq.s32.totalorder %s17, 0
    %p168 = por %p166, %p167
    %p169 = scmp.ne.s32.totalorder %s155, %s156
    %p170 = scmp.eq.s32.totalorder %s18, 1
    %p171 = por %p169, %p170
    %p173 = scmp.ne.s32.totalorder %s156, %s172
    %p174 = scmp.eq.s32.totalorder %s18, 0
    %p175 = por %p173, %p174
    %p176 = scmp.le.s32.totalorder 1, %s12
    %p177 = scmp.lt.s32.totalorder %s12, 3
    %p178 = pnand %p176, %p177
    %p179 = pneg %p178
    // Predicated region
    $region9: #{esim_forward.5} parent=5 // pred_check
      _
    $region10: #{esim_forward.5} parent=5 // pred_check_branch
      %181 = sbr.rel (%p178) target = $region12
    $region11: #{esim_forward.5} parent=5 // pred_region
      %s182 = ssub.s32 %s12, 1
    $region12: #{esim_forward.5} parent=5 // pred_fallthru
      _
    %p183 = scmp.lt.s32.totalorder %s12, 2
    // Predicated region
    $region13: #{esim_forward.5} parent=5 // pred_check
      %p184 = pneg %p183
    $region14: #{esim_forward.5} parent=5 // pred_check_branch
      %186 = sbr.rel (%p184) target = $region16
    $region15: #{esim_forward.5} parent=5 // pred_region
      // Predicated region
      $region17: #{esim_forward.5} parent=15 // pred_check
        %p187 = pneg %p32
      $region18: #{esim_forward.5} parent=15 // pred_check_branch
        %189 = sbr.rel (%p187) target = $region20
      $region19: #{esim_forward.5} parent=15 // pred_region
        %p190 = scmp.lt.s32.totalorder %s12, 1
        %s191 = scalar_select %p190, %s12, 1
        %s192 = smul.addr %s191, 4
        %s193 = scalar_lea.vmem %s0, %s192
      $region20: #{esim_forward.5} parent=15 // pred_fallthru
        _
      // Predicated region
      $region21: #{esim_forward.5} parent=15 // pred_check
        %p194 = pneg %p58
      $region22: #{esim_forward.5} parent=15 // pred_check_branch
        %196 = sbr.rel (%p194) target = $region24
      $region23: #{esim_forward.5} parent=15 // pred_region
        %p197 = scmp.lt.s32.totalorder %s12, 1
        %s198 = scalar_select %p197, %s12, 1
        %s199 = smul.addr %s198, 4
        %s200 = scalar_lea.vmem %s1, %s199
      $region24: #{esim_forward.5} parent=15 // pred_fallthru
        _
      // Predicated region
      $region25: #{esim_forward.5} parent=15 // pred_check
        %p201 = pneg %p84
      $region26: #{esim_forward.5} parent=15 // pred_check_branch
        %203 = sbr.rel (%p201) target = $region28
      $region27: #{esim_forward.5} parent=15 // pred_region
        %p204 = scmp.lt.s32.totalorder %s12, 1
        %s205 = scalar_select %p204, %s12, 1
        %s206 = scalar_lea.vmem %s2, %s205
      $region28: #{esim_forward.5} parent=15 // pred_fallthru
        _
      // Predicated region
      $region29: #{esim_forward.5} parent=15 // pred_check
        %p207 = pneg %p110
      $region30: #{esim_forward.5} parent=15 // pred_check_branch
        %209 = sbr.rel (%p207) target = $region32
      $region31: #{esim_forward.5} parent=15 // pred_region
        %p210 = scmp.lt.s32.totalorder %s12, 1
        %s211 = scalar_select %p210, %s12, 1
        %s212 = scalar_lea.vmem %s3, %s211
      $region32: #{esim_forward.5} parent=15 // pred_fallthru
        _
    $region16: #{esim_forward.5} parent=5 // pred_fallthru
      _
    %p213 = scmp.le.s32.totalorder 1, %s12
    %p214 = scmp.lt.s32.totalorder %s12, 3
    %p215 = pnand %p213, %p214
    %p216 = pneg %p215
    // Predicated region
    $region33: #{esim_forward.5} parent=5 // pred_check
      _
    $region34: #{esim_forward.5} parent=5 // pred_check_branch
      %218 = sbr.rel (%p215) target = $region36
    $region35: #{esim_forward.5} parent=5 // pred_region
      %s219 = ssub.s32 %s12, 1
      %p220 = scmp.lt.s32.totalorder %s17, 1
      %s221 = scalar_select %p220, %s17, 1
      %s222 = smul.addr %s221, 4
      %s223 = scalar_lea.vmem %s0, %s222
      %p224 = pneg %p38
      %p225 = pneg %p35
      %p226 = scmp.lt.s32.totalorder %s17, 1
      %s227 = scalar_select %p226, %s17, 1
      %s228 = smul.addr %s227, 4
      %s229 = scalar_lea.vmem %s1, %s228
      %p230 = pneg %p64
      %p231 = pneg %p61
      %p232 = scmp.lt.s32.totalorder %s17, 1
      %s233 = scalar_select %p232, %s17, 1
      %s234 = scalar_lea.vmem %s2, %s233
      %p235 = pneg %p90
      %p236 = pneg %p87
      %p237 = scmp.lt.s32.totalorder %s17, 1
      %s238 = scalar_select %p237, %s17, 1
      %s239 = scalar_lea.vmem %s3, %s238
      %p240 = pneg %p116
      %p241 = pneg %p113
      %p242 = pneg %p142
      %p243 = pneg %p139
      %p244 = scmp.lt.s32.totalorder %s17, 1
      %s245 = scalar_select %p244, %s17, 1
      %s246 = smul.addr %s245, 4
      %s247 = scalar_lea.vmem %s4, %s246
      %p248 = pneg %p168
      %p249 = pneg %p165
      %p250 = scmp.lt.s32.totalorder %s17, 1
      %s251 = scalar_select %p250, %s17, 1
      %s252 = smul.addr %s251, 4
      %s253 = scalar_lea.vmem %s5, %s252
      %p254 = scmp.lt.s32.totalorder %s17, 1
      %s255 = scalar_select %p254, %s17, 1
      %s256 = smul.addr %s255, 4
      %s257 = scalar_lea.vmem %s0, %s256
      %p258 = scmp.lt.s32.totalorder %s17, 1
      %s259 = scalar_select %p258, %s17, 1
      %s260 = smul.addr %s259, 4
      %s261 = scalar_lea.vmem %s1, %s260
      %p262 = scmp.lt.s32.totalorder %s17, 1
      %s263 = scalar_select %p262, %s17, 1
      %s264 = scalar_lea.vmem %s2, %s263
      %p265 = scmp.lt.s32.totalorder %s17, 1
      %s266 = scalar_select %p265, %s17, 1
      %s267 = scalar_lea.vmem %s3, %s266
      %p268 = scmp.lt.s32.totalorder %s17, 1
      %s269 = scalar_select %p268, %s17, 1
      %s270 = smul.addr %s269, 4
      %s271 = scalar_lea.vmem %s4, %s270
      %p272 = scmp.lt.s32.totalorder %s17, 1
      %s273 = scalar_select %p272, %s17, 1
      %s274 = smul.addr %s273, 4
      %s275 = scalar_lea.vmem %s5, %s274
      %v277 = vld [vmem:[%s257] sm:$0xf]
      %v278 = vld [vmem:[%s261] sm:$0xf]
      %v279 = vld [vmem:[%s264] sm:$0x1]
      %v280 = vld [vmem:[%s267] sm:$0x1]
      %v282 = vlaneseq
      %v283 = vshrl.u32 %v282, 7
      %v284 = vsub.s32 0, %v283
      %v285 = vrot.slane %v280, %v284
      %vm287 = vcmask 261120
      %v289 = vsel %vm287, %v277, 0
      %v292 = vsel %vm287, %v278, 0
      %294 = vmatprep.subr.bf16.mxu0 0
      %295 = vmatpush1.bf16.xpose.msra.mxu0 0
      %296 = vmatprep.subr.bf16.mxu0 0
      %297 = vmatpush1.bf16.xpose.msra.mxu0 0
      %298 = vmatprep.subr.bf16.mxu0 0
      %299 = vmatpush1.bf16.xpose.msra.mxu0 0
      %300 = vmatprep.subr.bf16.mxu0 0
      %301 = vmatpush1.bf16.xpose.msra.mxu0 0
      %302 = vmatprep.subr.bf16.mxu0 0
      %303 = vmatpush1.bf16.xpose.msra.mxu0 0
      %304 = vmatprep.subr.bf16.mxu0 0
      %305 = vmatpush1.bf16.xpose.msra.mxu0 0
      %306 = vmatprep.subr.bf16.mxu0 0
      %307 = vmatpush1.bf16.xpose.msra.mxu0 0
      %308 = vmatprep.subr.bf16.mxu0 0
      %309 = vmatpush1.bf16.xpose.msra.mxu0 %v292
      %310 = vmatprep.subr.bf16.mxu0 0
      %311 = vmatpush2.bf16.xpose.msra.mxu0 0
      %312 = vmatprep.subr.bf16.mxu0 0
      %313 = vmatpush2.bf16.xpose.msra.mxu0 0
      %314 = vmatprep.subr.bf16.mxu0 0
      %315 = vmatpush2.bf16.xpose.msra.mxu0 0
      %316 = vmatprep.subr.bf16.mxu0 0
      %317 = vmatpush2.bf16.xpose.msra.mxu0 0
      %318 = vmatprep.subr.bf16.mxu0 0
      %319 = vmatpush2.bf16.xpose.msra.mxu0 0
      %320 = vmatprep.subr.bf16.mxu0 0
      %321 = vmatpush2.bf16.xpose.msra.mxu0 0
      %322 = vmatprep.subr.bf16.mxu0 0
      %323 = vmatpush2.bf16.xpose.msra.mxu0 0
      %324 = vmatprep.subr.bf16.mxu0 0
      %325 = vmatpush2.bf16.xpose.msra.mxu0 0
      %326 = vmatprep.mubr.bf16.mxu0 0
      %327 = vmatmul.mubr.bf16.gmra.mxu0 %v289
      %v328 = vpop.f32.mrf.mxu0
      %v329 = vadd.f32 %v285, %v328
      %v330 = vpop.f32.mrf.mxu0
      %v331 = vpop.f32.mrf.mxu0
      %v332 = vpop.f32.mrf.mxu0
      %333 = vdwg.mxu0
      %vm334 = vcmask 64512
      %v335 = vsel %vm334, %v329, -inf
      %336 = vmax.xlane.f32.xlu0 %v335
      %v337 = vpop.xlane.xlu0 %336
      %v338 = vsub.f32 %v329, %v337
      %v339 = vmul.f32 %v338, 1.442695
      %v340 = vpow.pop %v339
      %v341 = vsel %vm334, %v340, 0.0
      %342 = vadd.xlane.f32.xlu0 %v341
      %v343 = vpop.xlane.xlu0 %342
      %v344 = vrcp.pop %v343
      %v345 = vmul.f32 %v340, %v344
      %v346 = vpack.c.bf16 %v345, %v345
      %v348 = vsel %vm334, %v346, 0
      %vm350 = vcmask 1043456
      %v351 = vsel %vm350, %v278, 0
      %353 = vmatprep.subr.bf16.mxu0 0
      %354 = vmatpush1.bf16.msra.mxu0 0
      %355 = vmatprep.subr.bf16.mxu0 0
      %356 = vmatpush1.bf16.msra.mxu0 0
      %357 = vmatprep.subr.bf16.mxu0 0
      %358 = vmatpush1.bf16.msra.mxu0 0
      %359 = vmatprep.subr.bf16.mxu0 0
      %360 = vmatpush1.bf16.msra.mxu0 0
      %361 = vmatprep.subr.bf16.mxu0 0
      %362 = vmatpush1.bf16.msra.mxu0 0
      %363 = vmatprep.subr.bf16.mxu0 0
      %364 = vmatpush1.bf16.msra.mxu0 0
      %365 = vmatprep.subr.bf16.mxu0 0
      %366 = vmatpush1.bf16.msra.mxu0 0
      %367 = vmatprep.subr.bf16.mxu0 0
      %368 = vmatpush1.bf16.msra.mxu0 %v351
      %369 = vmatprep.subr.bf16.mxu0 0
      %370 = vmatpush2.bf16.msra.mxu0 0
      %371 = vmatprep.subr.bf16.mxu0 0
      %372 = vmatpush2.bf16.msra.mxu0 0
      %373 = vmatprep.subr.bf16.mxu0 0
      %374 = vmatpush2.bf16.msra.mxu0 0
      %375 = vmatprep.subr.bf16.mxu0 0
      %376 = vmatpush2.bf16.msra.mxu0 0
      %377 = vmatprep.subr.bf16.mxu0 0
      %378 = vmatpush2.bf16.msra.mxu0 0
      %379 = vmatprep.subr.bf16.mxu0 0
      %380 = vmatpush2.bf16.msra.mxu0 0
      %381 = vmatprep.subr.bf16.mxu0 0
      %382 = vmatpush2.bf16.msra.mxu0 0
      %383 = vmatprep.subr.bf16.mxu0 0
      %384 = vmatpush2.bf16.msra.mxu0 0
      %385 = vmatprep.mubr.bf16.mxu0 0
      %386 = vmatmul.mubr.bf16.gmra.mxu0 %v348
      %v387 = vpop.f32.mrf.mxu0
      %v388 = vadd.f32 0.0, %v387
      %v389 = vpop.f32.mrf.mxu0
      %v390 = vpop.f32.mrf.mxu0
      %v391 = vpop.f32.mrf.mxu0
      %392 = vdwg.mxu0
      %v393 = vpack.c.bf16 %v388, %v388
      %vm394 = vcmask 257024
      %395 = vst.msk [vmem:[%s271] sm:$0xf] %vm394, %v393
      %v397 = vlaneseq
      %v398 = vshrl.u32 %v397, 7
      %v399 = vsub.s32 0, %v398
      %v400 = vrot.slane %v279, %v399
      %402 = vmatprep.subr.bf16.mxu0 0
      %403 = vmatpush1.bf16.xpose.msra.mxu0 0
      %404 = vmatprep.subr.bf16.mxu0 0
      %405 = vmatpush1.bf16.xpose.msra.mxu0 0
      %406 = vmatprep.subr.bf16.mxu0 0
      %407 = vmatpush1.bf16.xpose.msra.mxu0 0
      %408 = vmatprep.subr.bf16.mxu0 0
      %409 = vmatpush1.bf16.xpose.msra.mxu0 0
      %410 = vmatprep.subr.bf16.mxu0 0
      %411 = vmatpush1.bf16.xpose.msra.mxu0 0
      %412 = vmatprep.subr.bf16.mxu0 0
      %413 = vmatpush1.bf16.xpose.msra.mxu0 0
      %414 = vmatprep.subr.bf16.mxu0 0
      %415 = vmatpush1.bf16.xpose.msra.mxu0 0
      %416 = vmatprep.subr.bf16.mxu0 0
      %417 = vmatpush1.bf16.xpose.msra.mxu0 %v289
      %418 = vmatprep.subr.bf16.mxu0 0
      %419 = vmatpush2.bf16.xpose.msra.mxu0 0
      %420 = vmatprep.subr.bf16.mxu0 0
      %421 = vmatpush2.bf16.xpose.msra.mxu0 0
      %422 = vmatprep.subr.bf16.mxu0 0
      %423 = vmatpush2.bf16.xpose.msra.mxu0 0
      %424 = vmatprep.subr.bf16.mxu0 0
      %425 = vmatpush2.bf16.xpose.msra.mxu0 0
      %426 = vmatprep.subr.bf16.mxu0 0
      %427 = vmatpush2.bf16.xpose.msra.mxu0 0
      %428 = vmatprep.subr.bf16.mxu0 0
      %429 = vmatpush2.bf16.xpose.msra.mxu0 0
      %430 = vmatprep.subr.bf16.mxu0 0
      %431 = vmatpush2.bf16.xpose.msra.mxu0 0
      %432 = vmatprep.subr.bf16.mxu0 0
      %433 = vmatpush2.bf16.xpose.msra.mxu0 0
      %434 = vmatprep.mubr.bf16.mxu0 0
      %435 = vmatmul.mubr.bf16.gmra.mxu0 %v292
      %v436 = vpop.f32.mrf.mxu0
      %v437 = vadd.f32 %v400, %v436
      %v438 = vpop.f32.mrf.mxu0
      %v439 = vpop.f32.mrf.mxu0
      %v440 = vpop.f32.mrf.mxu0
      %441 = vdwg.mxu0
      %v442 = vsel %vm334, %v437, -inf
      %443 = vmax.xlane.f32.xlu0 %v442
      %v444 = vpop.xlane.xlu0 %443
      %v445 = vsub.f32 %v437, %v444
      %v446 = vmul.f32 %v445, 1.442695
      %v447 = vpow.pop %v446
      %v448 = vsel %vm334, %v447, 0.0
      %449 = vadd.xlane.f32.xlu0 %v448
      %v450 = vpop.xlane.xlu0 %449
      %v451 = vrcp.pop %v450
      %v452 = vmul.f32 %v447, %v451
      %v453 = vpack.c.bf16 %v452, %v452
      %v455 = vsel %vm334, %v453, 0
      %v457 = vsel %vm350, %v277, 0
      %459 = vmatprep.subr.bf16.mxu0 0
      %460 = vmatpush1.bf16.msra.mxu0 0
      %461 = vmatprep.subr.bf16.mxu0 0
      %462 = vmatpush1.bf16.msra.mxu0 0
      %463 = vmatprep.subr.bf16.mxu0 0
      %464 = vmatpush1.bf16.msra.mxu0 0
      %465 = vmatprep.subr.bf16.mxu0 0
      %466 = vmatpush1.bf16.msra.mxu0 0
      %467 = vmatprep.subr.bf16.mxu0 0
      %468 = vmatpush1.bf16.msra.mxu0 0
      %469 = vmatprep.subr.bf16.mxu0 0
      %470 = vmatpush1.bf16.msra.mxu0 0
      %471 = vmatprep.subr.bf16.mxu0 0
      %472 = vmatpush1.bf16.msra.mxu0 0
      %473 = vmatprep.subr.bf16.mxu0 0
      %474 = vmatpush1.bf16.msra.mxu0 %v457
      %475 = vmatprep.subr.bf16.mxu0 0
      %476 = vmatpush2.bf16.msra.mxu0 0
      %477 = vmatprep.subr.bf16.mxu0 0
      %478 = vmatpush2.bf16.msra.mxu0 0
      %479 = vmatprep.subr.bf16.mxu0 0
      %480 = vmatpush2.bf16.msra.mxu0 0
      %481 = vmatprep.subr.bf16.mxu0 0
      %482 = vmatpush2.bf16.msra.mxu0 0
      %483 = vmatprep.subr.bf16.mxu0 0
      %484 = vmatpush2.bf16.msra.mxu0 0
      %485 = vmatprep.subr.bf16.mxu0 0
      %486 = vmatpush2.bf16.msra.mxu0 0
      %487 = vmatprep.subr.bf16.mxu0 0
      %488 = vmatpush2.bf16.msra.mxu0 0
      %489 = vmatprep.subr.bf16.mxu0 0
      %490 = vmatpush2.bf16.msra.mxu0 0
      %491 = vmatprep.mubr.bf16.mxu0 0
      %492 = vmatmul.mubr.bf16.gmra.mxu0 %v455
      %v493 = vpop.f32.mrf.mxu0
      %v494 = vadd.f32 0.0, %v493
      %v495 = vpop.f32.mrf.mxu0
      %v496 = vpop.f32.mrf.mxu0
      %v497 = vpop.f32.mrf.mxu0
      %498 = vdwg.mxu0
      %v499 = vpack.c.bf16 %v494, %v494
      %500 = vst.msk [vmem:[%s275] sm:$0xf] %vm394, %v499
      %p501 = scmp.lt.s32.totalorder %s17, 1
      %s502 = scalar_select %p501, %s17, 1
      %s503 = smul.addr %s502, 4
      %s504 = scalar_lea.vmem %s4, %s503
      %p505 = scmp.lt.s32.totalorder %s17, 1
      %s506 = scalar_select %p505, %s17, 1
      %s507 = smul.addr %s506, 4
      %s508 = scalar_lea.vmem %s5, %s507
      // Predicated region
      $region37: #{esim_forward.5} parent=35 // pred_check
        %p509 = pneg %p139
      $region38: #{esim_forward.5} parent=35 // pred_check_branch
        %511 = sbr.rel (%p509) target = $region40
      $region39: #{esim_forward.5} parent=35 // pred_region
        _
      $region40: #{esim_forward.5} parent=35 // pred_fallthru
        _
      // Predicated region
      $region41: #{esim_forward.5} parent=35 // pred_check
        %p512 = pneg %p165
      $region42: #{esim_forward.5} parent=35 // pred_check_branch
        %514 = sbr.rel (%p512) target = $region44
      $region43: #{esim_forward.5} parent=35 // pred_region
        _
      $region44: #{esim_forward.5} parent=35 // pred_fallthru
        _
    $region36: #{esim_forward.5} parent=5 // pred_fallthru
      _
    %p515 = scmp.le.s32.totalorder 2, %s12
    // Predicated region
    $region45: #{esim_forward.5} parent=5 // pred_check
      %p516 = pneg %p515
    $region46: #{esim_forward.5} parent=5 // pred_check_branch
      %518 = sbr.rel (%p516) target = $region48
    $region47: #{esim_forward.5} parent=5 // pred_region
      %s519 = ssub.s32 %s12, 2
      // Predicated region
      $region49: #{esim_forward.5} parent=47 // pred_check
        %p520 = pneg %p145
      $region50: #{esim_forward.5} parent=47 // pred_check_branch
        %522 = sbr.rel (%p520) target = $region52
      $region51: #{esim_forward.5} parent=47 // pred_region
        %p523 = scmp.lt.s32.totalorder %s18, 1
        %s524 = scalar_select %p523, %s18, 1
        %s525 = smul.addr %s524, 4
        %s526 = scalar_lea.vmem %s4, %s525
      $region52: #{esim_forward.5} parent=47 // pred_fallthru
        _
      // Predicated region
      $region53: #{esim_forward.5} parent=47 // pred_check
        %p527 = pneg %p171
      $region54: #{esim_forward.5} parent=47 // pred_check_branch
        %529 = sbr.rel (%p527) target = $region56
      $region55: #{esim_forward.5} parent=47 // pred_region
        %p530 = scmp.lt.s32.totalorder %s18, 1
        %s531 = scalar_select %p530, %s18, 1
        %s532 = smul.addr %s531, 4
        %s533 = scalar_lea.vmem %s5, %s532
      $region56: #{esim_forward.5} parent=47 // pred_fallthru
        _
    $region48: #{esim_forward.5} parent=5 // pred_fallthru
      _
  $region6: #{esim_forward.5} parent=0 // loop_footer
    %s16 = sadd.s32 1, %s12
  $region7: #{esim_forward.5} parent=0 // loop_footer_branch
    %11 = sbr.rel target = $region3
  $region8: #{esim_forward.5} parent=0 // loop_exit
    _

// kernel: esim_forward.4
$region0: #{esim_forward.4}
  #allocation0 [shape = 'u32[]', space=smem, size = 0x4, offset = 0x4, fixed_abs, tag = 'smem constant byte address 0x4 - core index']
  #allocation1 [shape = 'u32[144,128]{1,0:T(1,128)}', space=vmem, size = 0x12000, scoped, tag = 'internal scratch']
  %s0 = inlined_call_operand.vmem [shape: bf16[4,8,32], index: 0, kind: input, shape index: {}]
  %s1 = inlined_call_operand.vmem [shape: f32[4,1,8], index: 1, kind: input, shape index: {}]
  %s2 = inlined_call_operand.vmem [shape: bf16[3,32,96], index: 2, kind: input, shape index: {}]
  %s3 = inlined_call_operand.vmem [shape: f32[3,1,96], index: 3, kind: input, shape index: {}]
  %s4 = inlined_call_operand.vmem [shape: bf16[3,32,32], index: 4, kind: input, shape index: {}]
  %s5 = inlined_call_operand.vmem [shape: f32[3,1,32], index: 5, kind: input, shape index: {}]
  %s6 = inlined_call_operand.vmem [shape: f32[3,1,32], index: 6, kind: input, shape index: {}]
  %s7 = inlined_call_operand.vmem [shape: f32[3,1,32], index: 7, kind: input, shape index: {}]
  %s8 = inlined_call_operand.vmem [shape: bf16[3,32,128], index: 8, kind: input, shape index: {}]
  %s9 = inlined_call_operand.vmem [shape: f32[3,1,128], index: 9, kind: input, shape index: {}]
  %s10 = inlined_call_operand.vmem [shape: bf16[3,128,32], index: 10, kind: input, shape index: {}]
  %s11 = inlined_call_operand.vmem [shape: f32[3,1,32], index: 11, kind: input, shape index: {}]
  %s12 = inlined_call_operand.vmem [shape: f32[3,1,32], index: 12, kind: input, shape index: {}]
  %s13 = inlined_call_operand.vmem [shape: f32[3,1,32], index: 13, kind: input, shape index: {}]
  %s14 = inlined_call_operand.vmem [shape: bf16[4,8,32], index: 14, kind: output, shape index: {}]
  %s15 = sld [smem:[#allocation0]]
  $region93: #{esim_forward.4} parent=0
    _
  %s17 = ssub.s32 1, %s15
  %s18 = scalar_select 0, %s17, %s15
  loop: start=0, step=1, limit=8
  $region2: #{esim_forward.4} parent=0 // loop_pre_header
    _
  $region3: #{esim_forward.4} parent=0 // loop_header
    %s20 = sphi 0, %s24
    %p21 = scmp.ge.s32.totalorder %s20, 8
    %s27 = sphi 0, %s39
    %s28 = sphi 0, %s35
    %s29 = sphi 0, %s27
    %s30 = sphi 0, %s28
    %s31 = sphi 0, %s29
    %s32 = sphi 0, %s30
    %s42 = sphi 0, %s44
    %s45 = sphi 0, %s42
    %s46 = sphi 0, %s45
    %s62 = sphi 0, %s46
    %s68 = sphi 0, %s70
    %s71 = sphi 0, %s68
    %s72 = sphi 0, %s71
    %s88 = sphi 0, %s72
    %s94 = sphi 0, %s96
    %s97 = sphi 0, %s94
    %s98 = sphi 0, %s97
    %s114 = sphi 0, %s98
    %s120 = sphi 0, %s122
    %s123 = sphi 0, %s120
    %s124 = sphi 0, %s123
    %s140 = sphi 0, %s124
    %s146 = sphi 0, %s148
    %s149 = sphi 0, %s146
    %s150 = sphi 0, %s149
    %s166 = sphi 0, %s150
    %s172 = sphi 0, %s174
    %s175 = sphi 0, %s172
    %s176 = sphi 0, %s175
    %s192 = sphi 0, %s176
    %s198 = sphi 0, %s200
    %s201 = sphi 0, %s198
    %s202 = sphi 0, %s201
    %s218 = sphi 0, %s202
    %s224 = sphi 0, %s226
    %s227 = sphi 0, %s224
    %s228 = sphi 0, %s227
    %s244 = sphi 0, %s228
    %s250 = sphi 0, %s252
    %s253 = sphi 0, %s250
    %s254 = sphi 0, %s253
    %s270 = sphi 0, %s254
    %s276 = sphi 0, %s278
    %s279 = sphi 0, %s276
    %s280 = sphi 0, %s279
    %s296 = sphi 0, %s280
    %s302 = sphi 0, %s304
    %s305 = sphi 0, %s302
    %s306 = sphi 0, %s305
    %s322 = sphi 0, %s306
    %s328 = sphi 0, %s330
    %s331 = sphi 0, %s328
    %s332 = sphi 0, %s331
    %s348 = sphi 0, %s332
    %s354 = sphi 0, %s356
    %s357 = sphi 0, %s354
    %s358 = sphi 0, %s357
    %s374 = sphi 0, %s358
    %s380 = sphi 0, %s382
    %s383 = sphi 0, %s380
    %s384 = sphi 0, %s383
    %s400 = sphi 0, %s384
    %s406 = sphi 0, %s408
    %s409 = sphi 0, %s406
    %s410 = sphi 0, %s409
    %s426 = sphi 0, %s410
  $region4: #{esim_forward.4} parent=0 // loop_header_branch
    %23 = sbr.rel (%p21) target = $region8
  $region5: #{esim_forward.4} parent=0 // loop_body
    %s25 = ssub.s32 %s20, 1
    %s26 = ssub.s32 %s20, 2
    %s33 = sadd.s32 1, %s28
    %p34 = scmp.ge.s32.totalorder %s33, 3
    %s35 = scalar_select %p34, 0, %s33
    %s36 = sadd.s32 1, %s27
    %s37 = scalar_select %p34, %s36, %s27
    %p38 = scmp.ge.s32.totalorder %s37, 2
    %s39 = scalar_select %p38, 0, %s37
    %s40 = ssub.s32 %s27, %s39
    %p41 = scmp.eq.s32.totalorder %s40, 0
    %s43 = sadd.s32 %s42, 1
    %s44 = scalar_select %p41, %s42, %s43
    %p47 = pneg %p41
    %p48 = scmp.eq.s32.totalorder %s20, 5
    %p49 = por %p47, %p48
    %p50 = scmp.ne.s32.totalorder %s42, %s45
    %p51 = scmp.eq.s32.totalorder %s20, 0
    %p52 = por %p50, %p51
    %p53 = scmp.ne.s32.totalorder %s42, %s45
    %p54 = scmp.eq.s32.totalorder %s25, 5
    %p55 = por %p53, %p54
    %p56 = scmp.ne.s32.totalorder %s45, %s46
    %p57 = scmp.eq.s32.totalorder %s25, 0
    %p58 = por %p56, %p57
    %p59 = scmp.ne.s32.totalorder %s45, %s46
    %p60 = scmp.eq.s32.totalorder %s26, 5
    %p61 = por %p59, %p60
    %p63 = scmp.ne.s32.totalorder %s46, %s62
    %p64 = scmp.eq.s32.totalorder %s26, 0
    %p65 = por %p63, %p64
    %s66 = ssub.s32 %s27, %s39
    %p67 = scmp.eq.s32.totalorder %s66, 0
    %s69 = sadd.s32 %s68, 1
    %s70 = scalar_select %p67, %s68, %s69
    %p73 = pneg %p67
    %p74 = scmp.eq.s32.totalorder %s20, 5
    %p75 = por %p73, %p74
    %p76 = scmp.ne.s32.totalorder %s68, %s71
    %p77 = scmp.eq.s32.totalorder %s20, 0
    %p78 = por %p76, %p77
    %p79 = scmp.ne.s32.totalorder %s68, %s71
    %p80 = scmp.eq.s32.totalorder %s25, 5
    %p81 = por %p79, %p80
    %p82 = scmp.ne.s32.totalorder %s71, %s72
    %p83 = scmp.eq.s32.totalorder %s25, 0
    %p84 = por %p82, %p83
    %p85 = scmp.ne.s32.totalorder %s71, %s72
    %p86 = scmp.eq.s32.totalorder %s26, 5
    %p87 = por %p85, %p86
    %p89 = scmp.ne.s32.totalorder %s72, %s88
    %p90 = scmp.eq.s32.totalorder %s26, 0
    %p91 = por %p89, %p90
    %s92 = ssub.s32 %s28, %s35
    %p93 = scmp.eq.s32.totalorder %s92, 0
    %s95 = sadd.s32 %s94, 1
    %s96 = scalar_select %p93, %s94, %s95
    %p99 = pneg %p93
    %p100 = scmp.eq.s32.totalorder %s20, 5
    %p101 = por %p99, %p100
    %p102 = scmp.ne.s32.totalorder %s94, %s97
    %p103 = scmp.eq.s32.totalorder %s20, 0
    %p104 = por %p102, %p103
    %p105 = scmp.ne.s32.totalorder %s94, %s97
    %p106 = scmp.eq.s32.totalorder %s25, 5
    %p107 = por %p105, %p106
    %p108 = scmp.ne.s32.totalorder %s97, %s98
    %p109 = scmp.eq.s32.totalorder %s25, 0
    %p110 = por %p108, %p109
    %p111 = scmp.ne.s32.totalorder %s97, %s98
    %p112 = scmp.eq.s32.totalorder %s26, 5
    %p113 = por %p111, %p112
    %p115 = scmp.ne.s32.totalorder %s98, %s114
    %p116 = scmp.eq.s32.totalorder %s26, 0
    %p117 = por %p115, %p116
    %s118 = ssub.s32 %s28, %s35
    %p119 = scmp.eq.s32.totalorder %s118, 0
    %s121 = sadd.s32 %s120, 1
    %s122 = scalar_select %p119, %s120, %s121
    %p125 = pneg %p119
    %p126 = scmp.eq.s32.totalorder %s20, 5
    %p127 = por %p125, %p126
    %p128 = scmp.ne.s32.totalorder %s120, %s123
    %p129 = scmp.eq.s32.totalorder %s20, 0
    %p130 = por %p128, %p129
    %p131 = scmp.ne.s32.totalorder %s120, %s123
    %p132 = scmp.eq.s32.totalorder %s25, 5
    %p133 = por %p131, %p132
    %p134 = scmp.ne.s32.totalorder %s123, %s124
    %p135 = scmp.eq.s32.totalorder %s25, 0
    %p136 = por %p134, %p135
    %p137 = scmp.ne.s32.totalorder %s123, %s124
    %p138 = scmp.eq.s32.totalorder %s26, 5
    %p139 = por %p137, %p138
    %p141 = scmp.ne.s32.totalorder %s124, %s140
    %p142 = scmp.eq.s32.totalorder %s26, 0
    %p143 = por %p141, %p142
    %s144 = ssub.s32 %s28, %s35
    %p145 = scmp.eq.s32.totalorder %s144, 0
    %s147 = sadd.s32 %s146, 1
    %s148 = scalar_select %p145, %s146, %s147
    %p151 = pneg %p145
    %p152 = scmp.eq.s32.totalorder %s20, 5
    %p153 = por %p151, %p152
    %p154 = scmp.ne.s32.totalorder %s146, %s149
    %p155 = scmp.eq.s32.totalorder %s20, 0
    %p156 = por %p154, %p155
    %p157 = scmp.ne.s32.totalorder %s146, %s149
    %p158 = scmp.eq.s32.totalorder %s25, 5
    %p159 = por %p157, %p158
    %p160 = scmp.ne.s32.totalorder %s149, %s150
    %p161 = scmp.eq.s32.totalorder %s25, 0
    %p162 = por %p160, %p161
    %p163 = scmp.ne.s32.totalorder %s149, %s150
    %p164 = scmp.eq.s32.totalorder %s26, 5
    %p165 = por %p163, %p164
    %p167 = scmp.ne.s32.totalorder %s150, %s166
    %p168 = scmp.eq.s32.totalorder %s26, 0
    %p169 = por %p167, %p168
    %s170 = ssub.s32 %s28, %s35
    %p171 = scmp.eq.s32.totalorder %s170, 0
    %s173 = sadd.s32 %s172, 1
    %s174 = scalar_select %p171, %s172, %s173
    %p177 = pneg %p171
    %p178 = scmp.eq.s32.totalorder %s20, 5
    %p179 = por %p177, %p178
    %p180 = scmp.ne.s32.totalorder %s172, %s175
    %p181 = scmp.eq.s32.totalorder %s20, 0
    %p182 = por %p180, %p181
    %p183 = scmp.ne.s32.totalorder %s172, %s175
    %p184 = scmp.eq.s32.totalorder %s25, 5
    %p185 = por %p183, %p184
    %p186 = scmp.ne.s32.totalorder %s175, %s176
    %p187 = scmp.eq.s32.totalorder %s25, 0
    %p188 = por %p186, %p187
    %p189 = scmp.ne.s32.totalorder %s175, %s176
    %p190 = scmp.eq.s32.totalorder %s26, 5
    %p191 = por %p189, %p190
    %p193 = scmp.ne.s32.totalorder %s176, %s192
    %p194 = scmp.eq.s32.totalorder %s26, 0
    %p195 = por %p193, %p194
    %s196 = ssub.s32 %s28, %s35
    %p197 = scmp.eq.s32.totalorder %s196, 0
    %s199 = sadd.s32 %s198, 1
    %s200 = scalar_select %p197, %s198, %s199
    %p203 = pneg %p197
    %p204 = scmp.eq.s32.totalorder %s20, 5
    %p205 = por %p203, %p204
    %p206 = scmp.ne.s32.totalorder %s198, %s201
    %p207 = scmp.eq.s32.totalorder %s20, 0
    %p208 = por %p206, %p207
    %p209 = scmp.ne.s32.totalorder %s198, %s201
    %p210 = scmp.eq.s32.totalorder %s25, 5
    %p211 = por %p209, %p210
    %p212 = scmp.ne.s32.totalorder %s201, %s202
    %p213 = scmp.eq.s32.totalorder %s25, 0
    %p214 = por %p212, %p213
    %p215 = scmp.ne.s32.totalorder %s201, %s202
    %p216 = scmp.eq.s32.totalorder %s26, 5
    %p217 = por %p215, %p216
    %p219 = scmp.ne.s32.totalorder %s202, %s218
    %p220 = scmp.eq.s32.totalorder %s26, 0
    %p221 = por %p219, %p220
    %s222 = ssub.s32 %s28, %s35
    %p223 = scmp.eq.s32.totalorder %s222, 0
    %s225 = sadd.s32 %s224, 1
    %s226 = scalar_select %p223, %s224, %s225
    %p229 = pneg %p223
    %p230 = scmp.eq.s32.totalorder %s20, 5
    %p231 = por %p229, %p230
    %p232 = scmp.ne.s32.totalorder %s224, %s227
    %p233 = scmp.eq.s32.totalorder %s20, 0
    %p234 = por %p232, %p233
    %p235 = scmp.ne.s32.totalorder %s224, %s227
    %p236 = scmp.eq.s32.totalorder %s25, 5
    %p237 = por %p235, %p236
    %p238 = scmp.ne.s32.totalorder %s227, %s228
    %p239 = scmp.eq.s32.totalorder %s25, 0
    %p240 = por %p238, %p239
    %p241 = scmp.ne.s32.totalorder %s227, %s228
    %p242 = scmp.eq.s32.totalorder %s26, 5
    %p243 = por %p241, %p242
    %p245 = scmp.ne.s32.totalorder %s228, %s244
    %p246 = scmp.eq.s32.totalorder %s26, 0
    %p247 = por %p245, %p246
    %s248 = ssub.s32 %s28, %s35
    %p249 = scmp.eq.s32.totalorder %s248, 0
    %s251 = sadd.s32 %s250, 1
    %s252 = scalar_select %p249, %s250, %s251
    %p255 = pneg %p249
    %p256 = scmp.eq.s32.totalorder %s20, 5
    %p257 = por %p255, %p256
    %p258 = scmp.ne.s32.totalorder %s250, %s253
    %p259 = scmp.eq.s32.totalorder %s20, 0
    %p260 = por %p258, %p259
    %p261 = scmp.ne.s32.totalorder %s250, %s253
    %p262 = scmp.eq.s32.totalorder %s25, 5
    %p263 = por %p261, %p262
    %p264 = scmp.ne.s32.totalorder %s253, %s254
    %p265 = scmp.eq.s32.totalorder %s25, 0
    %p266 = por %p264, %p265
    %p267 = scmp.ne.s32.totalorder %s253, %s254
    %p268 = scmp.eq.s32.totalorder %s26, 5
    %p269 = por %p267, %p268
    %p271 = scmp.ne.s32.totalorder %s254, %s270
    %p272 = scmp.eq.s32.totalorder %s26, 0
    %p273 = por %p271, %p272
    %s274 = ssub.s32 %s28, %s35
    %p275 = scmp.eq.s32.totalorder %s274, 0
    %s277 = sadd.s32 %s276, 1
    %s278 = scalar_select %p275, %s276, %s277
    %p281 = pneg %p275
    %p282 = scmp.eq.s32.totalorder %s20, 5
    %p283 = por %p281, %p282
    %p284 = scmp.ne.s32.totalorder %s276, %s279
    %p285 = scmp.eq.s32.totalorder %s20, 0
    %p286 = por %p284, %p285
    %p287 = scmp.ne.s32.totalorder %s276, %s279
    %p288 = scmp.eq.s32.totalorder %s25, 5
    %p289 = por %p287, %p288
    %p290 = scmp.ne.s32.totalorder %s279, %s280
    %p291 = scmp.eq.s32.totalorder %s25, 0
    %p292 = por %p290, %p291
    %p293 = scmp.ne.s32.totalorder %s279, %s280
    %p294 = scmp.eq.s32.totalorder %s26, 5
    %p295 = por %p293, %p294
    %p297 = scmp.ne.s32.totalorder %s280, %s296
    %p298 = scmp.eq.s32.totalorder %s26, 0
    %p299 = por %p297, %p298
    %s300 = ssub.s32 %s28, %s35
    %p301 = scmp.eq.s32.totalorder %s300, 0
    %s303 = sadd.s32 %s302, 1
    %s304 = scalar_select %p301, %s302, %s303
    %p307 = pneg %p301
    %p308 = scmp.eq.s32.totalorder %s20, 5
    %p309 = por %p307, %p308
    %p310 = scmp.ne.s32.totalorder %s302, %s305
    %p311 = scmp.eq.s32.totalorder %s20, 0
    %p312 = por %p310, %p311
    %p313 = scmp.ne.s32.totalorder %s302, %s305
    %p314 = scmp.eq.s32.totalorder %s25, 5
    %p315 = por %p313, %p314
    %p316 = scmp.ne.s32.totalorder %s305, %s306
    %p317 = scmp.eq.s32.totalorder %s25, 0
    %p318 = por %p316, %p317
    %p319 = scmp.ne.s32.totalorder %s305, %s306
    %p320 = scmp.eq.s32.totalorder %s26, 5
    %p321 = por %p319, %p320
    %p323 = scmp.ne.s32.totalorder %s306, %s322
    %p324 = scmp.eq.s32.totalorder %s26, 0
    %p325 = por %p323, %p324
    %s326 = ssub.s32 %s28, %s35
    %p327 = scmp.eq.s32.totalorder %s326, 0
    %s329 = sadd.s32 %s328, 1
    %s330 = scalar_select %p327, %s328, %s329
    %p333 = pneg %p327
    %p334 = scmp.eq.s32.totalorder %s20, 5
    %p335 = por %p333, %p334
    %p336 = scmp.ne.s32.totalorder %s328, %s331
    %p337 = scmp.eq.s32.totalorder %s20, 0
    %p338 = por %p336, %p337
    %p339 = scmp.ne.s32.totalorder %s328, %s331
    %p340 = scmp.eq.s32.totalorder %s25, 5
    %p341 = por %p339, %p340
    %p342 = scmp.ne.s32.totalorder %s331, %s332
    %p343 = scmp.eq.s32.totalorder %s25, 0
    %p344 = por %p342, %p343
    %p345 = scmp.ne.s32.totalorder %s331, %s332
    %p346 = scmp.eq.s32.totalorder %s26, 5
    %p347 = por %p345, %p346
    %p349 = scmp.ne.s32.totalorder %s332, %s348
    %p350 = scmp.eq.s32.totalorder %s26, 0
    %p351 = por %p349, %p350
    %s352 = ssub.s32 %s28, %s35
    %p353 = scmp.eq.s32.totalorder %s352, 0
    %s355 = sadd.s32 %s354, 1
    %s356 = scalar_select %p353, %s354, %s355
    %p359 = pneg %p353
    %p360 = scmp.eq.s32.totalorder %s20, 5
    %p361 = por %p359, %p360
    %p362 = scmp.ne.s32.totalorder %s354, %s357
    %p363 = scmp.eq.s32.totalorder %s20, 0
    %p364 = por %p362, %p363
    %p365 = scmp.ne.s32.totalorder %s354, %s357
    %p366 = scmp.eq.s32.totalorder %s25, 5
    %p367 = por %p365, %p366
    %p368 = scmp.ne.s32.totalorder %s357, %s358
    %p369 = scmp.eq.s32.totalorder %s25, 0
    %p370 = por %p368, %p369
    %p371 = scmp.ne.s32.totalorder %s357, %s358
    %p372 = scmp.eq.s32.totalorder %s26, 5
    %p373 = por %p371, %p372
    %p375 = scmp.ne.s32.totalorder %s358, %s374
    %p376 = scmp.eq.s32.totalorder %s26, 0
    %p377 = por %p375, %p376
    %s378 = ssub.s32 %s28, %s35
    %p379 = scmp.eq.s32.totalorder %s378, 0
    %s381 = sadd.s32 %s380, 1
    %s382 = scalar_select %p379, %s380, %s381
    %p385 = pneg %p379
    %p386 = scmp.eq.s32.totalorder %s20, 5
    %p387 = por %p385, %p386
    %p388 = scmp.ne.s32.totalorder %s380, %s383
    %p389 = scmp.eq.s32.totalorder %s20, 0
    %p390 = por %p388, %p389
    %p391 = scmp.ne.s32.totalorder %s380, %s383
    %p392 = scmp.eq.s32.totalorder %s25, 5
    %p393 = por %p391, %p392
    %p394 = scmp.ne.s32.totalorder %s383, %s384
    %p395 = scmp.eq.s32.totalorder %s25, 0
    %p396 = por %p394, %p395
    %p397 = scmp.ne.s32.totalorder %s383, %s384
    %p398 = scmp.eq.s32.totalorder %s26, 5
    %p399 = por %p397, %p398
    %p401 = scmp.ne.s32.totalorder %s384, %s400
    %p402 = scmp.eq.s32.totalorder %s26, 0
    %p403 = por %p401, %p402
    %s404 = ssub.s32 %s27, %s39
    %p405 = scmp.eq.s32.totalorder %s404, 0
    %s407 = sadd.s32 %s406, 1
    %s408 = scalar_select %p405, %s406, %s407
    %p411 = pneg %p405
    %p412 = scmp.eq.s32.totalorder %s20, 5
    %p413 = por %p411, %p412
    %p414 = scmp.ne.s32.totalorder %s406, %s409
    %p415 = scmp.eq.s32.totalorder %s20, 0
    %p416 = por %p414, %p415
    %p417 = scmp.ne.s32.totalorder %s406, %s409
    %p418 = scmp.eq.s32.totalorder %s25, 5
    %p419 = por %p417, %p418
    %p420 = scmp.ne.s32.totalorder %s409, %s410
    %p421 = scmp.eq.s32.totalorder %s25, 0
    %p422 = por %p420, %p421
    %p423 = scmp.ne.s32.totalorder %s409, %s410
    %p424 = scmp.eq.s32.totalorder %s26, 5
    %p425 = por %p423, %p424
    %p427 = scmp.ne.s32.totalorder %s410, %s426
    %p428 = scmp.eq.s32.totalorder %s26, 0
    %p429 = por %p427, %p428
    %p430 = scmp.le.s32.totalorder 1, %s20
    %p431 = scmp.lt.s32.totalorder %s20, 7
    %p432 = pnand %p430, %p431
    %p433 = pneg %p432
    // Predicated region
    $region9: #{esim_forward.4} parent=5 // pred_check
      _
    $region10: #{esim_forward.4} parent=5 // pred_check_branch
      %435 = sbr.rel (%p432) target = $region12
    $region11: #{esim_forward.4} parent=5 // pred_region
      %s436 = ssub.s32 %s20, 1
    $region12: #{esim_forward.4} parent=5 // pred_fallthru
      _
    %p437 = scmp.lt.s32.totalorder %s20, 6
    // Predicated region
    $region13: #{esim_forward.4} parent=5 // pred_check
      %p438 = pneg %p437
    $region14: #{esim_forward.4} parent=5 // pred_check_branch
      %440 = sbr.rel (%p438) target = $region16
    $region15: #{esim_forward.4} parent=5 // pred_region
      // Predicated region
      $region17: #{esim_forward.4} parent=15 // pred_check
        %p441 = pneg %p52
      $region18: #{esim_forward.4} parent=15 // pred_check_branch
        %443 = sbr.rel (%p441) target = $region20
      $region19: #{esim_forward.4} parent=15 // pred_region
        %s444 = smul.u32 2, %s27
        %p445 = scmp.lt.s32.totalorder %s444, 3
        %s446 = scalar_select %p445, %s444, 3
        %s447 = smul.addr %s446, 4
        %s448 = scalar_lea.vmem %s0, %s447
        %s449 = smul.u32 2, %s27
      $region20: #{esim_forward.4} parent=15 // pred_fallthru
        _
      // Predicated region
      $region21: #{esim_forward.4} parent=15 // pred_check
        %p450 = pneg %p78
      $region22: #{esim_forward.4} parent=15 // pred_check_branch
        %452 = sbr.rel (%p450) target = $region24
      $region23: #{esim_forward.4} parent=15 // pred_region
        %s453 = smul.u32 2, %s27
        %p454 = scmp.lt.s32.totalorder %s453, 3
        %s455 = scalar_select %p454, %s453, 3
        %s456 = scalar_lea.vmem %s1, %s455
        %s457 = smul.u32 2, %s27
      $region24: #{esim_forward.4} parent=15 // pred_fallthru
        _
      // Predicated region
      $region25: #{esim_forward.4} parent=15 // pred_check
        %p458 = pneg %p104
      $region26: #{esim_forward.4} parent=15 // pred_check_branch
        %460 = sbr.rel (%p458) target = $region28
      $region27: #{esim_forward.4} parent=15 // pred_region
        %p461 = scmp.lt.s32.totalorder %s28, 2
        %s462 = scalar_select %p461, %s28, 2
        %s463 = smul.addr %s462, 4
        %s464 = smul.addr %s463, 4
        %s465 = scalar_lea.vmem %s2, %s464
      $region28: #{esim_forward.4} parent=15 // pred_fallthru
        _
      // Predicated region
      $region29: #{esim_forward.4} parent=15 // pred_check
        %p466 = pneg %p130
      $region30: #{esim_forward.4} parent=15 // pred_check_branch
        %468 = sbr.rel (%p466) target = $region32
      $region31: #{esim_forward.4} parent=15 // pred_region
        %p469 = scmp.lt.s32.totalorder %s28, 2
        %s470 = scalar_select %p469, %s28, 2
        %s471 = scalar_lea.vmem %s3, %s470
      $region32: #{esim_forward.4} parent=15 // pred_fallthru
        _
      // Predicated region
      $region33: #{esim_forward.4} parent=15 // pred_check
        %p472 = pneg %p156
      $region34: #{esim_forward.4} parent=15 // pred_check_branch
        %474 = sbr.rel (%p472) target = $region36
      $region35: #{esim_forward.4} parent=15 // pred_region
        %p475 = scmp.lt.s32.totalorder %s28, 2
        %s476 = scalar_select %p475, %s28, 2
        %s477 = smul.addr %s476, 4
        %s478 = smul.addr %s477, 4
        %s479 = scalar_lea.vmem %s4, %s478
      $region36: #{esim_forward.4} parent=15 // pred_fallthru
        _
      // Predicated region
      $region37: #{esim_forward.4} parent=15 // pred_check
        %p480 = pneg %p182
      $region38: #{esim_forward.4} parent=15 // pred_check_branch
        %482 = sbr.rel (%p480) target = $region40
      $region39: #{esim_forward.4} parent=15 // pred_region
        %p483 = scmp.lt.s32.totalorder %s28, 2
        %s484 = scalar_select %p483, %s28, 2
        %s485 = scalar_lea.vmem %s5, %s484
      $region40: #{esim_forward.4} parent=15 // pred_fallthru
        _
      // Predicated region
      $region41: #{esim_forward.4} parent=15 // pred_check
        %p486 = pneg %p208
      $region42: #{esim_forward.4} parent=15 // pred_check_branch
        %488 = sbr.rel (%p486) target = $region44
      $region43: #{esim_forward.4} parent=15 // pred_region
        %p489 = scmp.lt.s32.totalorder %s28, 2
        %s490 = scalar_select %p489, %s28, 2
        %s491 = scalar_lea.vmem %s6, %s490
      $region44: #{esim_forward.4} parent=15 // pred_fallthru
        _
      // Predicated region
      $region45: #{esim_forward.4} parent=15 // pred_check
        %p492 = pneg %p234
      $region46: #{esim_forward.4} parent=15 // pred_check_branch
        %494 = sbr.rel (%p492) target = $region48
      $region47: #{esim_forward.4} parent=15 // pred_region
        %p495 = scmp.lt.s32.totalorder %s28, 2
        %s496 = scalar_select %p495, %s28, 2
        %s497 = scalar_lea.vmem %s7, %s496
      $region48: #{esim_forward.4} parent=15 // pred_fallthru
        _
      // Predicated region
      $region49: #{esim_forward.4} parent=15 // pred_check
        %p498 = pneg %p260
      $region50: #{esim_forward.4} parent=15 // pred_check_branch
        %500 = sbr.rel (%p498) target = $region52
      $region51: #{esim_forward.4} parent=15 // pred_region
        %p501 = scmp.lt.s32.totalorder %s28, 2
        %s502 = scalar_select %p501, %s28, 2
        %s503 = smul.addr %s502, 4
        %s504 = smul.addr %s503, 4
        %s505 = scalar_lea.vmem %s8, %s504
      $region52: #{esim_forward.4} parent=15 // pred_fallthru
        _
      // Predicated region
      $region53: #{esim_forward.4} parent=15 // pred_check
        %p506 = pneg %p286
      $region54: #{esim_forward.4} parent=15 // pred_check_branch
        %508 = sbr.rel (%p506) target = $region56
      $region55: #{esim_forward.4} parent=15 // pred_region
        %p509 = scmp.lt.s32.totalorder %s28, 2
        %s510 = scalar_select %p509, %s28, 2
        %s511 = scalar_lea.vmem %s9, %s510
      $region56: #{esim_forward.4} parent=15 // pred_fallthru
        _
      // Predicated region
      $region57: #{esim_forward.4} parent=15 // pred_check
        %p512 = pneg %p312
      $region58: #{esim_forward.4} parent=15 // pred_check_branch
        %514 = sbr.rel (%p512) target = $region60
      $region59: #{esim_forward.4} parent=15 // pred_region
        %p515 = scmp.lt.s32.totalorder %s28, 2
        %s516 = scalar_select %p515, %s28, 2
        %s517 = smul.addr %s516, 16
        %s518 = smul.addr %s517, 4
        %s519 = scalar_lea.vmem %s10, %s518
      $region60: #{esim_forward.4} parent=15 // pred_fallthru
        _
      // Predicated region
      $region61: #{esim_forward.4} parent=15 // pred_check
        %p520 = pneg %p338
      $region62: #{esim_forward.4} parent=15 // pred_check_branch
        %522 = sbr.rel (%p520) target = $region64
      $region63: #{esim_forward.4} parent=15 // pred_region
        %p523 = scmp.lt.s32.totalorder %s28, 2
        %s524 = scalar_select %p523, %s28, 2
        %s525 = scalar_lea.vmem %s11, %s524
      $region64: #{esim_forward.4} parent=15 // pred_fallthru
        _
      // Predicated region
      $region65: #{esim_forward.4} parent=15 // pred_check
        %p526 = pneg %p364
      $region66: #{esim_forward.4} parent=15 // pred_check_branch
        %528 = sbr.rel (%p526) target = $region68
      $region67: #{esim_forward.4} parent=15 // pred_region
        %p529 = scmp.lt.s32.totalorder %s28, 2
        %s530 = scalar_select %p529, %s28, 2
        %s531 = scalar_lea.vmem %s12, %s530
      $region68: #{esim_forward.4} parent=15 // pred_fallthru
        _
      // Predicated region
      $region69: #{esim_forward.4} parent=15 // pred_check
        %p532 = pneg %p390
      $region70: #{esim_forward.4} parent=15 // pred_check_branch
        %534 = sbr.rel (%p532) target = $region72
      $region71: #{esim_forward.4} parent=15 // pred_region
        %p535 = scmp.lt.s32.totalorder %s28, 2
        %s536 = scalar_select %p535, %s28, 2
        %s537 = scalar_lea.vmem %s13, %s536
      $region72: #{esim_forward.4} parent=15 // pred_fallthru
        _
    $region16: #{esim_forward.4} parent=5 // pred_fallthru
      _
    %p538 = scmp.le.s32.totalorder 1, %s20
    %p539 = scmp.lt.s32.totalorder %s20, 7
    %p540 = pnand %p538, %p539
    %p541 = pneg %p540
    // Predicated region
    $region73: #{esim_forward.4} parent=5 // pred_check
      _
    $region74: #{esim_forward.4} parent=5 // pred_check_branch
      %543 = sbr.rel (%p540) target = $region76
    $region75: #{esim_forward.4} parent=5 // pred_region
      %s544 = ssub.s32 %s20, 1
      %s545 = smul.u32 2, %s29
      %p546 = scmp.lt.s32.totalorder %s545, 3
      %s547 = scalar_select %p546, %s545, 3
      %s548 = smul.addr %s547, 4
      %s549 = scalar_lea.vmem %s0, %s548
      %p550 = pneg %p58
      %p551 = pneg %p55
      %s552 = smul.u32 2, %s29
      %p553 = scmp.lt.s32.totalorder %s552, 3
      %s554 = scalar_select %p553, %s552, 3
      %s555 = scalar_lea.vmem %s1, %s554
      %p556 = pneg %p84
      %p557 = pneg %p81
      %p558 = scmp.lt.s32.totalorder %s30, 2
      %s559 = scalar_select %p558, %s30, 2
      %s560 = smul.addr %s559, 4
      %s561 = smul.addr %s560, 4
      %s562 = scalar_lea.vmem %s2, %s561
      %p563 = pneg %p110
      %p564 = pneg %p107
      %p565 = scmp.lt.s32.totalorder %s30, 2
      %s566 = scalar_select %p565, %s30, 2
      %s567 = scalar_lea.vmem %s3, %s566
      %p568 = pneg %p136
      %p569 = pneg %p133
      %p570 = scmp.lt.s32.totalorder %s30, 2
      %s571 = scalar_select %p570, %s30, 2
      %s572 = smul.addr %s571, 4
      %s573 = smul.addr %s572, 4
      %s574 = scalar_lea.vmem %s4, %s573
      %p575 = pneg %p162
      %p576 = pneg %p159
      %p577 = scmp.lt.s32.totalorder %s30, 2
      %s578 = scalar_select %p577, %s30, 2
      %s579 = scalar_lea.vmem %s5, %s578
      %p580 = pneg %p188
      %p581 = pneg %p185
      %p582 = scmp.lt.s32.totalorder %s30, 2
      %s583 = scalar_select %p582, %s30, 2
      %s584 = scalar_lea.vmem %s6, %s583
      %p585 = pneg %p214
      %p586 = pneg %p211
      %p587 = scmp.lt.s32.totalorder %s30, 2
      %s588 = scalar_select %p587, %s30, 2
      %s589 = scalar_lea.vmem %s7, %s588
      %p590 = pneg %p240
      %p591 = pneg %p237
      %p592 = scmp.lt.s32.totalorder %s30, 2
      %s593 = scalar_select %p592, %s30, 2
      %s594 = smul.addr %s593, 4
      %s595 = smul.addr %s594, 4
      %s596 = scalar_lea.vmem %s8, %s595
      %p597 = pneg %p266
      %p598 = pneg %p263
      %p599 = scmp.lt.s32.totalorder %s30, 2
      %s600 = scalar_select %p599, %s30, 2
      %s601 = scalar_lea.vmem %s9, %s600
      %p602 = pneg %p292
      %p603 = pneg %p289
      %p604 = scmp.lt.s32.totalorder %s30, 2
      %s605 = scalar_select %p604, %s30, 2
      %s606 = smul.addr %s605, 16
      %s607 = smul.addr %s606, 4
      %s608 = scalar_lea.vmem %s10, %s607
      %p609 = pneg %p318
      %p610 = pneg %p315
      %p611 = scmp.lt.s32.totalorder %s30, 2
      %s612 = scalar_select %p611, %s30, 2
      %s613 = scalar_lea.vmem %s11, %s612
      %p614 = pneg %p344
      %p615 = pneg %p341
      %p616 = scmp.lt.s32.totalorder %s30, 2
      %s617 = scalar_select %p616, %s30, 2
      %s618 = scalar_lea.vmem %s12, %s617
      %p619 = pneg %p370
      %p620 = pneg %p367
      %p621 = scmp.lt.s32.totalorder %s30, 2
      %s622 = scalar_select %p621, %s30, 2
      %s623 = scalar_lea.vmem %s13, %s622
      %p624 = pneg %p396
      %p625 = pneg %p393
      %p626 = pneg %p422
      %p627 = pneg %p419
      %s628 = smul.u32 2, %s29
      %p629 = scmp.lt.s32.totalorder %s628, 3
      %s630 = scalar_select %p629, %s628, 3
      %s631 = smul.addr %s630, 4
      %s632 = scalar_lea.vmem %s14, %s631
      %s633 = smul.u32 2, %s29
      %p634 = scmp.lt.s32.totalorder %s633, 3
      %s635 = scalar_select %p634, %s633, 3
      %s636 = smul.addr %s635, 4
      %s637 = scalar_lea.vmem %s0, %s636
      %s638 = smul.u32 2, %s29
      %s639 = smul.u32 2, %s29
      %p640 = scmp.lt.s32.totalorder %s639, 3
      %s641 = scalar_select %p640, %s639, 3
      %s642 = scalar_lea.vmem %s1, %s641
      %s643 = smul.u32 2, %s29
      %p644 = scmp.lt.s32.totalorder %s30, 2
      %s645 = scalar_select %p644, %s30, 2
      %s646 = smul.addr %s645, 4
      %s647 = smul.addr %s646, 4
      %s648 = scalar_lea.vmem %s2, %s647
      %p649 = scmp.lt.s32.totalorder %s30, 2
      %s650 = scalar_select %p649, %s30, 2
      %s651 = scalar_lea.vmem %s3, %s650
      %p652 = scmp.lt.s32.totalorder %s30, 2
      %s653 = scalar_select %p652, %s30, 2
      %s654 = smul.addr %s653, 4
      %s655 = smul.addr %s654, 4
      %s656 = scalar_lea.vmem %s4, %s655
      %p657 = scmp.lt.s32.totalorder %s30, 2
      %s658 = scalar_select %p657, %s30, 2
      %s659 = scalar_lea.vmem %s5, %s658
      %p660 = scmp.lt.s32.totalorder %s30, 2
      %s661 = scalar_select %p660, %s30, 2
      %s662 = scalar_lea.vmem %s6, %s661
      %p663 = scmp.lt.s32.totalorder %s30, 2
      %s664 = scalar_select %p663, %s30, 2
      %s665 = scalar_lea.vmem %s7, %s664
      %p666 = scmp.lt.s32.totalorder %s30, 2
      %s667 = scalar_select %p666, %s30, 2
      %s668 = smul.addr %s667, 4
      %s669 = smul.addr %s668, 4
      %s670 = scalar_lea.vmem %s8, %s669
      %p671 = scmp.lt.s32.totalorder %s30, 2
      %s672 = scalar_select %p671, %s30, 2
      %s673 = scalar_lea.vmem %s9, %s672
      %p674 = scmp.lt.s32.totalorder %s30, 2
      %s675 = scalar_select %p674, %s30, 2
      %s676 = smul.addr %s675, 16
      %s677 = smul.addr %s676, 4
      %s678 = scalar_lea.vmem %s10, %s677
      %p679 = scmp.lt.s32.totalorder %s30, 2
      %s680 = scalar_select %p679, %s30, 2
      %s681 = scalar_lea.vmem %s11, %s680
      %p682 = scmp.lt.s32.totalorder %s30, 2
      %s683 = scalar_select %p682, %s30, 2
      %s684 = scalar_lea.vmem %s12, %s683
      %p685 = scmp.lt.s32.totalorder %s30, 2
      %s686 = scalar_select %p685, %s30, 2
      %s687 = scalar_lea.vmem %s13, %s686
      %s688 = smul.u32 2, %s29
      %p689 = scmp.lt.s32.totalorder %s688, 3
      %s690 = scalar_select %p689, %s688, 3
      %s691 = smul.addr %s690, 4
      %s692 = scalar_lea.vmem %s14, %s691
      %s693 = smul.u32 2, %s29
      %p695 = scmp.eq.s32.totalorder %s30, 0
      // Predicated region
      $region77: #{esim_forward.4} parent=75 // pred_check
        %p696 = pneg %p695
      $region78: #{esim_forward.4} parent=75 // pred_check_branch
        %698 = sbr.rel (%p696) target = $region80
      $region79: #{esim_forward.4} parent=75 // pred_region
        %v699 = vld [vmem:[%s637] sm:$0xf]
        %v700 = vld [vmem:[%s637 + $0x4] sm:$0xf]
        %vm701 = vcmask 257024
        %702 = vst.msk [vmem:[%s692] sm:$0xf] %vm701, %v699
        %703 = vst.msk [vmem:[%s692 + $0x4] sm:$0xf] %vm701, %v700
      $region80: #{esim_forward.4} parent=75 // pred_fallthru
        _
      %v704 = vld [vmem:[%s692] sm:$0xf]
      %v705 = vld [vmem:[%s692 + $0x4] sm:$0xf]
      %v706 = vld [vmem:[%s648] sm:$0xf]
      %v707 = vld [vmem:[%s648 + $0x4] sm:$0xf]
      %v708 = vld [vmem:[%s648 + $0x8] sm:$0xf]
      %v709 = vld [vmem:[%s648 + $0xc] sm:$0xf]
      %v710 = vld [vmem:[%s651] sm:$0x1]
      %v712 = vlaneseq
      %v713 = vshrl.u32 %v712, 7
      %v714 = vsub.s32 0, %v713
      %v715 = vrot.slane %v710, %v714
      %v719 = vunpack.c.l.b16 %v704
      %v720 = vunpack.c.l.b16 %v705
      %v721 = vpack.c.b16 %v720, %v719
      %v726 = vunpack.c.l.b16 %v706
      %v727 = vunpack.c.l.b16 %v707
      %v728 = vunpack.c.l.b16 %v708
      %v729 = vunpack.c.l.b16 %v709
      %v730 = vpack.c.b16 %v727, %v726
      %v731 = vpack.c.b16 %v729, %v728
      %vm734 = vcmask 261120
      %v736 = vsel %vm734, %v721, 0
      %738 = vmatprep.subr.bf16.mxu0 0
      %739 = vmatpush1.bf16.msra.mxu0 0
      %740 = vmatprep.subr.bf16.mxu0 0
      %741 = vmatpush1.bf16.msra.mxu0 0
      %742 = vmatprep.subr.bf16.mxu0 0
      %743 = vmatpush1.bf16.msra.mxu0 0
      %744 = vmatprep.subr.bf16.mxu0 0
      %745 = vmatpush1.bf16.msra.mxu0 0
      %746 = vmatprep.subr.bf16.mxu0 0
      %747 = vmatpush1.bf16.msra.mxu0 0
      %748 = vmatprep.subr.bf16.mxu0 0
      %749 = vmatpush1.bf16.msra.mxu0 0
      %750 = vmatprep.subr.bf16.mxu0 0
      %751 = vmatpush1.bf16.msra.mxu0 %v731
      %752 = vmatprep.subr.bf16.mxu0 0
      %753 = vmatpush1.bf16.msra.mxu0 %v730
      %754 = vmatprep.subr.bf16.mxu0 0
      %755 = vmatpush2.bf16.msra.mxu0 0
      %756 = vmatprep.subr.bf16.mxu0 0
      %757 = vmatpush2.bf16.msra.mxu0 0
      %758 = vmatprep.subr.bf16.mxu0 0
      %759 = vmatpush2.bf16.msra.mxu0 0
      %760 = vmatprep.subr.bf16.mxu0 0
      %761 = vmatpush2.bf16.msra.mxu0 0
      %762 = vmatprep.subr.bf16.mxu0 0
      %763 = vmatpush2.bf16.msra.mxu0 0
      %764 = vmatprep.subr.bf16.mxu0 0
      %765 = vmatpush2.bf16.msra.mxu0 0
      %766 = vmatprep.subr.bf16.mxu0 0
      %767 = vmatpush2.bf16.msra.mxu0 0
      %768 = vmatprep.subr.bf16.mxu0 0
      %769 = vmatpush2.bf16.msra.mxu0 0
      %770 = vmatprep.mubr.bf16.mxu0 0
      %771 = vmatmul.mubr.bf16.gmra.mxu0 %v736
      %v772 = vpop.f32.mrf.mxu0
      %v773 = vadd.f32 %v715, %v772
      %v774 = vpop.f32.mrf.mxu0
      %v775 = vpop.f32.mrf.mxu0
      %v776 = vadd.f32 %v715, %v775
      %v777 = vpop.f32.mrf.mxu0
      %778 = vdwg.mxu0
      %v779 = vpack.c.bf16 %v776, %v773
      %v781 = vunpack.c.l.b16 %v779
      %v782 = vunpack.c.h.b16 %v779
      %v783 = vpack.c.b16 %v781, %v781
      %v784 = vpack.c.b16 %v782, %v782
      %v785 = vld [vmem:[%s642] sm:$0x1]
      %v786 = vld [vmem:[%s642 + $0x1] sm:$0x1]
      %v789 = vlaneseq
      %v790 = vshrl.u32 %v789, 7
      %v791 = vsub.s32 0, %v790
      %v792 = vrot.slane %v785, %v791
      %v793 = vlaneseq
      %v794 = vshrl.u32 %v793, 7
      %v795 = vsub.s32 0, %v794
      %v796 = vrot.slane %v786, %v795
      %v799 = vld [vmem:[%s656] sm:$0xf]
      %v800 = vld [vmem:[%s656 + $0x4] sm:$0xf]
      %v801 = vld [vmem:[%s656 + $0x8] sm:$0xf]
      %v802 = vld [vmem:[%s656 + $0xc] sm:$0xf]
      %803 = vrot.lane.b32.xlu0 %v783, 96
      %v804 = vpop.permute.xlu0 %803
      %vm805 = vcmask 64512
      %v807 = vsel %vm805, %v783, 0
      %v810 = vsel %vm805, %v804, 0
      %812 = vmatprep.subr.bf16.mxu0 0
      %813 = vmatpush1.bf16.xpose.msra.mxu0 0
      %814 = vmatprep.subr.bf16.mxu0 0
      %815 = vmatpush1.bf16.xpose.msra.mxu0 0
      %816 = vmatprep.subr.bf16.mxu0 0
      %817 = vmatpush1.bf16.xpose.msra.mxu0 0
      %818 = vmatprep.subr.bf16.mxu0 0
      %819 = vmatpush1.bf16.xpose.msra.mxu0 0
      %820 = vmatprep.subr.bf16.mxu0 0
      %821 = vmatpush1.bf16.xpose.msra.mxu0 0
      %822 = vmatprep.subr.bf16.mxu0 0
      %823 = vmatpush1.bf16.xpose.msra.mxu0 0
      %824 = vmatprep.subr.bf16.mxu0 0
      %825 = vmatpush1.bf16.xpose.msra.mxu0 0
      %826 = vmatprep.subr.bf16.mxu0 0
      %827 = vmatpush1.bf16.xpose.msra.mxu0 %v810
      %828 = vmatprep.subr.bf16.mxu0 0
      %829 = vmatpush2.bf16.xpose.msra.mxu0 0
      %830 = vmatprep.subr.bf16.mxu0 0
      %831 = vmatpush2.bf16.xpose.msra.mxu0 0
      %832 = vmatprep.subr.bf16.mxu0 0
      %833 = vmatpush2.bf16.xpose.msra.mxu0 0
      %834 = vmatprep.subr.bf16.mxu0 0
      %835 = vmatpush2.bf16.xpose.msra.mxu0 0
      %836 = vmatprep.subr.bf16.mxu0 0
      %837 = vmatpush2.bf16.xpose.msra.mxu0 0
      %838 = vmatprep.subr.bf16.mxu0 0
      %839 = vmatpush2.bf16.xpose.msra.mxu0 0
      %840 = vmatprep.subr.bf16.mxu0 0
      %841 = vmatpush2.bf16.xpose.msra.mxu0 0
      %842 = vmatprep.subr.bf16.mxu0 0
      %843 = vmatpush2.bf16.xpose.msra.mxu0 0
      %844 = vmatprep.mubr.bf16.mxu0 0
      %845 = vmatmul.mubr.bf16.gmra.mxu0 %v807
      %v846 = vpop.f32.mrf.mxu0
      %v847 = vadd.f32 0.0, %v846
      %v848 = vpop.f32.mrf.mxu0
      %v849 = vpop.f32.mrf.mxu0
      %v850 = vpop.f32.mrf.mxu0
      %851 = vdwg.mxu0
      %852 = vrot.lane.b32.xlu0 %v784, 96
      %v853 = vpop.permute.xlu0 %852
      %v855 = vsel %vm805, %v784, 0
      %v858 = vsel %vm805, %v853, 0
      %860 = vmatprep.subr.bf16.mxu0 0
      %861 = vmatpush1.bf16.xpose.msra.mxu0 0
      %862 = vmatprep.subr.bf16.mxu0 0
      %863 = vmatpush1.bf16.xpose.msra.mxu0 0
      %864 = vmatprep.subr.bf16.mxu0 0
      %865 = vmatpush1.bf16.xpose.msra.mxu0 0
      %866 = vmatprep.subr.bf16.mxu0 0
      %867 = vmatpush1.bf16.xpose.msra.mxu0 0
      %868 = vmatprep.subr.bf16.mxu0 0
      %869 = vmatpush1.bf16.xpose.msra.mxu0 0
      %870 = vmatprep.subr.bf16.mxu0 0
      %871 = vmatpush1.bf16.xpose.msra.mxu0 0
      %872 = vmatprep.subr.bf16.mxu0 0
      %873 = vmatpush1.bf16.xpose.msra.mxu0 0
      %874 = vmatprep.subr.bf16.mxu0 0
      %875 = vmatpush1.bf16.xpose.msra.mxu0 %v858
      %876 = vmatprep.subr.bf16.mxu0 0
      %877 = vmatpush2.bf16.xpose.msra.mxu0 0
      %878 = vmatprep.subr.bf16.mxu0 0
      %879 = vmatpush2.bf16.xpose.msra.mxu0 0
      %880 = vmatprep.subr.bf16.mxu0 0
      %881 = vmatpush2.bf16.xpose.msra.mxu0 0
      %882 = vmatprep.subr.bf16.mxu0 0
      %883 = vmatpush2.bf16.xpose.msra.mxu0 0
      %884 = vmatprep.subr.bf16.mxu0 0
      %885 = vmatpush2.bf16.xpose.msra.mxu0 0
      %886 = vmatprep.subr.bf16.mxu0 0
      %887 = vmatpush2.bf16.xpose.msra.mxu0 0
      %888 = vmatprep.subr.bf16.mxu0 0
      %889 = vmatpush2.bf16.xpose.msra.mxu0 0
      %890 = vmatprep.subr.bf16.mxu0 0
      %891 = vmatpush2.bf16.xpose.msra.mxu0 0
      %892 = vmatprep.mubr.bf16.mxu0 0
      %893 = vmatmul.mubr.bf16.gmra.mxu0 %v855
      %v894 = vpop.f32.mrf.mxu0
      %v895 = vadd.f32 0.0, %v894
      %v896 = vpop.f32.mrf.mxu0
      %v897 = vpop.f32.mrf.mxu0
      %v898 = vpop.f32.mrf.mxu0
      %899 = vdwg.mxu0
      %v900 = vmul.f32 %v847, 0.35355338
      %v901 = vmul.f32 %v895, 0.35355338
      %v902 = vadd.f32 %v900, %v792
      %v903 = vadd.f32 %v901, %v796
      %v904 = vsel %vm805, %v902, -inf
      %905 = vmax.xlane.f32.xlu0 %v904
      %v906 = vpop.xlane.xlu0 %905
      %v907 = vsel %vm805, %v903, -inf
      %908 = vmax.xlane.f32.xlu0 %v907
      %v909 = vpop.xlane.xlu0 %908
      %v910 = vsub.f32 %v902, %v906
      %v911 = vsub.f32 %v903, %v909
      %v912 = vmul.f32 %v910, 1.442695
      %v913 = vpow.pop %v912
      %v914 = vmul.f32 %v911, 1.442695
      %v915 = vpow.pop %v914
      %v916 = vsel %vm805, %v913, 0.0
      %917 = vadd.xlane.f32.xlu0 %v916
      %v918 = vpop.xlane.xlu0 %917
      %v919 = vsel %vm805, %v915, 0.0
      %920 = vadd.xlane.f32.xlu0 %v919
      %v921 = vpop.xlane.xlu0 %920
      %v922 = vrcp.pop %v918
      %v923 = vmul.f32 %v913, %v922
      %v924 = vrcp.pop %v921
      %v925 = vmul.f32 %v915, %v924
      %v926 = vpack.c.bf16 %v923, %v923
      %v927 = vpack.c.bf16 %v925, %v925
      %928 = vrot.lane.b32.xlu0 %v783, 64
      %v929 = vpop.permute.xlu0 %928
      %v931 = vsel %vm805, %v926, 0
      %vm933 = vcmask 1043456
      %v935 = vsel %vm933, %v929, 0
      %937 = vmatprep.subr.bf16.mxu0 0
      %938 = vmatpush1.bf16.msra.mxu0 0
      %939 = vmatprep.subr.bf16.mxu0 0
      %940 = vmatpush1.bf16.msra.mxu0 0
      %941 = vmatprep.subr.bf16.mxu0 0
      %942 = vmatpush1.bf16.msra.mxu0 0
      %943 = vmatprep.subr.bf16.mxu0 0
      %944 = vmatpush1.bf16.msra.mxu0 0
      %945 = vmatprep.subr.bf16.mxu0 0
      %946 = vmatpush1.bf16.msra.mxu0 0
      %947 = vmatprep.subr.bf16.mxu0 0
      %948 = vmatpush1.bf16.msra.mxu0 0
      %949 = vmatprep.subr.bf16.mxu0 0
      %950 = vmatpush1.bf16.msra.mxu0 0
      %951 = vmatprep.subr.bf16.mxu0 0
      %952 = vmatpush1.bf16.msra.mxu0 %v935
      %953 = vmatprep.subr.bf16.mxu0 0
      %954 = vmatpush2.bf16.msra.mxu0 0
      %955 = vmatprep.subr.bf16.mxu0 0
      %956 = vmatpush2.bf16.msra.mxu0 0
      %957 = vmatprep.subr.bf16.mxu0 0
      %958 = vmatpush2.bf16.msra.mxu0 0
      %959 = vmatprep.subr.bf16.mxu0 0
      %960 = vmatpush2.bf16.msra.mxu0 0
      %961 = vmatprep.subr.bf16.mxu0 0
      %962 = vmatpush2.bf16.msra.mxu0 0
      %963 = vmatprep.subr.bf16.mxu0 0
      %964 = vmatpush2.bf16.msra.mxu0 0
      %965 = vmatprep.subr.bf16.mxu0 0
      %966 = vmatpush2.bf16.msra.mxu0 0
      %967 = vmatprep.subr.bf16.mxu0 0
      %968 = vmatpush2.bf16.msra.mxu0 0
      %969 = vmatprep.mubr.bf16.mxu0 0
      %970 = vmatmul.mubr.bf16.gmra.mxu0 %v931
      %v971 = vpop.f32.mrf.mxu0
      %v972 = vadd.f32 0.0, %v971
      %v973 = vpop.f32.mrf.mxu0
      %v974 = vpop.f32.mrf.mxu0
      %v975 = vpop.f32.mrf.mxu0
      %976 = vdwg.mxu0
      %977 = vrot.lane.b32.xlu0 %v784, 64
      %v978 = vpop.permute.xlu0 %977
      %v980 = vsel %vm805, %v927, 0
      %v983 = vsel %vm933, %v978, 0
      %985 = vmatprep.subr.bf16.mxu0 0
      %986 = vmatpush1.bf16.msra.mxu0 0
      %987 = vmatprep.subr.bf16.mxu0 0
      %988 = vmatpush1.bf16.msra.mxu0 0
      %989 = vmatprep.subr.bf16.mxu0 0
      %990 = vmatpush1.bf16.msra.mxu0 0
      %991 = vmatprep.subr.bf16.mxu0 0
      %992 = vmatpush1.bf16.msra.mxu0 0
      %993 = vmatprep.subr.bf16.mxu0 0
      %994 = vmatpush1.bf16.msra.mxu0 0
      %995 = vmatprep.subr.bf16.mxu0 0
      %996 = vmatpush1.bf16.msra.mxu0 0
      %997 = vmatprep.subr.bf16.mxu0 0
      %998 = vmatpush1.bf16.msra.mxu0 0
      %999 = vmatprep.subr.bf16.mxu0 0
      %1000 = vmatpush1.bf16.msra.mxu0 %v983
      %1001 = vmatprep.subr.bf16.mxu0 0
      %1002 = vmatpush2.bf16.msra.mxu0 0
      %1003 = vmatprep.subr.bf16.mxu0 0
      %1004 = vmatpush2.bf16.msra.mxu0 0
      %1005 = vmatprep.subr.bf16.mxu0 0
      %1006 = vmatpush2.bf16.msra.mxu0 0
      %1007 = vmatprep.subr.bf16.mxu0 0
      %1008 = vmatpush2.bf16.msra.mxu0 0
      %1009 = vmatprep.subr.bf16.mxu0 0
      %1010 = vmatpush2.bf16.msra.mxu0 0
      %1011 = vmatprep.subr.bf16.mxu0 0
      %1012 = vmatpush2.bf16.msra.mxu0 0
      %1013 = vmatprep.subr.bf16.mxu0 0
      %1014 = vmatpush2.bf16.msra.mxu0 0
      %1015 = vmatprep.subr.bf16.mxu0 0
      %1016 = vmatpush2.bf16.msra.mxu0 0
      %1017 = vmatprep.mubr.bf16.mxu0 0
      %1018 = vmatmul.mubr.bf16.gmra.mxu0 %v980
      %v1019 = vpop.f32.mrf.mxu0
      %v1020 = vadd.f32 0.0, %v1019
      %v1021 = vpop.f32.mrf.mxu0
      %v1022 = vpop.f32.mrf.mxu0
      %v1023 = vpop.f32.mrf.mxu0
      %1024 = vdwg.mxu0
      %v1025 = vpack.c.bf16 %v1020, %v972
      %1026 = vrot.lane.b32.xlu0 %v783, 120
      %v1027 = vpop.permute.xlu0 %1026
      %1028 = vrot.lane.b32.xlu0 %v783, 88
      %v1029 = vpop.permute.xlu0 %1028
      %v1031 = vsel %vm805, %v1027, 0
      %v1034 = vsel %vm805, %v1029, 0
      %1036 = vmatprep.subr.bf16.mxu0 0
      %1037 = vmatpush1.bf16.xpose.msra.mxu0 0
      %1038 = vmatprep.subr.bf16.mxu0 0
      %1039 = vmatpush1.bf16.xpose.msra.mxu0 0
      %1040 = vmatprep.subr.bf16.mxu0 0
      %1041 = vmatpush1.bf16.xpose.msra.mxu0 0
      %1042 = vmatprep.subr.bf16.mxu0 0
      %1043 = vmatpush1.bf16.xpose.msra.mxu0 0
      %1044 = vmatprep.subr.bf16.mxu0 0
      %1045 = vmatpush1.bf16.xpose.msra.mxu0 0
      %1046 = vmatprep.subr.bf16.mxu0 0
      %1047 = vmatpush1.bf16.xpose.msra.mxu0 0
      %1048 = vmatprep.subr.bf16.mxu0 0
      %1049 = vmatpush1.bf16.xpose.msra.mxu0 0
      %1050 = vmatprep.subr.bf16.mxu0 0
      %1051 = vmatpush1.bf16.xpose.msra.mxu0 %v1034
      %1052 = vmatprep.subr.bf16.mxu0 0
      %1053 = vmatpush2.bf16.xpose.msra.mxu0 0
      %1054 = vmatprep.subr.bf16.mxu0 0
      %1055 = vmatpush2.bf16.xpose.msra.mxu0 0
      %1056 = vmatprep.subr.bf16.mxu0 0
      %1057 = vmatpush2.bf16.xpose.msra.mxu0 0
      %1058 = vmatprep.subr.bf16.mxu0 0
      %1059 = vmatpush2.bf16.xpose.msra.mxu0 0
      %1060 = vmatprep.subr.bf16.mxu0 0
      %1061 = vmatpush2.bf16.xpose.msra.mxu0 0
      %1062 = vmatprep.subr.bf16.mxu0 0
      %1063 = vmatpush2.bf16.xpose.msra.mxu0 0
      %1064 = vmatprep.subr.bf16.mxu0 0
      %1065 = vmatpush2.bf16.xpose.msra.mxu0 0
      %1066 = vmatprep.subr.bf16.mxu0 0
      %1067 = vmatpush2.bf16.xpose.msra.mxu0 0
      %1068 = vmatprep.mubr.bf16.mxu0 0
      %1069 = vmatmul.mubr.bf16.gmra.mxu0 %v1031
      %v1070 = vpop.f32.mrf.mxu0
      %v1071 = vadd.f32 0.0, %v1070
      %v1072 = vpop.f32.mrf.mxu0
      %v1073 = vpop.f32.mrf.mxu0
      %v1074 = vpop.f32.mrf.mxu0
      %1075 = vdwg.mxu0
      %1076 = vrot.lane.b32.xlu0 %v784, 120
      %v1077 = vpop.permute.xlu0 %1076
      %1078 = vrot.lane.b32.xlu0 %v784, 88
      %v1079 = vpop.permute.xlu0 %1078
      %v1081 = vsel %vm805, %v1077, 0
      %v1084 = vsel %vm805, %v1079, 0
      %1086 = vmatprep.subr.bf16.mxu0 0
      %1087 = vmatpush1.bf16.xpose.msra.mxu0 0
      %1088 = vmatprep.subr.bf16.mxu0 0
      %1089 = vmatpush1.bf16.xpose.msra.mxu0 0
      %1090 = vmatprep.subr.bf16.mxu0 0
      %1091 = vmatpush1.bf16.xpose.msra.mxu0 0
      %1092 = vmatprep.subr.bf16.mxu0 0
      %1093 = vmatpush1.bf16.xpose.msra.mxu0 0
      %1094 = vmatprep.subr.bf16.mxu0 0
      %1095 = vmatpush1.bf16.xpose.msra.mxu0 0
      %1096 = vmatprep.subr.bf16.mxu0 0
      %1097 = vmatpush1.bf16.xpose.msra.mxu0 0
      %1098 = vmatprep.subr.bf16.mxu0 0
      %1099 = vmatpush1.bf16.xpose.msra.mxu0 0
      %1100 = vmatprep.subr.bf16.mxu0 0
      %1101 = vmatpush1.bf16.xpose.msra.mxu0 %v1084
      %1102 = vmatprep.subr.bf16.mxu0 0
      %1103 = vmatpush2.bf16.xpose.msra.mxu0 0
      %1104 = vmatprep.subr.bf16.mxu0 0
      %1105 = vmatpush2.bf16.xpose.msra.mxu0 0
      %1106 = vmatprep.subr.bf16.mxu0 0
      %1107 = vmatpush2.bf16.xpose.msra.mxu0 0
      %1108 = vmatprep.subr.bf16.mxu0 0
      %1109 = vmatpush2.bf16.xpose.msra.mxu0 0
      %1110 = vmatprep.subr.bf16.mxu0 0
      %1111 = vmatpush2.bf16.xpose.msra.mxu0 0
      %1112 = vmatprep.subr.bf16.mxu0 0
      %1113 = vmatpush2.bf16.xpose.msra.mxu0 0
      %1114 = vmatprep.subr.bf16.mxu0 0
      %1115 = vmatpush2.bf16.xpose.msra.mxu0 0
      %1116 = vmatprep.subr.bf16.mxu0 0
      %1117 = vmatpush2.bf16.xpose.msra.mxu0 0
      %1118 = vmatprep.mubr.bf16.mxu0 0
      %1119 = vmatmul.mubr.bf16.gmra.mxu0 %v1081
      %v1120 = vpop.f32.mrf.mxu0
      %v1121 = vadd.f32 0.0, %v1120
      %v1122 = vpop.f32.mrf.mxu0
      %v1123 = vpop.f32.mrf.mxu0
      %v1124 = vpop.f32.mrf.mxu0
      %1125 = vdwg.mxu0
      %v1126 = vmul.f32 %v1071, 0.35355338
      %v1127 = vmul.f32 %v1121, 0.35355338
      %v1128 = vadd.f32 %v1126, %v792
      %v1129 = vadd.f32 %v1127, %v796
      %v1130 = vsel %vm805, %v1128, -inf
      %1131 = vmax.xlane.f32.xlu0 %v1130
      %v1132 = vpop.xlane.xlu0 %1131
      %v1133 = vsel %vm805, %v1129, -inf
      %1134 = vmax.xlane.f32.xlu0 %v1133
      %v1135 = vpop.xlane.xlu0 %1134
      %v1136 = vsub.f32 %v1128, %v1132
      %v1137 = vsub.f32 %v1129, %v1135
      %v1138 = vmul.f32 %v1136, 1.442695
      %v1139 = vpow.pop %v1138
      %v1140 = vmul.f32 %v1137, 1.442695
      %v1141 = vpow.pop %v1140
      %v1142 = vsel %vm805, %v1139, 0.0
      %1143 = vadd.xlane.f32.xlu0 %v1142
      %v1144 = vpop.xlane.xlu0 %1143
      %v1145 = vsel %vm805, %v1141, 0.0
      %1146 = vadd.xlane.f32.xlu0 %v1145
      %v1147 = vpop.xlane.xlu0 %1146
      %v1148 = vrcp.pop %v1144
      %v1149 = vmul.f32 %v1139, %v1148
      %v1150 = vrcp.pop %v1147
      %v1151 = vmul.f32 %v1141, %v1150
      %v1152 = vpack.c.bf16 %v1149, %v1149
      %v1153 = vpack.c.bf16 %v1151, %v1151
      %1154 = vrot.lane.b32.xlu0 %v783, 56
      %v1155 = vpop.permute.xlu0 %1154
      %v1157 = vsel %vm805, %v1152, 0
      %v1160 = vsel %vm933, %v1155, 0
      %1162 = vmatprep.subr.bf16.mxu0 0
      %1163 = vmatpush1.bf16.msra.mxu0 0
      %1164 = vmatprep.subr.bf16.mxu0 0
      %1165 = vmatpush1.bf16.msra.mxu0 0
      %1166 = vmatprep.subr.bf16.mxu0 0
      %1167 = vmatpush1.bf16.msra.mxu0 0
      %1168 = vmatprep.subr.bf16.mxu0 0
      %1169 = vmatpush1.bf16.msra.mxu0 0
      %1170 = vmatprep.subr.bf16.mxu0 0
      %1171 = vmatpush1.bf16.msra.mxu0 0
      %1172 = vmatprep.subr.bf16.mxu0 0
      %1173 = vmatpush1.bf16.msra.mxu0 0
      %1174 = vmatprep.subr.bf16.mxu0 0
      %1175 = vmatpush1.bf16.msra.mxu0 0
      %1176 = vmatprep.subr.bf16.mxu0 0
      %1177 = vmatpush1.bf16.msra.mxu0 %v1160
      %1178 = vmatprep.subr.bf16.mxu0 0
      %1179 = vmatpush2.bf16.msra.mxu0 0
      %1180 = vmatprep.subr.bf16.mxu0 0
      %1181 = vmatpush2.bf16.msra.mxu0 0
      %1182 = vmatprep.subr.bf16.mxu0 0
      %1183 = vmatpush2.bf16.msra.mxu0 0
      %1184 = vmatprep.subr.bf16.mxu0 0
      %1185 = vmatpush2.bf16.msra.mxu0 0
      %1186 = vmatprep.subr.bf16.mxu0 0
      %1187 = vmatpush2.bf16.msra.mxu0 0
      %1188 = vmatprep.subr.bf16.mxu0 0
      %1189 = vmatpush2.bf16.msra.mxu0 0
      %1190 = vmatprep.subr.bf16.mxu0 0
      %1191 = vmatpush2.bf16.msra.mxu0 0
      %1192 = vmatprep.subr.bf16.mxu0 0
      %1193 = vmatpush2.bf16.msra.mxu0 0
      %1194 = vmatprep.mubr.bf16.mxu0 0
      %1195 = vmatmul.mubr.bf16.gmra.mxu0 %v1157
      %v1196 = vpop.f32.mrf.mxu0
      %v1197 = vadd.f32 0.0, %v1196
      %v1198 = vpop.f32.mrf.mxu0
      %v1199 = vpop.f32.mrf.mxu0
      %v1200 = vpop.f32.mrf.mxu0
      %1201 = vdwg.mxu0
      %1202 = vrot.lane.b32.xlu0 %v784, 56
      %v1203 = vpop.permute.xlu0 %1202
      %v1205 = vsel %vm805, %v1153, 0
      %v1208 = vsel %vm933, %v1203, 0
      %1210 = vmatprep.subr.bf16.mxu0 0
      %1211 = vmatpush1.bf16.msra.mxu0 0
      %1212 = vmatprep.subr.bf16.mxu0 0
      %1213 = vmatpush1.bf16.msra.mxu0 0
      %1214 = vmatprep.subr.bf16.mxu0 0
      %1215 = vmatpush1.bf16.msra.mxu0 0
      %1216 = vmatprep.subr.bf16.mxu0 0
      %1217 = vmatpush1.bf16.msra.mxu0 0
      %1218 = vmatprep.subr.bf16.mxu0 0
      %1219 = vmatpush1.bf16.msra.mxu0 0
      %1220 = vmatprep.subr.bf16.mxu0 0
      %1221 = vmatpush1.bf16.msra.mxu0 0
      %1222 = vmatprep.subr.bf16.mxu0 0
      %1223 = vmatpush1.bf16.msra.mxu0 0
      %1224 = vmatprep.subr.bf16.mxu0 0
      %1225 = vmatpush1.bf16.msra.mxu0 %v1208
      %1226 = vmatprep.subr.bf16.mxu0 0
      %1227 = vmatpush2.bf16.msra.mxu0 0
      %1228 = vmatprep.subr.bf16.mxu0 0
      %1229 = vmatpush2.bf16.msra.mxu0 0
      %1230 = vmatprep.subr.bf16.mxu0 0
      %1231 = vmatpush2.bf16.msra.mxu0 0
      %1232 = vmatprep.subr.bf16.mxu0 0
      %1233 = vmatpush2.bf16.msra.mxu0 0
      %1234 = vmatprep.subr.bf16.mxu0 0
      %1235 = vmatpush2.bf16.msra.mxu0 0
      %1236 = vmatprep.subr.bf16.mxu0 0
      %1237 = vmatpush2.bf16.msra.mxu0 0
      %1238 = vmatprep.subr.bf16.mxu0 0
      %1239 = vmatpush2.bf16.msra.mxu0 0
      %1240 = vmatprep.subr.bf16.mxu0 0
      %1241 = vmatpush2.bf16.msra.mxu0 0
      %1242 = vmatprep.mubr.bf16.mxu0 0
      %1243 = vmatmul.mubr.bf16.gmra.mxu0 %v1205
      %v1244 = vpop.f32.mrf.mxu0
      %v1245 = vadd.f32 0.0, %v1244
      %v1246 = vpop.f32.mrf.mxu0
      %v1247 = vpop.f32.mrf.mxu0
      %v1248 = vpop.f32.mrf.mxu0
      %1249 = vdwg.mxu0
      %v1250 = vpack.c.bf16 %v1245, %v1197
      %v1252 = vsel %vm805, %v1250, 0
      %v1255 = vsel %vm933, %v800, 0
      %1257 = vmatprep.subr.bf16.mxu0 0
      %1258 = vmatpush1.bf16.msra.mxu0 0
      %1259 = vmatprep.subr.bf16.mxu0 0
      %1260 = vmatpush1.bf16.msra.mxu0 0
      %1261 = vmatprep.subr.bf16.mxu0 0
      %1262 = vmatpush1.bf16.msra.mxu0 0
      %1263 = vmatprep.subr.bf16.mxu0 0
      %1264 = vmatpush1.bf16.msra.mxu0 0
      %1265 = vmatprep.subr.bf16.mxu0 0
      %1266 = vmatpush1.bf16.msra.mxu0 0
      %1267 = vmatprep.subr.bf16.mxu0 0
      %1268 = vmatpush1.bf16.msra.mxu0 0
      %1269 = vmatprep.subr.bf16.mxu0 0
      %1270 = vmatpush1.bf16.msra.mxu0 0
      %1271 = vmatprep.subr.bf16.mxu0 0
      %1272 = vmatpush1.bf16.msra.mxu0 %v1255
      %1273 = vmatprep.subr.bf16.mxu0 0
      %1274 = vmatpush2.bf16.msra.mxu0 0
      %1275 = vmatprep.subr.bf16.mxu0 0
      %1276 = vmatpush2.bf16.msra.mxu0 0
      %1277 = vmatprep.subr.bf16.mxu0 0
      %1278 = vmatpush2.bf16.msra.mxu0 0
      %1279 = vmatprep.subr.bf16.mxu0 0
      %1280 = vmatpush2.bf16.msra.mxu0 0
      %1281 = vmatprep.subr.bf16.mxu0 0
      %1282 = vmatpush2.bf16.msra.mxu0 0
      %1283 = vmatprep.subr.bf16.mxu0 0
      %1284 = vmatpush2.bf16.msra.mxu0 0
      %1285 = vmatprep.subr.bf16.mxu0 0
      %1286 = vmatpush2.bf16.msra.mxu0 0
      %1287 = vmatprep.subr.bf16.mxu0 0
      %1288 = vmatpush2.bf16.msra.mxu0 0
      %1289 = vmatprep.mubr.bf16.mxu0 0
      %1290 = vmatmul.mubr.bf16.gmra.mxu0 %v1252
      %v1291 = vpop.f32.mrf.mxu0
      %v1292 = vadd.f32 0.0, %v1291
      %v1293 = vpop.f32.mrf.mxu0
      %v1294 = vpop.f32.mrf.mxu0
      %v1295 = vadd.f32 0.0, %v1294
      %v1296 = vpop.f32.mrf.mxu0
      %1297 = vdwg.mxu0
      %v1299 = vsel %vm805, %v1025, 0
      %v1302 = vsel %vm933, %v799, 0
      %1304 = vmatprep.subr.bf16.mxu0 0
      %1305 = vmatpush1.bf16.msra.mxu0 0
      %1306 = vmatprep.subr.bf16.mxu0 0
      %1307 = vmatpush1.bf16.msra.mxu0 0
      %1308 = vmatprep.subr.bf16.mxu0 0
      %1309 = vmatpush1.bf16.msra.mxu0 0
      %1310 = vmatprep.subr.bf16.mxu0 0
      %1311 = vmatpush1.bf16.msra.mxu0 0
      %1312 = vmatprep.subr.bf16.mxu0 0
      %1313 = vmatpush1.bf16.msra.mxu0 0
      %1314 = vmatprep.subr.bf16.mxu0 0
      %1315 = vmatpush1.bf16.msra.mxu0 0
      %1316 = vmatprep.subr.bf16.mxu0 0
      %1317 = vmatpush1.bf16.msra.mxu0 0
      %1318 = vmatprep.subr.bf16.mxu0 0
      %1319 = vmatpush1.bf16.msra.mxu0 %v1302
      %1320 = vmatprep.subr.bf16.mxu0 0
      %1321 = vmatpush2.bf16.msra.mxu0 0
      %1322 = vmatprep.subr.bf16.mxu0 0
      %1323 = vmatpush2.bf16.msra.mxu0 0
      %1324 = vmatprep.subr.bf16.mxu0 0
      %1325 = vmatpush2.bf16.msra.mxu0 0
      %1326 = vmatprep.subr.bf16.mxu0 0
      %1327 = vmatpush2.bf16.msra.mxu0 0
      %1328 = vmatprep.subr.bf16.mxu0 0
      %1329 = vmatpush2.bf16.msra.mxu0 0
      %1330 = vmatprep.subr.bf16.mxu0 0
      %1331 = vmatpush2.bf16.msra.mxu0 0
      %1332 = vmatprep.subr.bf16.mxu0 0
      %1333 = vmatpush2.bf16.msra.mxu0 0
      %1334 = vmatprep.subr.bf16.mxu0 0
      %1335 = vmatpush2.bf16.msra.mxu0 0
      %1336 = vmatprep.mubr.bf16.mxu0 0
      %1337 = vmatmul.mubr.bf16.gmra.mxu0 %v1299
      %v1338 = vpop.f32.mrf.mxu0
      %v1339 = vadd.f32 %v1292, %v1338
      %v1340 = vpop.f32.mrf.mxu0
      %v1341 = vpop.f32.mrf.mxu0
      %v1342 = vadd.f32 %v1295, %v1341
      %v1343 = vpop.f32.mrf.mxu0
      %1344 = vdwg.mxu0
      %1345 = vrot.lane.b32.xlu0 %v783, 112
      %v1346 = vpop.permute.xlu0 %1345
      %1347 = vrot.lane.b32.xlu0 %v783, 80
      %v1348 = vpop.permute.xlu0 %1347
      %v1350 = vsel %vm805, %v1346, 0
      %v1353 = vsel %vm805, %v1348, 0
      %1355 = vmatprep.subr.bf16.mxu0 0
      %1356 = vmatpush1.bf16.xpose.msra.mxu0 0
      %1357 = vmatprep.subr.bf16.mxu0 0
      %1358 = vmatpush1.bf16.xpose.msra.mxu0 0
      %1359 = vmatprep.subr.bf16.mxu0 0
      %1360 = vmatpush1.bf16.xpose.msra.mxu0 0
      %1361 = vmatprep.subr.bf16.mxu0 0
      %1362 = vmatpush1.bf16.xpose.msra.mxu0 0
      %1363 = vmatprep.subr.bf16.mxu0 0
      %1364 = vmatpush1.bf16.xpose.msra.mxu0 0
      %1365 = vmatprep.subr.bf16.mxu0 0
      %1366 = vmatpush1.bf16.xpose.msra.mxu0 0
      %1367 = vmatprep.subr.bf16.mxu0 0
      %1368 = vmatpush1.bf16.xpose.msra.mxu0 0
      %1369 = vmatprep.subr.bf16.mxu0 0
      %1370 = vmatpush1.bf16.xpose.msra.mxu0 %v1353
      %1371 = vmatprep.subr.bf16.mxu0 0
      %1372 = vmatpush2.bf16.xpose.msra.mxu0 0
      %1373 = vmatprep.subr.bf16.mxu0 0
      %1374 = vmatpush2.bf16.xpose.msra.mxu0 0
      %1375 = vmatprep.subr.bf16.mxu0 0
      %1376 = vmatpush2.bf16.xpose.msra.mxu0 0
      %1377 = vmatprep.subr.bf16.mxu0 0
      %1378 = vmatpush2.bf16.xpose.msra.mxu0 0
      %1379 = vmatprep.subr.bf16.mxu0 0
      %1380 = vmatpush2.bf16.xpose.msra.mxu0 0
      %1381 = vmatprep.subr.bf16.mxu0 0
      %1382 = vmatpush2.bf16.xpose.msra.mxu0 0
      %1383 = vmatprep.subr.bf16.mxu0 0
      %1384 = vmatpush2.bf16.xpose.msra.mxu0 0
      %1385 = vmatprep.subr.bf16.mxu0 0
      %1386 = vmatpush2.bf16.xpose.msra.mxu0 0
      %1387 = vmatprep.mubr.bf16.mxu0 0
      %1388 = vmatmul.mubr.bf16.gmra.mxu0 %v1350
      %v1389 = vpop.f32.mrf.mxu0
      %v1390 = vadd.f32 0.0, %v1389
      %v1391 = vpop.f32.mrf.mxu0
      %v1392 = vpop.f32.mrf.mxu0
      %v1393 = vpop.f32.mrf.mxu0
      %1394 = vdwg.mxu0
      %1395 = vrot.lane.b32.xlu0 %v784, 112
      %v1396 = vpop.permute.xlu0 %1395
      %1397 = vrot.lane.b32.xlu0 %v784, 80
      %v1398 = vpop.permute.xlu0 %1397
      %v1400 = vsel %vm805, %v1396, 0
      %v1403 = vsel %vm805, %v1398, 0
      %1405 = vmatprep.subr.bf16.mxu0 0
      %1406 = vmatpush1.bf16.xpose.msra.mxu0 0
      %1407 = vmatprep.subr.bf16.mxu0 0
      %1408 = vmatpush1.bf16.xpose.msra.mxu0 0
      %1409 = vmatprep.subr.bf16.mxu0 0
      %1410 = vmatpush1.bf16.xpose.msra.mxu0 0
      %1411 = vmatprep.subr.bf16.mxu0 0
      %1412 = vmatpush1.bf16.xpose.msra.mxu0 0
      %1413 = vmatprep.subr.bf16.mxu0 0
      %1414 = vmatpush1.bf16.xpose.msra.mxu0 0
      %1415 = vmatprep.subr.bf16.mxu0 0
      %1416 = vmatpush1.bf16.xpose.msra.mxu0 0
      %1417 = vmatprep.subr.bf16.mxu0 0
      %1418 = vmatpush1.bf16.xpose.msra.mxu0 0
      %1419 = vmatprep.subr.bf16.mxu0 0
      %1420 = vmatpush1.bf16.xpose.msra.mxu0 %v1403
      %1421 = vmatprep.subr.bf16.mxu0 0
      %1422 = vmatpush2.bf16.xpose.msra.mxu0 0
      %1423 = vmatprep.subr.bf16.mxu0 0
      %1424 = vmatpush2.bf16.xpose.msra.mxu0 0
      %1425 = vmatprep.subr.bf16.mxu0 0
      %1426 = vmatpush2.bf16.xpose.msra.mxu0 0
      %1427 = vmatprep.subr.bf16.mxu0 0
      %1428 = vmatpush2.bf16.xpose.msra.mxu0 0
      %1429 = vmatprep.subr.bf16.mxu0 0
      %1430 = vmatpush2.bf16.xpose.msra.mxu0 0
      %1431 = vmatprep.subr.bf16.mxu0 0
      %1432 = vmatpush2.bf16.xpose.msra.mxu0 0
      %1433 = vmatprep.subr.bf16.mxu0 0
      %1434 = vmatpush2.bf16.xpose.msra.mxu0 0
      %1435 = vmatprep.subr.bf16.mxu0 0
      %1436 = vmatpush2.bf16.xpose.msra.mxu0 0
      %1437 = vmatprep.mubr.bf16.mxu0 0
      %1438 = vmatmul.mubr.bf16.gmra.mxu0 %v1400
      %v1439 = vpop.f32.mrf.mxu0
      %v1440 = vadd.f32 0.0, %v1439
      %v1441 = vpop.f32.mrf.mxu0
      %v1442 = vpop.f32.mrf.mxu0
      %v1443 = vpop.f32.mrf.mxu0
      %1444 = vdwg.mxu0
      %v1445 = vmul.f32 %v1390, 0.35355338
      %v1446 = vmul.f32 %v1440, 0.35355338
      %v1447 = vadd.f32 %v1445, %v792
      %v1448 = vadd.f32 %v1446, %v796
      %v1449 = vsel %vm805, %v1447, -inf
      %1450 = vmax.xlane.f32.xlu0 %v1449
      %v1451 = vpop.xlane.xlu0 %1450
      %v1452 = vsel %vm805, %v1448, -inf
      %1453 = vmax.xlane.f32.xlu0 %v1452
      %v1454 = vpop.xlane.xlu0 %1453
      %v1455 = vsub.f32 %v1447, %v1451
      %v1456 = vsub.f32 %v1448, %v1454
      %v1457 = vmul.f32 %v1455, 1.442695
      %v1458 = vpow.pop %v1457
      %v1459 = vmul.f32 %v1456, 1.442695
      %v1460 = vpow.pop %v1459
      %v1461 = vsel %vm805, %v1458, 0.0
      %1462 = vadd.xlane.f32.xlu0 %v1461
      %v1463 = vpop.xlane.xlu0 %1462
      %v1464 = vsel %vm805, %v1460, 0.0
      %1465 = vadd.xlane.f32.xlu0 %v1464
      %v1466 = vpop.xlane.xlu0 %1465
      %v1467 = vrcp.pop %v1463
      %v1468 = vmul.f32 %v1458, %v1467
      %v1469 = vrcp.pop %v1466
      %v1470 = vmul.f32 %v1460, %v1469
      %v1471 = vpack.c.bf16 %v1468, %v1468
      %v1472 = vpack.c.bf16 %v1470, %v1470
      %1473 = vrot.lane.b32.xlu0 %v783, 48
      %v1474 = vpop.permute.xlu0 %1473
      %v1476 = vsel %vm805, %v1471, 0
      %v1479 = vsel %vm933, %v1474, 0
      %1481 = vmatprep.subr.bf16.mxu0 0
      %1482 = vmatpush1.bf16.msra.mxu0 0
      %1483 = vmatprep.subr.bf16.mxu0 0
      %1484 = vmatpush1.bf16.msra.mxu0 0
      %1485 = vmatprep.subr.bf16.mxu0 0
      %1486 = vmatpush1.bf16.msra.mxu0 0
      %1487 = vmatprep.subr.bf16.mxu0 0
      %1488 = vmatpush1.bf16.msra.mxu0 0
      %1489 = vmatprep.subr.bf16.mxu0 0
      %1490 = vmatpush1.bf16.msra.mxu0 0
      %1491 = vmatprep.subr.bf16.mxu0 0
      %1492 = vmatpush1.bf16.msra.mxu0 0
      %1493 = vmatprep.subr.bf16.mxu0 0
      %1494 = vmatpush1.bf16.msra.mxu0 0
      %1495 = vmatprep.subr.bf16.mxu0 0
      %1496 = vmatpush1.bf16.msra.mxu0 %v1479
      %1497 = vmatprep.subr.bf16.mxu0 0
      %1498 = vmatpush2.bf16.msra.mxu0 0
      %1499 = vmatprep.subr.bf16.mxu0 0
      %1500 = vmatpush2.bf16.msra.mxu0 0
      %1501 = vmatprep.subr.bf16.mxu0 0
      %1502 = vmatpush2.bf16.msra.mxu0 0
      %1503 = vmatprep.subr.bf16.mxu0 0
      %1504 = vmatpush2.bf16.msra.mxu0 0
      %1505 = vmatprep.subr.bf16.mxu0 0
      %1506 = vmatpush2.bf16.msra.mxu0 0
      %1507 = vmatprep.subr.bf16.mxu0 0
      %1508 = vmatpush2.bf16.msra.mxu0 0
      %1509 = vmatprep.subr.bf16.mxu0 0
      %1510 = vmatpush2.bf16.msra.mxu0 0
      %1511 = vmatprep.subr.bf16.mxu0 0
      %1512 = vmatpush2.bf16.msra.mxu0 0
      %1513 = vmatprep.mubr.bf16.mxu0 0
      %1514 = vmatmul.mubr.bf16.gmra.mxu0 %v1476
      %v1515 = vpop.f32.mrf.mxu0
      %v1516 = vadd.f32 0.0, %v1515
      %v1517 = vpop.f32.mrf.mxu0
      %v1518 = vpop.f32.mrf.mxu0
      %v1519 = vpop.f32.mrf.mxu0
      %1520 = vdwg.mxu0
      %1521 = vrot.lane.b32.xlu0 %v784, 48
      %v1522 = vpop.permute.xlu0 %1521
      %v1524 = vsel %vm805, %v1472, 0
      %v1527 = vsel %vm933, %v1522, 0
      %1529 = vmatprep.subr.bf16.mxu0 0
      %1530 = vmatpush1.bf16.msra.mxu0 0
      %1531 = vmatprep.subr.bf16.mxu0 0
      %1532 = vmatpush1.bf16.msra.mxu0 0
      %1533 = vmatprep.subr.bf16.mxu0 0
      %1534 = vmatpush1.bf16.msra.mxu0 0
      %1535 = vmatprep.subr.bf16.mxu0 0
      %1536 = vmatpush1.bf16.msra.mxu0 0
      %1537 = vmatprep.subr.bf16.mxu0 0
      %1538 = vmatpush1.bf16.msra.mxu0 0
      %1539 = vmatprep.subr.bf16.mxu0 0
      %1540 = vmatpush1.bf16.msra.mxu0 0
      %1541 = vmatprep.subr.bf16.mxu0 0
      %1542 = vmatpush1.bf16.msra.mxu0 0
      %1543 = vmatprep.subr.bf16.mxu0 0
      %1544 = vmatpush1.bf16.msra.mxu0 %v1527
      %1545 = vmatprep.subr.bf16.mxu0 0
      %1546 = vmatpush2.bf16.msra.mxu0 0
      %1547 = vmatprep.subr.bf16.mxu0 0
      %1548 = vmatpush2.bf16.msra.mxu0 0
      %1549 = vmatprep.subr.bf16.mxu0 0
      %1550 = vmatpush2.bf16.msra.mxu0 0
      %1551 = vmatprep.subr.bf16.mxu0 0
      %1552 = vmatpush2.bf16.msra.mxu0 0
      %1553 = vmatprep.subr.bf16.mxu0 0
      %1554 = vmatpush2.bf16.msra.mxu0 0
      %1555 = vmatprep.subr.bf16.mxu0 0
      %1556 = vmatpush2.bf16.msra.mxu0 0
      %1557 = vmatprep.subr.bf16.mxu0 0
      %1558 = vmatpush2.bf16.msra.mxu0 0
      %1559 = vmatprep.subr.bf16.mxu0 0
      %1560 = vmatpush2.bf16.msra.mxu0 0
      %1561 = vmatprep.mubr.bf16.mxu0 0
      %1562 = vmatmul.mubr.bf16.gmra.mxu0 %v1524
      %v1563 = vpop.f32.mrf.mxu0
      %v1564 = vadd.f32 0.0, %v1563
      %v1565 = vpop.f32.mrf.mxu0
      %v1566 = vpop.f32.mrf.mxu0
      %v1567 = vpop.f32.mrf.mxu0
      %1568 = vdwg.mxu0
      %v1569 = vpack.c.bf16 %v1564, %v1516
      %v1571 = vsel %vm805, %v1569, 0
      %v1574 = vsel %vm933, %v801, 0
      %1576 = vmatprep.subr.bf16.mxu0 0
      %1577 = vmatpush1.bf16.msra.mxu0 0
      %1578 = vmatprep.subr.bf16.mxu0 0
      %1579 = vmatpush1.bf16.msra.mxu0 0
      %1580 = vmatprep.subr.bf16.mxu0 0
      %1581 = vmatpush1.bf16.msra.mxu0 0
      %1582 = vmatprep.subr.bf16.mxu0 0
      %1583 = vmatpush1.bf16.msra.mxu0 0
      %1584 = vmatprep.subr.bf16.mxu0 0
      %1585 = vmatpush1.bf16.msra.mxu0 0
      %1586 = vmatprep.subr.bf16.mxu0 0
      %1587 = vmatpush1.bf16.msra.mxu0 0
      %1588 = vmatprep.subr.bf16.mxu0 0
      %1589 = vmatpush1.bf16.msra.mxu0 0
      %1590 = vmatprep.subr.bf16.mxu0 0
      %1591 = vmatpush1.bf16.msra.mxu0 %v1574
      %1592 = vmatprep.subr.bf16.mxu0 0
      %1593 = vmatpush2.bf16.msra.mxu0 0
      %1594 = vmatprep.subr.bf16.mxu0 0
      %1595 = vmatpush2.bf16.msra.mxu0 0
      %1596 = vmatprep.subr.bf16.mxu0 0
      %1597 = vmatpush2.bf16.msra.mxu0 0
      %1598 = vmatprep.subr.bf16.mxu0 0
      %1599 = vmatpush2.bf16.msra.mxu0 0
      %1600 = vmatprep.subr.bf16.mxu0 0
      %1601 = vmatpush2.bf16.msra.mxu0 0
      %1602 = vmatprep.subr.bf16.mxu0 0
      %1603 = vmatpush2.bf16.msra.mxu0 0
      %1604 = vmatprep.subr.bf16.mxu0 0
      %1605 = vmatpush2.bf16.msra.mxu0 0
      %1606 = vmatprep.subr.bf16.mxu0 0
      %1607 = vmatpush2.bf16.msra.mxu0 0
      %1608 = vmatprep.mubr.bf16.mxu0 0
      %1609 = vmatmul.mubr.bf16.gmra.mxu0 %v1571
      %v1610 = vpop.f32.mrf.mxu0
      %v1611 = vadd.f32 0.0, %v1610
      %v1612 = vpop.f32.mrf.mxu0
      %v1613 = vpop.f32.mrf.mxu0
      %v1614 = vadd.f32 0.0, %v1613
      %v1615 = vpop.f32.mrf.mxu0
      %1616 = vdwg.mxu0
      %v1617 = vadd.f32 %v1339, %v1611
      %v1618 = vadd.f32 %v1342, %v1614
      %1619 = vrot.lane.b32.xlu0 %v783, 104
      %v1620 = vpop.permute.xlu0 %1619
      %1621 = vrot.lane.b32.xlu0 %v783, 72
      %v1622 = vpop.permute.xlu0 %1621
      %v1624 = vsel %vm805, %v1620, 0
      %v1627 = vsel %vm805, %v1622, 0
      %1629 = vmatprep.subr.bf16.mxu0 0
      %1630 = vmatpush1.bf16.xpose.msra.mxu0 0
      %1631 = vmatprep.subr.bf16.mxu0 0
      %1632 = vmatpush1.bf16.xpose.msra.mxu0 0
      %1633 = vmatprep.subr.bf16.mxu0 0
      %1634 = vmatpush1.bf16.xpose.msra.mxu0 0
      %1635 = vmatprep.subr.bf16.mxu0 0
      %1636 = vmatpush1.bf16.xpose.msra.mxu0 0
      %1637 = vmatprep.subr.bf16.mxu0 0
      %1638 = vmatpush1.bf16.xpose.msra.mxu0 0
      %1639 = vmatprep.subr.bf16.mxu0 0
      %1640 = vmatpush1.bf16.xpose.msra.mxu0 0
      %1641 = vmatprep.subr.bf16.mxu0 0
      %1642 = vmatpush1.bf16.xpose.msra.mxu0 0
      %1643 = vmatprep.subr.bf16.mxu0 0
      %1644 = vmatpush1.bf16.xpose.msra.mxu0 %v1627
      %1645 = vmatprep.subr.bf16.mxu0 0
      %1646 = vmatpush2.bf16.xpose.msra.mxu0 0
      %1647 = vmatprep.subr.bf16.mxu0 0
      %1648 = vmatpush2.bf16.xpose.msra.mxu0 0
      %1649 = vmatprep.subr.bf16.mxu0 0
      %1650 = vmatpush2.bf16.xpose.msra.mxu0 0
      %1651 = vmatprep.subr.bf16.mxu0 0
      %1652 = vmatpush2.bf16.xpose.msra.mxu0 0
      %1653 = vmatprep.subr.bf16.mxu0 0
      %1654 = vmatpush2.bf16.xpose.msra.mxu0 0
      %1655 = vmatprep.subr.bf16.mxu0 0
      %1656 = vmatpush2.bf16.xpose.msra.mxu0 0
      %1657 = vmatprep.subr.bf16.mxu0 0
      %1658 = vmatpush2.bf16.xpose.msra.mxu0 0
      %1659 = vmatprep.subr.bf16.mxu0 0
      %1660 = vmatpush2.bf16.xpose.msra.mxu0 0
      %1661 = vmatprep.mubr.bf16.mxu0 0
      %1662 = vmatmul.mubr.bf16.gmra.mxu0 %v1624
      %v1663 = vpop.f32.mrf.mxu0
      %v1664 = vadd.f32 0.0, %v1663
      %v1665 = vpop.f32.mrf.mxu0
      %v1666 = vpop.f32.mrf.mxu0
      %v1667 = vpop.f32.mrf.mxu0
      %1668 = vdwg.mxu0
      %1669 = vrot.lane.b32.xlu0 %v784, 104
      %v1670 = vpop.permute.xlu0 %1669
      %1671 = vrot.lane.b32.xlu0 %v784, 72
      %v1672 = vpop.permute.xlu0 %1671
      %v1674 = vsel %vm805, %v1670, 0
      %v1677 = vsel %vm805, %v1672, 0
      %1679 = vmatprep.subr.bf16.mxu0 0
      %1680 = vmatpush1.bf16.xpose.msra.mxu0 0
      %1681 = vmatprep.subr.bf16.mxu0 0
      %1682 = vmatpush1.bf16.xpose.msra.mxu0 0
      %1683 = vmatprep.subr.bf16.mxu0 0
      %1684 = vmatpush1.bf16.xpose.msra.mxu0 0
      %1685 = vmatprep.subr.bf16.mxu0 0
      %1686 = vmatpush1.bf16.xpose.msra.mxu0 0
      %1687 = vmatprep.subr.bf16.mxu0 0
      %1688 = vmatpush1.bf16.xpose.msra.mxu0 0
      %1689 = vmatprep.subr.bf16.mxu0 0
      %1690 = vmatpush1.bf16.xpose.msra.mxu0 0
      %1691 = vmatprep.subr.bf16.mxu0 0
      %1692 = vmatpush1.bf16.xpose.msra.mxu0 0
      %1693 = vmatprep.subr.bf16.mxu0 0
      %1694 = vmatpush1.bf16.xpose.msra.mxu0 %v1677
      %1695 = vmatprep.subr.bf16.mxu0 0
      %1696 = vmatpush2.bf16.xpose.msra.mxu0 0
      %1697 = vmatprep.subr.bf16.mxu0 0
      %1698 = vmatpush2.bf16.xpose.msra.mxu0 0
      %1699 = vmatprep.subr.bf16.mxu0 0
      %1700 = vmatpush2.bf16.xpose.msra.mxu0 0
      %1701 = vmatprep.subr.bf16.mxu0 0
      %1702 = vmatpush2.bf16.xpose.msra.mxu0 0
      %1703 = vmatprep.subr.bf16.mxu0 0
      %1704 = vmatpush2.bf16.xpose.msra.mxu0 0
      %1705 = vmatprep.subr.bf16.mxu0 0
      %1706 = vmatpush2.bf16.xpose.msra.mxu0 0
      %1707 = vmatprep.subr.bf16.mxu0 0
      %1708 = vmatpush2.bf16.xpose.msra.mxu0 0
      %1709 = vmatprep.subr.bf16.mxu0 0
      %1710 = vmatpush2.bf16.xpose.msra.mxu0 0
      %1711 = vmatprep.mubr.bf16.mxu0 0
      %1712 = vmatmul.mubr.bf16.gmra.mxu0 %v1674
      %v1713 = vpop.f32.mrf.mxu0
      %v1714 = vadd.f32 0.0, %v1713
      %v1715 = vpop.f32.mrf.mxu0
      %v1716 = vpop.f32.mrf.mxu0
      %v1717 = vpop.f32.mrf.mxu0
      %1718 = vdwg.mxu0
      %v1719 = vmul.f32 %v1664, 0.35355338
      %v1720 = vmul.f32 %v1714, 0.35355338
      %v1721 = vadd.f32 %v1719, %v792
      %v1722 = vadd.f32 %v1720, %v796
      %v1723 = vsel %vm805, %v1721, -inf
      %1724 = vmax.xlane.f32.xlu0 %v1723
      %v1725 = vpop.xlane.xlu0 %1724
      %v1726 = vsel %vm805, %v1722, -inf
      %1727 = vmax.xlane.f32.xlu0 %v1726
      %v1728 = vpop.xlane.xlu0 %1727
      %v1729 = vsub.f32 %v1721, %v1725
      %v1730 = vsub.f32 %v1722, %v1728
      %v1731 = vmul.f32 %v1729, 1.442695
      %v1732 = vpow.pop %v1731
      %v1733 = vmul.f32 %v1730, 1.442695
      %v1734 = vpow.pop %v1733
      %v1735 = vsel %vm805, %v1732, 0.0
      %1736 = vadd.xlane.f32.xlu0 %v1735
      %v1737 = vpop.xlane.xlu0 %1736
      %v1738 = vsel %vm805, %v1734, 0.0
      %1739 = vadd.xlane.f32.xlu0 %v1738
      %v1740 = vpop.xlane.xlu0 %1739
      %v1741 = vrcp.pop %v1737
      %v1742 = vmul.f32 %v1732, %v1741
      %v1743 = vrcp.pop %v1740
      %v1744 = vmul.f32 %v1734, %v1743
      %v1745 = vpack.c.bf16 %v1742, %v1742
      %v1746 = vpack.c.bf16 %v1744, %v1744
      %1747 = vrot.lane.b32.xlu0 %v783, 40
      %v1748 = vpop.permute.xlu0 %1747
      %v1750 = vsel %vm805, %v1745, 0
      %v1753 = vsel %vm933, %v1748, 0
      %1755 = vmatprep.subr.bf16.mxu0 0
      %1756 = vmatpush1.bf16.msra.mxu0 0
      %1757 = vmatprep.subr.bf16.mxu0 0
      %1758 = vmatpush1.bf16.msra.mxu0 0
      %1759 = vmatprep.subr.bf16.mxu0 0
      %1760 = vmatpush1.bf16.msra.mxu0 0
      %1761 = vmatprep.subr.bf16.mxu0 0
      %1762 = vmatpush1.bf16.msra.mxu0 0
      %1763 = vmatprep.subr.bf16.mxu0 0
      %1764 = vmatpush1.bf16.msra.mxu0 0
      %1765 = vmatprep.subr.bf16.mxu0 0
      %1766 = vmatpush1.bf16.msra.mxu0 0
      %1767 = vmatprep.subr.bf16.mxu0 0
      %1768 = vmatpush1.bf16.msra.mxu0 0
      %1769 = vmatprep.subr.bf16.mxu0 0
      %1770 = vmatpush1.bf16.msra.mxu0 %v1753
      %1771 = vmatprep.subr.bf16.mxu0 0
      %1772 = vmatpush2.bf16.msra.mxu0 0
      %1773 = vmatprep.subr.bf16.mxu0 0
      %1774 = vmatpush2.bf16.msra.mxu0 0
      %1775 = vmatprep.subr.bf16.mxu0 0
      %1776 = vmatpush2.bf16.msra.mxu0 0
      %1777 = vmatprep.subr.bf16.mxu0 0
      %1778 = vmatpush2.bf16.msra.mxu0 0
      %1779 = vmatprep.subr.bf16.mxu0 0
      %1780 = vmatpush2.bf16.msra.mxu0 0
      %1781 = vmatprep.subr.bf16.mxu0 0
      %1782 = vmatpush2.bf16.msra.mxu0 0
      %1783 = vmatprep.subr.bf16.mxu0 0
      %1784 = vmatpush2.bf16.msra.mxu0 0
      %1785 = vmatprep.subr.bf16.mxu0 0
      %1786 = vmatpush2.bf16.msra.mxu0 0
      %1787 = vmatprep.mubr.bf16.mxu0 0
      %1788 = vmatmul.mubr.bf16.gmra.mxu0 %v1750
      %v1789 = vpop.f32.mrf.mxu0
      %v1790 = vadd.f32 0.0, %v1789
      %v1791 = vpop.f32.mrf.mxu0
      %v1792 = vpop.f32.mrf.mxu0
      %v1793 = vpop.f32.mrf.mxu0
      %1794 = vdwg.mxu0
      %1795 = vrot.lane.b32.xlu0 %v784, 40
      %v1796 = vpop.permute.xlu0 %1795
      %v1798 = vsel %vm805, %v1746, 0
      %v1801 = vsel %vm933, %v1796, 0
      %1803 = vmatprep.subr.bf16.mxu0 0
      %1804 = vmatpush1.bf16.msra.mxu0 0
      %1805 = vmatprep.subr.bf16.mxu0 0
      %1806 = vmatpush1.bf16.msra.mxu0 0
      %1807 = vmatprep.subr.bf16.mxu0 0
      %1808 = vmatpush1.bf16.msra.mxu0 0
      %1809 = vmatprep.subr.bf16.mxu0 0
      %1810 = vmatpush1.bf16.msra.mxu0 0
      %1811 = vmatprep.subr.bf16.mxu0 0
      %1812 = vmatpush1.bf16.msra.mxu0 0
      %1813 = vmatprep.subr.bf16.mxu0 0
      %1814 = vmatpush1.bf16.msra.mxu0 0
      %1815 = vmatprep.subr.bf16.mxu0 0
      %1816 = vmatpush1.bf16.msra.mxu0 0
      %1817 = vmatprep.subr.bf16.mxu0 0
      %1818 = vmatpush1.bf16.msra.mxu0 %v1801
      %1819 = vmatprep.subr.bf16.mxu0 0
      %1820 = vmatpush2.bf16.msra.mxu0 0
      %1821 = vmatprep.subr.bf16.mxu0 0
      %1822 = vmatpush2.bf16.msra.mxu0 0
      %1823 = vmatprep.subr.bf16.mxu0 0
      %1824 = vmatpush2.bf16.msra.mxu0 0
      %1825 = vmatprep.subr.bf16.mxu0 0
      %1826 = vmatpush2.bf16.msra.mxu0 0
      %1827 = vmatprep.subr.bf16.mxu0 0
      %1828 = vmatpush2.bf16.msra.mxu0 0
      %1829 = vmatprep.subr.bf16.mxu0 0
      %1830 = vmatpush2.bf16.msra.mxu0 0
      %1831 = vmatprep.subr.bf16.mxu0 0
      %1832 = vmatpush2.bf16.msra.mxu0 0
      %1833 = vmatprep.subr.bf16.mxu0 0
      %1834 = vmatpush2.bf16.msra.mxu0 0
      %1835 = vmatprep.mubr.bf16.mxu0 0
      %1836 = vmatmul.mubr.bf16.gmra.mxu0 %v1798
      %v1837 = vpop.f32.mrf.mxu0
      %v1838 = vadd.f32 0.0, %v1837
      %v1839 = vpop.f32.mrf.mxu0
      %v1840 = vpop.f32.mrf.mxu0
      %v1841 = vpop.f32.mrf.mxu0
      %1842 = vdwg.mxu0
      %v1843 = vpack.c.bf16 %v1838, %v1790
      %v1845 = vsel %vm805, %v1843, 0
      %v1848 = vsel %vm933, %v802, 0
      %1850 = vmatprep.subr.bf16.mxu0 0
      %1851 = vmatpush1.bf16.msra.mxu0 0
      %1852 = vmatprep.subr.bf16.mxu0 0
      %1853 = vmatpush1.bf16.msra.mxu0 0
      %1854 = vmatprep.subr.bf16.mxu0 0
      %1855 = vmatpush1.bf16.msra.mxu0 0
      %1856 = vmatprep.subr.bf16.mxu0 0
      %1857 = vmatpush1.bf16.msra.mxu0 0
      %1858 = vmatprep.subr.bf16.mxu0 0
      %1859 = vmatpush1.bf16.msra.mxu0 0
      %1860 = vmatprep.subr.bf16.mxu0 0
      %1861 = vmatpush1.bf16.msra.mxu0 0
      %1862 = vmatprep.subr.bf16.mxu0 0
      %1863 = vmatpush1.bf16.msra.mxu0 0
      %1864 = vmatprep.subr.bf16.mxu0 0
      %1865 = vmatpush1.bf16.msra.mxu0 %v1848
      %1866 = vmatprep.subr.bf16.mxu0 0
      %1867 = vmatpush2.bf16.msra.mxu0 0
      %1868 = vmatprep.subr.bf16.mxu0 0
      %1869 = vmatpush2.bf16.msra.mxu0 0
      %1870 = vmatprep.subr.bf16.mxu0 0
      %1871 = vmatpush2.bf16.msra.mxu0 0
      %1872 = vmatprep.subr.bf16.mxu0 0
      %1873 = vmatpush2.bf16.msra.mxu0 0
      %1874 = vmatprep.subr.bf16.mxu0 0
      %1875 = vmatpush2.bf16.msra.mxu0 0
      %1876 = vmatprep.subr.bf16.mxu0 0
      %1877 = vmatpush2.bf16.msra.mxu0 0
      %1878 = vmatprep.subr.bf16.mxu0 0
      %1879 = vmatpush2.bf16.msra.mxu0 0
      %1880 = vmatprep.subr.bf16.mxu0 0
      %1881 = vmatpush2.bf16.msra.mxu0 0
      %1882 = vmatprep.mubr.bf16.mxu0 0
      %1883 = vmatmul.mubr.bf16.gmra.mxu0 %v1845
      %v1884 = vpop.f32.mrf.mxu0
      %v1885 = vadd.f32 0.0, %v1884
      %v1886 = vpop.f32.mrf.mxu0
      %v1887 = vpop.f32.mrf.mxu0
      %v1888 = vadd.f32 0.0, %v1887
      %v1889 = vpop.f32.mrf.mxu0
      %1890 = vdwg.mxu0
      %v1891 = vadd.f32 %v1617, %v1885
      %v1892 = vadd.f32 %v1618, %v1888
      %v1893 = vld [vmem:[%s659] sm:$0x1]
      %v1895 = vlaneseq
      %v1896 = vshrl.u32 %v1895, 7
      %v1897 = vsub.s32 0, %v1896
      %v1898 = vrot.slane %v1893, %v1897
      %v1900 = vadd.f32 %v1891, %v1898
      %v1901 = vadd.f32 %v1892, %v1898
      %v1902 = vunpack.c.l.bf16 %v704
      %v1903 = vunpack.c.l.bf16 %v705
      %v1904 = vadd.f32 %v1902, %v1900
      %v1905 = vadd.f32 %v1903, %v1901
      %v1906 = vld [vmem:[%s662] sm:$0x1]
      %v1907 = vld [vmem:[%s665] sm:$0x1]
      %v1908 = vsel %vm734, %v1904, 0.0
      %1909 = vadd.xlane.f32.xlu0 %v1908
      %v1910 = vpop.xlane.xlu0 %1909
      %v1911 = vsel %vm734, %v1905, 0.0
      %1912 = vadd.xlane.f32.xlu0 %v1911
      %v1913 = vpop.xlane.xlu0 %1912
      %v1914 = vrcp.pop 32.0
      %v1915 = vmul.f32 %v1910, %v1914
      %v1916 = vmul.f32 %v1913, %v1914
      %v1917 = vsub.f32 %v1904, %v1915
      %v1918 = vsub.f32 %v1905, %v1916
      %v1919 = vmul.f32 %v1917, %v1917
      %v1920 = vmul.f32 %v1918, %v1918
      %v1921 = vsel %vm734, %v1919, 0.0
      %1922 = vadd.xlane.f32.xlu0 %v1921
      %v1923 = vpop.xlane.xlu0 %1922
      %v1924 = vsel %vm734, %v1920, 0.0
      %1925 = vadd.xlane.f32.xlu0 %v1924
      %v1926 = vpop.xlane.xlu0 %1925
      %v1927 = vmul.f32 %v1923, %v1914
      %v1928 = vmul.f32 %v1926, %v1914
      %v1929 = vadd.f32 %v1927, 1e-05
      %v1930 = vadd.f32 %v1928, 1e-05
      %v1931 = vrsqrt.pop %v1929
      %v1932 = vrsqrt.pop %v1930
      %v1933 = vmul.f32 %v1917, %v1931
      %v1934 = vmul.f32 %v1918, %v1932
      %v1936 = vlaneseq
      %v1937 = vshrl.u32 %v1936, 7
      %v1938 = vsub.s32 0, %v1937
      %v1939 = vrot.slane %v1906, %v1938
      %v1941 = vmul.f32 %v1933, %v1939
      %v1942 = vmul.f32 %v1934, %v1939
      %v1944 = vlaneseq
      %v1945 = vshrl.u32 %v1944, 7
      %v1946 = vsub.s32 0, %v1945
      %v1947 = vrot.slane %v1907, %v1946
      %v1949 = vadd.f32 %v1941, %v1947
      %v1950 = vadd.f32 %v1942, %v1947
      %v1951 = vpack.c.bf16 %v1950, %v1949
      %v1952 = vld [vmem:[%s670] sm:$0xf]
      %v1953 = vld [vmem:[%s670 + $0x4] sm:$0xf]
      %v1954 = vld [vmem:[%s670 + $0x8] sm:$0xf]
      %v1955 = vld [vmem:[%s670 + $0xc] sm:$0xf]
      %v1956 = vld [vmem:[%s673] sm:$0x1]
      %v1958 = vlaneseq
      %v1959 = vshrl.u32 %v1958, 7
      %v1960 = vsub.s32 0, %v1959
      %v1961 = vrot.slane %v1956, %v1960
      %v1967 = vunpack.c.l.b16 %v1952
      %v1968 = vunpack.c.l.b16 %v1953
      %v1969 = vunpack.c.l.b16 %v1954
      %v1970 = vunpack.c.l.b16 %v1955
      %v1971 = vpack.c.b16 %v1968, %v1967
      %v1972 = vpack.c.b16 %v1970, %v1969
      %v1976 = vsel %vm734, %v1951, 0
      %1978 = vmatprep.subr.bf16.mxu0 0
      %1979 = vmatpush1.bf16.msra.mxu0 0
      %1980 = vmatprep.subr.bf16.mxu0 0
      %1981 = vmatpush1.bf16.msra.mxu0 0
      %1982 = vmatprep.subr.bf16.mxu0 0
      %1983 = vmatpush1.bf16.msra.mxu0 0
      %1984 = vmatprep.subr.bf16.mxu0 0
      %1985 = vmatpush1.bf16.msra.mxu0 0
      %1986 = vmatprep.subr.bf16.mxu0 0
      %1987 = vmatpush1.bf16.msra.mxu0 0
      %1988 = vmatprep.subr.bf16.mxu0 0
      %1989 = vmatpush1.bf16.msra.mxu0 0
      %1990 = vmatprep.subr.bf16.mxu0 0
      %1991 = vmatpush1.bf16.msra.mxu0 %v1972
      %1992 = vmatprep.subr.bf16.mxu0 0
      %1993 = vmatpush1.bf16.msra.mxu0 %v1971
      %1994 = vmatprep.subr.bf16.mxu0 0
      %1995 = vmatpush2.bf16.msra.mxu0 0
      %1996 = vmatprep.subr.bf16.mxu0 0
      %1997 = vmatpush2.bf16.msra.mxu0 0
      %1998 = vmatprep.subr.bf16.mxu0 0
      %1999 = vmatpush2.bf16.msra.mxu0 0
      %2000 = vmatprep.subr.bf16.mxu0 0
      %2001 = vmatpush2.bf16.msra.mxu0 0
      %2002 = vmatprep.subr.bf16.mxu0 0
      %2003 = vmatpush2.bf16.msra.mxu0 0
      %2004 = vmatprep.subr.bf16.mxu0 0
      %2005 = vmatpush2.bf16.msra.mxu0 0
      %2006 = vmatprep.subr.bf16.mxu0 0
      %2007 = vmatpush2.bf16.msra.mxu0 0
      %2008 = vmatprep.subr.bf16.mxu0 0
      %2009 = vmatpush2.bf16.msra.mxu0 0
      %2010 = vmatprep.mubr.bf16.mxu0 0
      %2011 = vmatmul.mubr.bf16.gmra.mxu0 %v1976
      %v2012 = vpop.f32.mrf.mxu0
      %v2013 = vadd.f32 %v1961, %v2012
      %v2014 = vpop.f32.mrf.mxu0
      %v2015 = vpop.f32.mrf.mxu0
      %v2016 = vadd.f32 %v1961, %v2015
      %v2017 = vpop.f32.mrf.mxu0
      %2018 = vdwg.mxu0
      %v2019 = vmul.f32 %v2013, %v2013
      %v2020 = vmul.f32 %v2016, %v2016
      %v2021 = vmul.f32 %v2013, %v2019
      %v2022 = vmul.f32 %v2016, %v2020
      %v2023 = vmul.f32 %v2021, 0.044715
      %v2024 = vmul.f32 %v2022, 0.044715
      %v2025 = vadd.f32 %v2013, %v2023
      %v2026 = vadd.f32 %v2016, %v2024
      %v2027 = vmul.f32 %v2025, 0.7978846
      %v2028 = vmul.f32 %v2026, 0.7978846
      %v2029 = vtanh.pop %v2027
      %v2030 = vtanh.pop %v2028
      %v2031 = vadd.f32 %v2029, 1.0
      %v2032 = vadd.f32 %v2030, 1.0
      %v2033 = vmul.f32 %v2031, 0.5
      %v2034 = vmul.f32 %v2032, 0.5
      %v2035 = vmul.f32 %v2013, %v2033
      %v2036 = vmul.f32 %v2016, %v2034
      %v2037 = vpack.c.bf16 %v2036, %v2035
      %v2038 = vld [vmem:[%s678] sm:$0xf]
      %v2039 = vld [vmem:[%s678 + $0x4] sm:$0xf]
      %v2040 = vld [vmem:[%s678 + $0x8] sm:$0xf]
      %v2041 = vld [vmem:[%s678 + $0xc] sm:$0xf]
      %v2042 = vld [vmem:[%s678 + $0x10] sm:$0xf]
      %v2043 = vld [vmem:[%s678 + $0x14] sm:$0xf]
      %v2044 = vld [vmem:[%s678 + $0x18] sm:$0xf]
      %v2045 = vld [vmem:[%s678 + $0x1c] sm:$0xf]
      %v2046 = vld [vmem:[%s678 + $0x20] sm:$0xf]
      %v2047 = vld [vmem:[%s678 + $0x24] sm:$0xf]
      %v2048 = vld [vmem:[%s678 + $0x28] sm:$0xf]
      %v2049 = vld [vmem:[%s678 + $0x2c] sm:$0xf]
      %v2050 = vld [vmem:[%s678 + $0x30] sm:$0xf]
      %v2051 = vld [vmem:[%s678 + $0x34] sm:$0xf]
      %v2052 = vld [vmem:[%s678 + $0x38] sm:$0xf]
      %v2053 = vld [vmem:[%s678 + $0x3c] sm:$0xf]
      %v2054 = vld [vmem:[%s681] sm:$0x1]
      %v2056 = vlaneseq
      %v2057 = vshrl.u32 %v2056, 7
      %v2058 = vsub.s32 0, %v2057
      %v2059 = vrot.slane %v2054, %v2058
      %v2077 = vunpack.c.l.b16 %v2038
      %v2078 = vunpack.c.l.b16 %v2039
      %v2079 = vunpack.c.l.b16 %v2040
      %v2080 = vunpack.c.l.b16 %v2041
      %v2081 = vunpack.c.l.b16 %v2042
      %v2082 = vunpack.c.l.b16 %v2043
      %v2083 = vunpack.c.l.b16 %v2044
      %v2084 = vunpack.c.l.b16 %v2045
      %v2085 = vunpack.c.l.b16 %v2046
      %v2086 = vunpack.c.l.b16 %v2047
      %v2087 = vunpack.c.l.b16 %v2048
      %v2088 = vunpack.c.l.b16 %v2049
      %v2089 = vunpack.c.l.b16 %v2050
      %v2090 = vunpack.c.l.b16 %v2051
      %v2091 = vunpack.c.l.b16 %v2052
      %v2092 = vunpack.c.l.b16 %v2053
      %v2093 = vpack.c.b16 %v2078, %v2077
      %v2094 = vpack.c.b16 %v2080, %v2079
      %v2095 = vpack.c.b16 %v2082, %v2081
      %v2096 = vpack.c.b16 %v2084, %v2083
      %v2097 = vpack.c.b16 %v2086, %v2085
      %v2098 = vpack.c.b16 %v2088, %v2087
      %v2099 = vpack.c.b16 %v2090, %v2089
      %v2100 = vpack.c.b16 %v2092, %v2091
      %2109 = vmatprep.subr.bf16.mxu0 0
      %2110 = vmatpush1.bf16.msra.mxu0 %v2100
      %2111 = vmatprep.subr.bf16.mxu0 0
      %2112 = vmatpush1.bf16.msra.mxu0 %v2099
      %2113 = vmatprep.subr.bf16.mxu0 0
      %2114 = vmatpush1.bf16.msra.mxu0 %v2098
      %2115 = vmatprep.subr.bf16.mxu0 0
      %2116 = vmatpush1.bf16.msra.mxu0 %v2097
      %2117 = vmatprep.subr.bf16.mxu0 0
      %2118 = vmatpush1.bf16.msra.mxu0 %v2096
      %2119 = vmatprep.subr.bf16.mxu0 0
      %2120 = vmatpush1.bf16.msra.mxu0 %v2095
      %2121 = vmatprep.subr.bf16.mxu0 0
      %2122 = vmatpush1.bf16.msra.mxu0 %v2094
      %2123 = vmatprep.subr.bf16.mxu0 0
      %2124 = vmatpush1.bf16.msra.mxu0 %v2093
      %2125 = vmatprep.subr.bf16.mxu0 0
      %2126 = vmatpush2.bf16.msra.mxu0 0
      %2127 = vmatprep.subr.bf16.mxu0 0
      %2128 = vmatpush2.bf16.msra.mxu0 0
      %2129 = vmatprep.subr.bf16.mxu0 0
      %2130 = vmatpush2.bf16.msra.mxu0 0
      %2131 = vmatprep.subr.bf16.mxu0 0
      %2132 = vmatpush2.bf16.msra.mxu0 0
      %2133 = vmatprep.subr.bf16.mxu0 0
      %2134 = vmatpush2.bf16.msra.mxu0 0
      %2135 = vmatprep.subr.bf16.mxu0 0
      %2136 = vmatpush2.bf16.msra.mxu0 0
      %2137 = vmatprep.subr.bf16.mxu0 0
      %2138 = vmatpush2.bf16.msra.mxu0 0
      %2139 = vmatprep.subr.bf16.mxu0 0
      %2140 = vmatpush2.bf16.msra.mxu0 0
      %2141 = vmatprep.mubr.bf16.mxu0 0
      %2142 = vmatmul.mubr.bf16.gmra.mxu0 %v2037
      %v2143 = vpop.f32.mrf.mxu0
      %v2144 = vadd.f32 %v2059, %v2143
      %v2145 = vpop.f32.mrf.mxu0
      %v2146 = vpop.f32.mrf.mxu0
      %v2147 = vadd.f32 %v2059, %v2146
      %v2148 = vpop.f32.mrf.mxu0
      %2149 = vdwg.mxu0
      %v2150 = vadd.f32 %v1949, %v2144
      %v2151 = vadd.f32 %v1950, %v2147
      %v2152 = vld [vmem:[%s684] sm:$0x1]
      %v2153 = vld [vmem:[%s687] sm:$0x1]
      %v2154 = vsel %vm734, %v2150, 0.0
      %2155 = vadd.xlane.f32.xlu0 %v2154
      %v2156 = vpop.xlane.xlu0 %2155
      %v2157 = vsel %vm734, %v2151, 0.0
      %2158 = vadd.xlane.f32.xlu0 %v2157
      %v2159 = vpop.xlane.xlu0 %2158
      %v2160 = vmul.f32 %v2156, %v1914
      %v2161 = vmul.f32 %v2159, %v1914
      %v2162 = vsub.f32 %v2150, %v2160
      %v2163 = vsub.f32 %v2151, %v2161
      %v2164 = vmul.f32 %v2162, %v2162
      %v2165 = vmul.f32 %v2163, %v2163
      %v2166 = vsel %vm734, %v2164, 0.0
      %2167 = vadd.xlane.f32.xlu0 %v2166
      %v2168 = vpop.xlane.xlu0 %2167
      %v2169 = vsel %vm734, %v2165, 0.0
      %2170 = vadd.xlane.f32.xlu0 %v2169
      %v2171 = vpop.xlane.xlu0 %2170
      %v2172 = vmul.f32 %v2168, %v1914
      %v2173 = vmul.f32 %v2171, %v1914
      %v2174 = vadd.f32 %v2172, 1e-05
      %v2175 = vadd.f32 %v2173, 1e-05
      %v2176 = vrsqrt.pop %v2174
      %v2177 = vrsqrt.pop %v2175
      %v2178 = vmul.f32 %v2162, %v2176
      %v2179 = vmul.f32 %v2163, %v2177
      %v2181 = vlaneseq
      %v2182 = vshrl.u32 %v2181, 7
      %v2183 = vsub.s32 0, %v2182
      %v2184 = vrot.slane %v2152, %v2183
      %v2186 = vmul.f32 %v2178, %v2184
      %v2187 = vmul.f32 %v2179, %v2184
      %v2189 = vlaneseq
      %v2190 = vshrl.u32 %v2189, 7
      %v2191 = vsub.s32 0, %v2190
      %v2192 = vrot.slane %v2153, %v2191
      %v2194 = vadd.f32 %v2186, %v2192
      %v2195 = vadd.f32 %v2187, %v2192
      %v2196 = vpack.c.bf16 %v2194, %v2194
      %v2197 = vpack.c.bf16 %v2195, %v2195
      %vm2198 = vcmask 257024
      %2199 = vst.msk [vmem:[%s692] sm:$0xf] %vm2198, %v2196
      %2200 = vst.msk [vmem:[%s692 + $0x4] sm:$0xf] %vm2198, %v2197
      %s2201 = smul.u32 2, %s29
      %p2202 = scmp.lt.s32.totalorder %s2201, 3
      %s2203 = scalar_select %p2202, %s2201, 3
      %s2204 = smul.addr %s2203, 4
      %s2205 = scalar_lea.vmem %s14, %s2204
      // Predicated region
      $region81: #{esim_forward.4} parent=75 // pred_check
        %p2206 = pneg %p419
      $region82: #{esim_forward.4} parent=75 // pred_check_branch
        %2208 = sbr.rel (%p2206) target = $region84
      $region83: #{esim_forward.4} parent=75 // pred_region
        %s2209 = smul.u32 2, %s29
      $region84: #{esim_forward.4} parent=75 // pred_fallthru
        _
    $region76: #{esim_forward.4} parent=5 // pred_fallthru
      _
    %p2210 = scmp.le.s32.totalorder 2, %s20
    // Predicated region
    $region85: #{esim_forward.4} parent=5 // pred_check
      %p2211 = pneg %p2210
    $region86: #{esim_forward.4} parent=5 // pred_check_branch
      %2213 = sbr.rel (%p2211) target = $region88
    $region87: #{esim_forward.4} parent=5 // pred_region
      %s2214 = ssub.s32 %s20, 2
      // Predicated region
      $region89: #{esim_forward.4} parent=87 // pred_check
        %p2215 = pneg %p425
      $region90: #{esim_forward.4} parent=87 // pred_check_branch
        %2217 = sbr.rel (%p2215) target = $region92
      $region91: #{esim_forward.4} parent=87 // pred_region
        %s2218 = smul.u32 2, %s31
        %p2219 = scmp.lt.s32.totalorder %s2218, 3
        %s2220 = scalar_select %p2219, %s2218, 3
        %s2221 = smul.addr %s2220, 4
        %s2222 = scalar_lea.vmem %s14, %s2221
      $region92: #{esim_forward.4} parent=87 // pred_fallthru
        _
    $region88: #{esim_forward.4} parent=5 // pred_fallthru
      _
  $region6: #{esim_forward.4} parent=0 // loop_footer
    %s24 = sadd.s32 1, %s20
  $region7: #{esim_forward.4} parent=0 // loop_footer_branch
    %19 = sbr.rel target = $region3
  $region8: #{esim_forward.4} parent=0 // loop_exit
    _

</llo_original>
